<compile_context>
chip_gen: v6e
topology: v6e:2x2x1
jax: 0.10.0
libtpu: 0.0.40
codegen_flags: <defaults>
</compile_context>

<pallas_src>
from functools import partial

import jax
import jax.numpy as jnp
from jax.experimental import pallas as pl
from jax.experimental.pallas import tpu as pltpu

LAYER_DIMS = [403, 300, 200, 100, 50, 25, 12, 1]
N_LAYERS = len(LAYER_DIMS) - 1   # 7 Linear layers
N_BN = 6                         # BatchNorm1d(1) after the first 6 Linears
BN_EPS = 1e-5


def _round_up(n: int, m: int) -> int:
    return ((n + m - 1) // m) * m


# Every layer width padded to a multiple of 128 lanes (zeros are exact no-ops
# through Linear/ReLU/ReLU6 because the matching weight rows/cols are zero).
PADDED_DIMS = [_round_up(d, 128) for d in LAYER_DIMS]   # [512,384,256,128,128,128,128,128]


def _max_tile_m() -> int:
    """2048 rows on v5e/v6e (128 MiB VMEM), 1024 on v7x (64 MiB) / unknown."""
    try:
        vmem_bytes = pltpu.get_tpu_info().vmem_capacity_bytes
        return 2048 if vmem_bytes >= (100 << 20) else 1024
    except Exception:
        return 1024


def _select_tile_m(n: int, max_tile: int) -> int:
    tile = min(max_tile, _round_up(max(n, 1), 16))
    if n > 256:
        # Keep >= 2 grid steps so ("parallel",) shards across v7x's two TCs
        # (neutral on single-TC v5e/v6e).
        tile = min(tile, _round_up(pl.cdiv(n, 2), 16))
    if tile >= 128:
        tile = _round_up(tile, 128)        # lane-dense output rows
    return max(tile, 16)


def _make_kernel(tile_m: int):
    # Two independent half-tiles -> two dependency chains interleaved per layer.
    if tile_m >= 32:
        halves = ((0, tile_m // 2), (tile_m // 2, tile_m // 2))
    else:
        halves = ((0, tile_m),)

    def kernel(x_ref, *refs):
        w_refs = refs[:N_LAYERS]                       # bf16 (pdin, pdout), VMEM-resident
        b_refs = refs[N_LAYERS:2 * N_LAYERS]           # f32  (1, pdout)
        out_ref = refs[2 * N_LAYERS]                   # f32  (1, tile_m)  lane-dense

        hs = [x_ref[off:off + sz, :] for off, sz in halves]   # bf16 (sz, 512)
        acts = hs
        for i in range(N_LAYERS):
            w = w_refs[i][...]
            b = b_refs[i][...]
            # MXU matmul with f32 accumulation; eval-mode BN pre-folded on host.
            zs = [jnp.dot(h, w, preferred_element_type=jnp.float32) + b for h in hs]
            if i < 3:
                # ReLU.  TODO(synk): Dropout(0.5/0.1) is identity in eval mode;
                # training-mode stochastic dropout / BN batch-stats not implemented.
                acts = [jnp.maximum(z, 0.0) for z in zs]
            elif i < 6:
                acts = [jnp.clip(z, 0.0, 6.0) for z in zs]     # ReLU6
            else:
                acts = zs                                      # sigmoid applied below
            if i + 1 < N_LAYERS:
                hs = [a.astype(jnp.bfloat16) for a in acts]

        # Final layer output is (sz, 128) f32 with the real logit in column 0.
        # Sublane->lane move on the (otherwise idle) XLU, then sigmoid on the
        # single lane-dense row only.
        for (off, sz), a in zip(halves, acts):
            out_ref[:, off:off + sz] = jax.nn.sigmoid(jnp.transpose(a)[0:1, :])

    return kernel


def prepare_kernel_params(weights, biases, bn_scale, bn_shift):
    """One-time prep (hoisted out of forward): fold BN, pad to 128 lanes, cast bf16."""
    w_k, b_k = [], []
    for i in range(N_LAYERS):
        din, dout = LAYER_DIMS[i], LAYER_DIMS[i + 1]
        pdin, pdout = PADDED_DIMS[i], PADDED_DIMS[i + 1]
        w = weights[i]
        b = biases[i]
        if i < N_BN:
            s = bn_scale[i]
            t = bn_shift[i]
            w = w * s
            b = b * s + t
        w_pad = jnp.zeros((pdin, pdout), jnp.float32).at[:din, :dout].set(w)
        b_pad = jnp.zeros((1, pdout), jnp.float32).at[0, :dout].set(b)
        w_k.append(w_pad.astype(jnp.bfloat16))
        b_k.append(b_pad)
    return w_k, b_k


@partial(jax.jit, static_argnames=("single_buffer_params",))
def pd_forward(x, w_k, b_k, *, single_buffer_params=True):
    """x: (N, 1, 403) f32 -> (N, 1, 1) f32, using prepared (folded, padded, bf16) params."""
    N = x.shape[0]
    F0, PF0 = LAYER_DIMS[0], PADDED_DIMS[0]

    max_tile = _max_tile_m()
    tile_m = _select_tile_m(N, max_tile)
    num_tiles = pl.cdiv(N, tile_m)
    m_pad = num_tiles * tile_m

    # Fuse feature pad (403->512) and batch pad into the bf16-cast materialization.
    x2 = x.reshape(N, F0).astype(jnp.bfloat16)
    x2 = jnp.pad(x2, ((0, m_pad - N), (0, PF0 - F0)))

    if single_buffer_params:
        def param_spec(shape):
            return pl.BlockSpec(shape, lambda i: (0, 0), pipeline_mode=pl.Buffered(1))
    else:
        def param_spec(shape):
            return pl.BlockSpec(shape, lambda i: (0, 0))

    in_specs = [pl.BlockSpec((tile_m, PF0), lambda i: (i, 0))]          # x stream
    in_specs += [param_spec(w.shape) for w in w_k]                      # VMEM-resident
    in_specs += [param_spec(b.shape) for b in b_k]

    vmem_limit = (64 if max_tile >= 2048 else 32) * 1024 * 1024

    out = pl.pallas_call(
        _make_kernel(tile_m),
        out_shape=jax.ShapeDtypeStruct((num_tiles, 1, tile_m), jnp.float32),
        grid=(num_tiles,),
        in_specs=in_specs,
        out_specs=pl.BlockSpec((None, 1, tile_m), lambda i: (i, 0, 0)),  # lane-dense
        compiler_params=pltpu.CompilerParams(
            dimension_semantics=("parallel",),
            vmem_limit_bytes=vmem_limit),
    )(x2, *w_k, *b_k)

    return out.reshape(-1)[:N].reshape(N, 1, 1)


def make_params(key):
    """Deterministic synthetic parameters (PyTorch-style uniform init), f32."""
    weights, biases = [], []
    gammas, betas, rmeans, rvars = [], [], [], []
    for i in range(N_LAYERS):
        din, dout = LAYER_DIMS[i], LAYER_DIMS[i + 1]
        key, kw, kb = jax.random.split(key, 3)
        bound = 1.0 / (din ** 0.5)
        # Stored as (in, out) == PyTorch weight.T
        weights.append(jax.random.uniform(kw, (din, dout), jnp.float32, -bound, bound))
        biases.append(jax.random.uniform(kb, (dout,), jnp.float32, -bound, bound))
    for _ in range(N_BN):
        key, k1, k2, k3, k4 = jax.random.split(key, 5)
        gammas.append(1.0 + 0.1 * jax.random.normal(k1, (), jnp.float32))
        betas.append(0.1 * jax.random.normal(k2, (), jnp.float32))
        rmeans.append(0.1 * jax.random.normal(k3, (), jnp.float32))
        rvars.append(1.0 + 0.1 * jax.random.uniform(k4, (), jnp.float32))
    gammas = jnp.stack(gammas)
    betas = jnp.stack(betas)
    rmeans = jnp.stack(rmeans)
    rvars = jnp.stack(rvars)
    bn_scale = gammas / jnp.sqrt(rvars + BN_EPS)
    bn_shift = betas - rmeans * bn_scale
    return weights, biases, bn_scale, bn_shift


def reference_forward(x, weights, biases, bn_scale, bn_shift):
    """Pure-JAX f32 reference matching the PyTorch eval-mode forward."""
    h = x.reshape(x.shape[0], -1).astype(jnp.float32)
    for i in range(N_LAYERS):
        z = h @ weights[i] + biases[i]
        if i < N_BN:
            z = z * bn_scale[i] + bn_shift[i]
        if i < 3:
            h = jnp.maximum(z, 0.0)
        elif i < 6:
            h = jnp.clip(z, 0.0, 6.0)
        else:
            h = jax.nn.sigmoid(z)
    return h.reshape(-1, 1, 1)


if __name__ == "__main__":
    key = jax.random.PRNGKey(0)
    key, kx, kp = jax.random.split(key, 3)

    N = 2
    x = jax.random.normal(kx, (N, 1, 403), jnp.float32)  # PyTorch NCL input

    weights, biases, bn_scale, bn_shift = make_params(kp)
    # Param prep (BN folding + 128-lane padding + bf16 cast) done once, outside forward.
    w_k, b_k = prepare_kernel_params(weights, biases, bn_scale, bn_shift)

    try:
        out = jax.block_until_ready(pd_forward(x, w_k, b_k, single_buffer_params=True))
    except Exception:
        # Fallback if single-buffered (pl.Buffered(1)) param specs are unsupported.
        out = jax.block_until_ready(pd_forward(x, w_k, b_k, single_buffer_params=False))

    ref = reference_forward(x, weights, biases, bn_scale, bn_shift)
    assert out.shape == (N, 1, 1), out.shape
    # bf16 weights/activations with f32 accumulation -> loosened tolerance.
    assert jnp.allclose(out, ref, atol=5e-2, rtol=5e-2), (out, ref)

    print("KERNEL_OK")
</pallas_src>

<mosaic_0001>
module attributes {stable_mosaic.version = 11 : i64} {
  func.func @kernel(%arg0: i32, %arg1: memref<16x512xbf16, #tpu.memory_space<vmem>>, %arg2: memref<512x384xbf16, #tpu.memory_space<vmem>>, %arg3: memref<384x256xbf16, #tpu.memory_space<vmem>>, %arg4: memref<256x128xbf16, #tpu.memory_space<vmem>>, %arg5: memref<128x128xbf16, #tpu.memory_space<vmem>>, %arg6: memref<128x128xbf16, #tpu.memory_space<vmem>>, %arg7: memref<128x128xbf16, #tpu.memory_space<vmem>>, %arg8: memref<128x128xbf16, #tpu.memory_space<vmem>>, %arg9: memref<1x384xf32, #tpu.memory_space<vmem>>, %arg10: memref<1x256xf32, #tpu.memory_space<vmem>>, %arg11: memref<1x128xf32, #tpu.memory_space<vmem>>, %arg12: memref<1x128xf32, #tpu.memory_space<vmem>>, %arg13: memref<1x128xf32, #tpu.memory_space<vmem>>, %arg14: memref<1x128xf32, #tpu.memory_space<vmem>>, %arg15: memref<1x128xf32, #tpu.memory_space<vmem>>, %arg16: memref<1x1x16xf32, #tpu.memory_space<vmem>>) attributes {dimension_semantics = [#tpu.dimension_semantics<parallel>], iteration_bounds = array<i64: 1>, scalar_prefetch = 0 : i64, scratch_operands = 0 : i64, tpu.core_type = #tpu.core_type<tc>, window_params = [{transform_indices = @transform_0, window_bounds = array<i64: 16, 512>}, {pipeline_mode = #tpu.pipeline_mode<synchronous>, transform_indices = @transform_1, window_bounds = array<i64: 512, 384>}, {pipeline_mode = #tpu.pipeline_mode<synchronous>, transform_indices = @transform_2, window_bounds = array<i64: 384, 256>}, {pipeline_mode = #tpu.pipeline_mode<synchronous>, transform_indices = @transform_3, window_bounds = array<i64: 256, 128>}, {pipeline_mode = #tpu.pipeline_mode<synchronous>, transform_indices = @transform_4, window_bounds = array<i64: 128, 128>}, {pipeline_mode = #tpu.pipeline_mode<synchronous>, transform_indices = @transform_5, window_bounds = array<i64: 128, 128>}, {pipeline_mode = #tpu.pipeline_mode<synchronous>, transform_indices = @transform_6, window_bounds = array<i64: 128, 128>}, {pipeline_mode = #tpu.pipeline_mode<synchronous>, transform_indices = @transform_7, window_bounds = array<i64: 128, 128>}, {pipeline_mode = #tpu.pipeline_mode<synchronous>, transform_indices = @transform_8, window_bounds = array<i64: 1, 384>}, {pipeline_mode = #tpu.pipeline_mode<synchronous>, transform_indices = @transform_9, window_bounds = array<i64: 1, 256>}, {pipeline_mode = #tpu.pipeline_mode<synchronous>, transform_indices = @transform_10, window_bounds = array<i64: 1, 128>}, {pipeline_mode = #tpu.pipeline_mode<synchronous>, transform_indices = @transform_11, window_bounds = array<i64: 1, 128>}, {pipeline_mode = #tpu.pipeline_mode<synchronous>, transform_indices = @transform_12, window_bounds = array<i64: 1, 128>}, {pipeline_mode = #tpu.pipeline_mode<synchronous>, transform_indices = @transform_13, window_bounds = array<i64: 1, 128>}, {pipeline_mode = #tpu.pipeline_mode<synchronous>, transform_indices = @transform_14, window_bounds = array<i64: 1, 128>}, {transform_indices = @transform_15, window_bounds = array<i64: 1, 1, 16>}]} {
    %c0 = arith.constant 0 : index
    %c0_0 = arith.constant 0 : index
    %0 = vector.load %arg1[%c0, %c0_0] : memref<16x512xbf16, #tpu.memory_space<vmem>>, vector<16x512xbf16>
    %c0_1 = arith.constant 0 : index
    %c0_2 = arith.constant 0 : index
    %1 = vector.load %arg2[%c0_1, %c0_2] : memref<512x384xbf16, #tpu.memory_space<vmem>>, vector<512x384xbf16>
    %c0_3 = arith.constant 0 : index
    %c0_4 = arith.constant 0 : index
    %2 = vector.load %arg9[%c0_3, %c0_4] : memref<1x384xf32, #tpu.memory_space<vmem>>, vector<1x384xf32>
    %cst = arith.constant dense<0.000000e+00> : vector<16x384xf32>
    %3 = tpu.matmul %0, %1, %cst {dimension_numbers = #tpu.dot_dimension_numbers<[1], [0], [0], [1], [0, 0, 1, 1], [], []>} : vector<16x512xbf16>, vector<512x384xbf16>, vector<16x384xf32> -> vector<16x384xf32>
    %4 = vector.broadcast %2 : vector<1x384xf32> to vector<16x384xf32>
    %5 = arith.addf %3, %4 : vector<16x384xf32>
    %cst_5 = arith.constant 0.000000e+00 : f32
    %6 = vector.broadcast %cst_5 : f32 to vector<16x384xf32>
    %7 = arith.maximumf %5, %6 : vector<16x384xf32>
    %8 = arith.truncf %7 : vector<16x384xf32> to vector<16x384xbf16>
    %c0_6 = arith.constant 0 : index
    %c0_7 = arith.constant 0 : index
    %9 = vector.load %arg3[%c0_6, %c0_7] : memref<384x256xbf16, #tpu.memory_space<vmem>>, vector<384x256xbf16>
    %c0_8 = arith.constant 0 : index
    %c0_9 = arith.constant 0 : index
    %10 = vector.load %arg10[%c0_8, %c0_9] : memref<1x256xf32, #tpu.memory_space<vmem>>, vector<1x256xf32>
    %cst_10 = arith.constant dense<0.000000e+00> : vector<16x256xf32>
    %11 = tpu.matmul %8, %9, %cst_10 {dimension_numbers = #tpu.dot_dimension_numbers<[1], [0], [0], [1], [0, 0, 1, 1], [], []>} : vector<16x384xbf16>, vector<384x256xbf16>, vector<16x256xf32> -> vector<16x256xf32>
    %12 = vector.broadcast %10 : vector<1x256xf32> to vector<16x256xf32>
    %13 = arith.addf %11, %12 : vector<16x256xf32>
    %cst_11 = arith.constant 0.000000e+00 : f32
    %14 = vector.broadcast %cst_11 : f32 to vector<16x256xf32>
    %15 = arith.maximumf %13, %14 : vector<16x256xf32>
    %16 = arith.truncf %15 : vector<16x256xf32> to vector<16x256xbf16>
    %c0_12 = arith.constant 0 : index
    %c0_13 = arith.constant 0 : index
    %17 = vector.load %arg4[%c0_12, %c0_13] : memref<256x128xbf16, #tpu.memory_space<vmem>>, vector<256x128xbf16>
    %c0_14 = arith.constant 0 : index
    %c0_15 = arith.constant 0 : index
    %18 = vector.load %arg11[%c0_14, %c0_15] : memref<1x128xf32, #tpu.memory_space<vmem>>, vector<1x128xf32>
    %cst_16 = arith.constant dense<0.000000e+00> : vector<16x128xf32>
    %19 = tpu.matmul %16, %17, %cst_16 {dimension_numbers = #tpu.dot_dimension_numbers<[1], [0], [0], [1], [0, 0, 1, 1], [], []>} : vector<16x256xbf16>, vector<256x128xbf16>, vector<16x128xf32> -> vector<16x128xf32>
    %20 = vector.broadcast %18 : vector<1x128xf32> to vector<16x128xf32>
    %21 = arith.addf %19, %20 : vector<16x128xf32>
    %cst_17 = arith.constant 0.000000e+00 : f32
    %22 = vector.broadcast %cst_17 : f32 to vector<16x128xf32>
    %23 = arith.maximumf %21, %22 : vector<16x128xf32>
    %24 = arith.truncf %23 : vector<16x128xf32> to vector<16x128xbf16>
    %c0_18 = arith.constant 0 : index
    %c0_19 = arith.constant 0 : index
    %25 = vector.load %arg5[%c0_18, %c0_19] : memref<128x128xbf16, #tpu.memory_space<vmem>>, vector<128x128xbf16>
    %c0_20 = arith.constant 0 : index
    %c0_21 = arith.constant 0 : index
    %26 = vector.load %arg12[%c0_20, %c0_21] : memref<1x128xf32, #tpu.memory_space<vmem>>, vector<1x128xf32>
    %cst_22 = arith.constant dense<0.000000e+00> : vector<16x128xf32>
    %27 = tpu.matmul %24, %25, %cst_22 {dimension_numbers = #tpu.dot_dimension_numbers<[1], [0], [0], [1], [0, 0, 1, 1], [], []>} : vector<16x128xbf16>, vector<128x128xbf16>, vector<16x128xf32> -> vector<16x128xf32>
    %28 = vector.broadcast %26 : vector<1x128xf32> to vector<16x128xf32>
    %29 = arith.addf %27, %28 : vector<16x128xf32>
    %cst_23 = arith.constant 0.000000e+00 : f32
    %cst_24 = arith.constant 6.000000e+00 : f32
    %30 = vector.broadcast %cst_23 : f32 to vector<16x128xf32>
    %31 = arith.maximumf %30, %29 : vector<16x128xf32>
    %32 = vector.broadcast %cst_24 : f32 to vector<16x128xf32>
    %33 = arith.minimumf %32, %31 : vector<16x128xf32>
    %34 = arith.truncf %33 : vector<16x128xf32> to vector<16x128xbf16>
    %c0_25 = arith.constant 0 : index
    %c0_26 = arith.constant 0 : index
    %35 = vector.load %arg6[%c0_25, %c0_26] : memref<128x128xbf16, #tpu.memory_space<vmem>>, vector<128x128xbf16>
    %c0_27 = arith.constant 0 : index
    %c0_28 = arith.constant 0 : index
    %36 = vector.load %arg13[%c0_27, %c0_28] : memref<1x128xf32, #tpu.memory_space<vmem>>, vector<1x128xf32>
    %cst_29 = arith.constant dense<0.000000e+00> : vector<16x128xf32>
    %37 = tpu.matmul %34, %35, %cst_29 {dimension_numbers = #tpu.dot_dimension_numbers<[1], [0], [0], [1], [0, 0, 1, 1], [], []>} : vector<16x128xbf16>, vector<128x128xbf16>, vector<16x128xf32> -> vector<16x128xf32>
    %38 = vector.broadcast %36 : vector<1x128xf32> to vector<16x128xf32>
    %39 = arith.addf %37, %38 : vector<16x128xf32>
    %cst_30 = arith.constant 0.000000e+00 : f32
    %cst_31 = arith.constant 6.000000e+00 : f32
    %40 = vector.broadcast %cst_30 : f32 to vector<16x128xf32>
    %41 = arith.maximumf %40, %39 : vector<16x128xf32>
    %42 = vector.broadcast %cst_31 : f32 to vector<16x128xf32>
    %43 = arith.minimumf %42, %41 : vector<16x128xf32>
    %44 = arith.truncf %43 : vector<16x128xf32> to vector<16x128xbf16>
    %c0_32 = arith.constant 0 : index
    %c0_33 = arith.constant 0 : index
    %45 = vector.load %arg7[%c0_32, %c0_33] : memref<128x128xbf16, #tpu.memory_space<vmem>>, vector<128x128xbf16>
    %c0_34 = arith.constant 0 : index
    %c0_35 = arith.constant 0 : index
    %46 = vector.load %arg14[%c0_34, %c0_35] : memref<1x128xf32, #tpu.memory_space<vmem>>, vector<1x128xf32>
    %cst_36 = arith.constant dense<0.000000e+00> : vector<16x128xf32>
    %47 = tpu.matmul %44, %45, %cst_36 {dimension_numbers = #tpu.dot_dimension_numbers<[1], [0], [0], [1], [0, 0, 1, 1], [], []>} : vector<16x128xbf16>, vector<128x128xbf16>, vector<16x128xf32> -> vector<16x128xf32>
    %48 = vector.broadcast %46 : vector<1x128xf32> to vector<16x128xf32>
    %49 = arith.addf %47, %48 : vector<16x128xf32>
    %cst_37 = arith.constant 0.000000e+00 : f32
    %cst_38 = arith.constant 6.000000e+00 : f32
    %50 = vector.broadcast %cst_37 : f32 to vector<16x128xf32>
    %51 = arith.maximumf %50, %49 : vector<16x128xf32>
    %52 = vector.broadcast %cst_38 : f32 to vector<16x128xf32>
    %53 = arith.minimumf %52, %51 : vector<16x128xf32>
    %54 = arith.truncf %53 : vector<16x128xf32> to vector<16x128xbf16>
    %c0_39 = arith.constant 0 : index
    %c0_40 = arith.constant 0 : index
    %55 = vector.load %arg8[%c0_39, %c0_40] : memref<128x128xbf16, #tpu.memory_space<vmem>>, vector<128x128xbf16>
    %c0_41 = arith.constant 0 : index
    %c0_42 = arith.constant 0 : index
    %56 = vector.load %arg15[%c0_41, %c0_42] : memref<1x128xf32, #tpu.memory_space<vmem>>, vector<1x128xf32>
    %cst_43 = arith.constant dense<0.000000e+00> : vector<16x128xf32>
    %57 = tpu.matmul %54, %55, %cst_43 {dimension_numbers = #tpu.dot_dimension_numbers<[1], [0], [0], [1], [0, 0, 1, 1], [], []>} : vector<16x128xbf16>, vector<128x128xbf16>, vector<16x128xf32> -> vector<16x128xf32>
    %58 = vector.broadcast %56 : vector<1x128xf32> to vector<16x128xf32>
    %59 = arith.addf %57, %58 : vector<16x128xf32>
    %60 = tpu.transpose %59, [1, 0] : vector<16x128xf32> -> vector<128x16xf32>
    %61 = vector.extract_strided_slice %60 {offsets = [0, 0], sizes = [1, 16], strides = [1, 1]} : vector<128x16xf32> to vector<1x16xf32>
    %62 = arith.negf %61 : vector<1x16xf32>
    %63 = math.exp %62 : vector<1x16xf32>
    %cst_44 = arith.constant 1.000000e+00 : f32
    %64 = vector.broadcast %cst_44 : f32 to vector<1x16xf32>
    %65 = arith.addf %64, %63 : vector<1x16xf32>
    %66 = arith.divf %64, %65 : vector<1x16xf32>
    %c0_45 = arith.constant 0 : index
    %c0_46 = arith.constant 0 : index
    %c0_47 = arith.constant 0 : index
    %67 = vector.load %arg16[%c0_45, %c0_46, %c0_47] : memref<1x1x16xf32, #tpu.memory_space<vmem>>, vector<1x1x16xf32>
    %68 = vector.shape_cast %67 : vector<1x1x16xf32> to vector<1x16xf32>
    %69 = vector.shape_cast %66 : vector<1x16xf32> to vector<1x1x16xf32>
    tpu.vector_store %arg16[%c0_45, %c0_46, %c0_47], %69 {strides = array<i32>} : memref<1x1x16xf32, #tpu.memory_space<vmem>>, vector<1x1x16xf32>,
    return
  }
  func.func @transform_0(%arg0: i32) -> (i32, i32) {
    %c0_i32 = arith.constant 0 : i32
    %c0_i32_0 = arith.constant 0 : i32
    return %arg0, %c0_i32 : i32, i32
  }
  func.func @transform_1(%arg0: i32) -> (i32, i32) {
    %c0_i32 = arith.constant 0 : i32
    %c0_i32_0 = arith.constant 0 : i32
    %c0_i32_1 = arith.constant 0 : i32
    return %c0_i32, %c0_i32_0 : i32, i32
  }
  func.func @transform_2(%arg0: i32) -> (i32, i32) {
    %c0_i32 = arith.constant 0 : i32
    %c0_i32_0 = arith.constant 0 : i32
    %c0_i32_1 = arith.constant 0 : i32
    return %c0_i32, %c0_i32_0 : i32, i32
  }
  func.func @transform_3(%arg0: i32) -> (i32, i32) {
    %c0_i32 = arith.constant 0 : i32
    %c0_i32_0 = arith.constant 0 : i32
    %c0_i32_1 = arith.constant 0 : i32
    return %c0_i32, %c0_i32_0 : i32, i32
  }
  func.func @transform_4(%arg0: i32) -> (i32, i32) {
    %c0_i32 = arith.constant 0 : i32
    %c0_i32_0 = arith.constant 0 : i32
    %c0_i32_1 = arith.constant 0 : i32
    return %c0_i32, %c0_i32_0 : i32, i32
  }
  func.func @transform_5(%arg0: i32) -> (i32, i32) {
    %c0_i32 = arith.constant 0 : i32
    %c0_i32_0 = arith.constant 0 : i32
    %c0_i32_1 = arith.constant 0 : i32
    return %c0_i32, %c0_i32_0 : i32, i32
  }
  func.func @transform_6(%arg0: i32) -> (i32, i32) {
    %c0_i32 = arith.constant 0 : i32
    %c0_i32_0 = arith.constant 0 : i32
    %c0_i32_1 = arith.constant 0 : i32
    return %c0_i32, %c0_i32_0 : i32, i32
  }
  func.func @transform_7(%arg0: i32) -> (i32, i32) {
    %c0_i32 = arith.constant 0 : i32
    %c0_i32_0 = arith.constant 0 : i32
    %c0_i32_1 = arith.constant 0 : i32
    return %c0_i32, %c0_i32_0 : i32, i32
  }
  func.func @transform_8(%arg0: i32) -> (i32, i32) {
    %c0_i32 = arith.constant 0 : i32
    %c0_i32_0 = arith.constant 0 : i32
    %c0_i32_1 = arith.constant 0 : i32
    return %c0_i32, %c0_i32_0 : i32, i32
  }
  func.func @transform_9(%arg0: i32) -> (i32, i32) {
    %c0_i32 = arith.constant 0 : i32
    %c0_i32_0 = arith.constant 0 : i32
    %c0_i32_1 = arith.constant 0 : i32
    return %c0_i32, %c0_i32_0 : i32, i32
  }
  func.func @transform_10(%arg0: i32) -> (i32, i32) {
    %c0_i32 = arith.constant 0 : i32
    %c0_i32_0 = arith.constant 0 : i32
    %c0_i32_1 = arith.constant 0 : i32
    return %c0_i32, %c0_i32_0 : i32, i32
  }
  func.func @transform_11(%arg0: i32) -> (i32, i32) {
    %c0_i32 = arith.constant 0 : i32
    %c0_i32_0 = arith.constant 0 : i32
    %c0_i32_1 = arith.constant 0 : i32
    return %c0_i32, %c0_i32_0 : i32, i32
  }
  func.func @transform_12(%arg0: i32) -> (i32, i32) {
    %c0_i32 = arith.constant 0 : i32
    %c0_i32_0 = arith.constant 0 : i32
    %c0_i32_1 = arith.constant 0 : i32
    return %c0_i32, %c0_i32_0 : i32, i32
  }
  func.func @transform_13(%arg0: i32) -> (i32, i32) {
    %c0_i32 = arith.constant 0 : i32
    %c0_i32_0 = arith.constant 0 : i32
    %c0_i32_1 = arith.constant 0 : i32
    return %c0_i32, %c0_i32_0 : i32, i32
  }
  func.func @transform_14(%arg0: i32) -> (i32, i32) {
    %c0_i32 = arith.constant 0 : i32
    %c0_i32_0 = arith.constant 0 : i32
    %c0_i32_1 = arith.constant 0 : i32
    return %c0_i32, %c0_i32_0 : i32, i32
  }
  func.func @transform_15(%arg0: i32) -> (i32, i32, i32) {
    %c0_i32 = arith.constant 0 : i32
    %c0_i32_0 = arith.constant 0 : i32
    %c0_i32_1 = arith.constant 0 : i32
    return %arg0, %c0_i32, %c0_i32_0 : i32, i32, i32
  }
}

module attributes {stable_mosaic.version = 11 : i64} {
  func.func @kernel(%arg0: i32, %arg1: memref<16x512xbf16, #tpu.memory_space<vmem>>, %arg2: memref<512x384xbf16, #tpu.memory_space<vmem>>, %arg3: memref<384x256xbf16, #tpu.memory_space<vmem>>, %arg4: memref<256x128xbf16, #tpu.memory_space<vmem>>, %arg5: memref<128x128xbf16, #tpu.memory_space<vmem>>, %arg6: memref<128x128xbf16, #tpu.memory_space<vmem>>, %arg7: memref<128x128xbf16, #tpu.memory_space<vmem>>, %arg8: memref<128x128xbf16, #tpu.memory_space<vmem>>, %arg9: memref<1x384xf32, #tpu.memory_space<vmem>>, %arg10: memref<1x256xf32, #tpu.memory_space<vmem>>, %arg11: memref<1x128xf32, #tpu.memory_space<vmem>>, %arg12: memref<1x128xf32, #tpu.memory_space<vmem>>, %arg13: memref<1x128xf32, #tpu.memory_space<vmem>>, %arg14: memref<1x128xf32, #tpu.memory_space<vmem>>, %arg15: memref<1x128xf32, #tpu.memory_space<vmem>>, %arg16: memref<1x1x16xf32, #tpu.memory_space<vmem>>) attributes {dimension_semantics = [#tpu.dimension_semantics<parallel>], iteration_bounds = array<i64: 1>, scalar_prefetch = 0 : i64, scratch_operands = 0 : i64, tpu.core_type = #tpu.core_type<tc>, window_params = [{transform_indices = @transform_0, window_bounds = array<i64: 16, 512>}, {pipeline_mode = #tpu.pipeline_mode<synchronous>, transform_indices = @transform_1, window_bounds = array<i64: 512, 384>}, {pipeline_mode = #tpu.pipeline_mode<synchronous>, transform_indices = @transform_2, window_bounds = array<i64: 384, 256>}, {pipeline_mode = #tpu.pipeline_mode<synchronous>, transform_indices = @transform_3, window_bounds = array<i64: 256, 128>}, {pipeline_mode = #tpu.pipeline_mode<synchronous>, transform_indices = @transform_4, window_bounds = array<i64: 128, 128>}, {pipeline_mode = #tpu.pipeline_mode<synchronous>, transform_indices = @transform_5, window_bounds = array<i64: 128, 128>}, {pipeline_mode = #tpu.pipeline_mode<synchronous>, transform_indices = @transform_6, window_bounds = array<i64: 128, 128>}, {pipeline_mode = #tpu.pipeline_mode<synchronous>, transform_indices = @transform_7, window_bounds = array<i64: 128, 128>}, {pipeline_mode = #tpu.pipeline_mode<synchronous>, transform_indices = @transform_8, window_bounds = array<i64: 1, 384>}, {pipeline_mode = #tpu.pipeline_mode<synchronous>, transform_indices = @transform_9, window_bounds = array<i64: 1, 256>}, {pipeline_mode = #tpu.pipeline_mode<synchronous>, transform_indices = @transform_10, window_bounds = array<i64: 1, 128>}, {pipeline_mode = #tpu.pipeline_mode<synchronous>, transform_indices = @transform_11, window_bounds = array<i64: 1, 128>}, {pipeline_mode = #tpu.pipeline_mode<synchronous>, transform_indices = @transform_12, window_bounds = array<i64: 1, 128>}, {pipeline_mode = #tpu.pipeline_mode<synchronous>, transform_indices = @transform_13, window_bounds = array<i64: 1, 128>}, {pipeline_mode = #tpu.pipeline_mode<synchronous>, transform_indices = @transform_14, window_bounds = array<i64: 1, 128>}, {transform_indices = @transform_15, window_bounds = array<i64: 1, 1, 16>}]} {
    %c0 = arith.constant 0 : index
    %c0_0 = arith.constant 0 : index
    %0 = vector.load %arg1[%c0, %c0_0] : memref<16x512xbf16, #tpu.memory_space<vmem>>, vector<16x512xbf16>
    %c0_1 = arith.constant 0 : index
    %c0_2 = arith.constant 0 : index
    %1 = vector.load %arg2[%c0_1, %c0_2] : memref<512x384xbf16, #tpu.memory_space<vmem>>, vector<512x384xbf16>
    %c0_3 = arith.constant 0 : index
    %c0_4 = arith.constant 0 : index
    %2 = vector.load %arg9[%c0_3, %c0_4] : memref<1x384xf32, #tpu.memory_space<vmem>>, vector<1x384xf32>
    %cst = arith.constant dense<0.000000e+00> : vector<16x384xf32>
    %3 = tpu.matmul %0, %1, %cst {dimension_numbers = #tpu.dot_dimension_numbers<[1], [0], [0], [1], [0, 0, 1, 1], [], []>} : vector<16x512xbf16>, vector<512x384xbf16>, vector<16x384xf32> -> vector<16x384xf32>
    %4 = vector.broadcast %2 : vector<1x384xf32> to vector<16x384xf32>
    %5 = arith.addf %3, %4 : vector<16x384xf32>
    %cst_5 = arith.constant 0.000000e+00 : f32
    %6 = vector.broadcast %cst_5 : f32 to vector<16x384xf32>
    %7 = arith.maximumf %5, %6 : vector<16x384xf32>
    %8 = arith.truncf %7 : vector<16x384xf32> to vector<16x384xbf16>
    %c0_6 = arith.constant 0 : index
    %c0_7 = arith.constant 0 : index
    %9 = vector.load %arg3[%c0_6, %c0_7] : memref<384x256xbf16, #tpu.memory_space<vmem>>, vector<384x256xbf16>
    %c0_8 = arith.constant 0 : index
    %c0_9 = arith.constant 0 : index
    %10 = vector.load %arg10[%c0_8, %c0_9] : memref<1x256xf32, #tpu.memory_space<vmem>>, vector<1x256xf32>
    %cst_10 = arith.constant dense<0.000000e+00> : vector<16x256xf32>
    %11 = tpu.matmul %8, %9, %cst_10 {dimension_numbers = #tpu.dot_dimension_numbers<[1], [0], [0], [1], [0, 0, 1, 1], [], []>} : vector<16x384xbf16>, vector<384x256xbf16>, vector<16x256xf32> -> vector<16x256xf32>
    %12 = vector.broadcast %10 : vector<1x256xf32> to vector<16x256xf32>
    %13 = arith.addf %11, %12 : vector<16x256xf32>
    %cst_11 = arith.constant 0.000000e+00 : f32
    %14 = vector.broadcast %cst_11 : f32 to vector<16x256xf32>
    %15 = arith.maximumf %13, %14 : vector<16x256xf32>
    %16 = arith.truncf %15 : vector<16x256xf32> to vector<16x256xbf16>
    %c0_12 = arith.constant 0 : index
    %c0_13 = arith.constant 0 : index
    %17 = vector.load %arg4[%c0_12, %c0_13] : memref<256x128xbf16, #tpu.memory_space<vmem>>, vector<256x128xbf16>
    %c0_14 = arith.constant 0 : index
    %c0_15 = arith.constant 0 : index
    %18 = vector.load %arg11[%c0_14, %c0_15] : memref<1x128xf32, #tpu.memory_space<vmem>>, vector<1x128xf32>
    %cst_16 = arith.constant dense<0.000000e+00> : vector<16x128xf32>
    %19 = tpu.matmul %16, %17, %cst_16 {dimension_numbers = #tpu.dot_dimension_numbers<[1], [0], [0], [1], [0, 0, 1, 1], [], []>} : vector<16x256xbf16>, vector<256x128xbf16>, vector<16x128xf32> -> vector<16x128xf32>
    %20 = vector.broadcast %18 : vector<1x128xf32> to vector<16x128xf32>
    %21 = arith.addf %19, %20 : vector<16x128xf32>
    %cst_17 = arith.constant 0.000000e+00 : f32
    %22 = vector.broadcast %cst_17 : f32 to vector<16x128xf32>
    %23 = arith.maximumf %21, %22 : vector<16x128xf32>
    %24 = arith.truncf %23 : vector<16x128xf32> to vector<16x128xbf16>
    %c0_18 = arith.constant 0 : index
    %c0_19 = arith.constant 0 : index
    %25 = vector.load %arg5[%c0_18, %c0_19] : memref<128x128xbf16, #tpu.memory_space<vmem>>, vector<128x128xbf16>
    %c0_20 = arith.constant 0 : index
    %c0_21 = arith.constant 0 : index
    %26 = vector.load %arg12[%c0_20, %c0_21] : memref<1x128xf32, #tpu.memory_space<vmem>>, vector<1x128xf32>
    %cst_22 = arith.constant dense<0.000000e+00> : vector<16x128xf32>
    %27 = tpu.matmul %24, %25, %cst_22 {dimension_numbers = #tpu.dot_dimension_numbers<[1], [0], [0], [1], [0, 0, 1, 1], [], []>} : vector<16x128xbf16>, vector<128x128xbf16>, vector<16x128xf32> -> vector<16x128xf32>
    %28 = vector.broadcast %26 : vector<1x128xf32> to vector<16x128xf32>
    %29 = arith.addf %27, %28 : vector<16x128xf32>
    %cst_23 = arith.constant 0.000000e+00 : f32
    %cst_24 = arith.constant 6.000000e+00 : f32
    %30 = vector.broadcast %cst_23 : f32 to vector<16x128xf32>
    %31 = arith.maximumf %30, %29 : vector<16x128xf32>
    %32 = vector.broadcast %cst_24 : f32 to vector<16x128xf32>
    %33 = arith.minimumf %32, %31 : vector<16x128xf32>
    %34 = arith.truncf %33 : vector<16x128xf32> to vector<16x128xbf16>
    %c0_25 = arith.constant 0 : index
    %c0_26 = arith.constant 0 : index
    %35 = vector.load %arg6[%c0_25, %c0_26] : memref<128x128xbf16, #tpu.memory_space<vmem>>, vector<128x128xbf16>
    %c0_27 = arith.constant 0 : index
    %c0_28 = arith.constant 0 : index
    %36 = vector.load %arg13[%c0_27, %c0_28] : memref<1x128xf32, #tpu.memory_space<vmem>>, vector<1x128xf32>
    %cst_29 = arith.constant dense<0.000000e+00> : vector<16x128xf32>
    %37 = tpu.matmul %34, %35, %cst_29 {dimension_numbers = #tpu.dot_dimension_numbers<[1], [0], [0], [1], [0, 0, 1, 1], [], []>} : vector<16x128xbf16>, vector<128x128xbf16>, vector<16x128xf32> -> vector<16x128xf32>
    %38 = vector.broadcast %36 : vector<1x128xf32> to vector<16x128xf32>
    %39 = arith.addf %37, %38 : vector<16x128xf32>
    %cst_30 = arith.constant 0.000000e+00 : f32
    %cst_31 = arith.constant 6.000000e+00 : f32
    %40 = vector.broadcast %cst_30 : f32 to vector<16x128xf32>
    %41 = arith.maximumf %40, %39 : vector<16x128xf32>
    %42 = vector.broadcast %cst_31 : f32 to vector<16x128xf32>
    %43 = arith.minimumf %42, %41 : vector<16x128xf32>
    %44 = arith.truncf %43 : vector<16x128xf32> to vector<16x128xbf16>
    %c0_32 = arith.constant 0 : index
    %c0_33 = arith.constant 0 : index
    %45 = vector.load %arg7[%c0_32, %c0_33] : memref<128x128xbf16, #tpu.memory_space<vmem>>, vector<128x128xbf16>
    %c0_34 = arith.constant 0 : index
    %c0_35 = arith.constant 0 : index
    %46 = vector.load %arg14[%c0_34, %c0_35] : memref<1x128xf32, #tpu.memory_space<vmem>>, vector<1x128xf32>
    %cst_36 = arith.constant dense<0.000000e+00> : vector<16x128xf32>
    %47 = tpu.matmul %44, %45, %cst_36 {dimension_numbers = #tpu.dot_dimension_numbers<[1], [0], [0], [1], [0, 0, 1, 1], [], []>} : vector<16x128xbf16>, vector<128x128xbf16>, vector<16x128xf32> -> vector<16x128xf32>
    %48 = vector.broadcast %46 : vector<1x128xf32> to vector<16x128xf32>
    %49 = arith.addf %47, %48 : vector<16x128xf32>
    %cst_37 = arith.constant 0.000000e+00 : f32
    %cst_38 = arith.constant 6.000000e+00 : f32
    %50 = vector.broadcast %cst_37 : f32 to vector<16x128xf32>
    %51 = arith.maximumf %50, %49 : vector<16x128xf32>
    %52 = vector.broadcast %cst_38 : f32 to vector<16x128xf32>
    %53 = arith.minimumf %52, %51 : vector<16x128xf32>
    %54 = arith.truncf %53 : vector<16x128xf32> to vector<16x128xbf16>
    %c0_39 = arith.constant 0 : index
    %c0_40 = arith.constant 0 : index
    %55 = vector.load %arg8[%c0_39, %c0_40] : memref<128x128xbf16, #tpu.memory_space<vmem>>, vector<128x128xbf16>
    %c0_41 = arith.constant 0 : index
    %c0_42 = arith.constant 0 : index
    %56 = vector.load %arg15[%c0_41, %c0_42] : memref<1x128xf32, #tpu.memory_space<vmem>>, vector<1x128xf32>
    %cst_43 = arith.constant dense<0.000000e+00> : vector<16x128xf32>
    %57 = tpu.matmul %54, %55, %cst_43 {dimension_numbers = #tpu.dot_dimension_numbers<[1], [0], [0], [1], [0, 0, 1, 1], [], []>} : vector<16x128xbf16>, vector<128x128xbf16>, vector<16x128xf32> -> vector<16x128xf32>
    %58 = vector.broadcast %56 : vector<1x128xf32> to vector<16x128xf32>
    %59 = arith.addf %57, %58 : vector<16x128xf32>
    %60 = tpu.transpose %59, [1, 0] : vector<16x128xf32> -> vector<128x16xf32>
    %61 = vector.extract_strided_slice %60 {offsets = [0, 0], sizes = [1, 16], strides = [1, 1]} : vector<128x16xf32> to vector<1x16xf32>
    %62 = arith.negf %61 : vector<1x16xf32>
    %63 = math.exp %62 : vector<1x16xf32>
    %cst_44 = arith.constant 1.000000e+00 : f32
    %64 = vector.broadcast %cst_44 : f32 to vector<1x16xf32>
    %65 = arith.addf %64, %63 : vector<1x16xf32>
    %66 = arith.divf %64, %65 : vector<1x16xf32>
    %c0_45 = arith.constant 0 : index
    %c0_46 = arith.constant 0 : index
    %c0_47 = arith.constant 0 : index
    %67 = vector.load %arg16[%c0_45, %c0_46, %c0_47] : memref<1x1x16xf32, #tpu.memory_space<vmem>>, vector<1x1x16xf32>
    %68 = vector.shape_cast %67 : vector<1x1x16xf32> to vector<1x16xf32>
    %69 = vector.shape_cast %66 : vector<1x16xf32> to vector<1x1x16xf32>
    tpu.vector_store %arg16[%c0_45, %c0_46, %c0_47], %69 {strides = array<i32>} : memref<1x1x16xf32, #tpu.memory_space<vmem>>, vector<1x1x16xf32>,
    return
  }
  func.func @transform_0(%arg0: i32) -> (i32, i32) {
    %c0_i32 = arith.constant 0 : i32
    %c0_i32_0 = arith.constant 0 : i32
    return %arg0, %c0_i32 : i32, i32
  }
  func.func @transform_1(%arg0: i32) -> (i32, i32) {
    %c0_i32 = arith.constant 0 : i32
    %c0_i32_0 = arith.constant 0 : i32
    %c0_i32_1 = arith.constant 0 : i32
    return %c0_i32, %c0_i32_0 : i32, i32
  }
  func.func @transform_2(%arg0: i32) -> (i32, i32) {
    %c0_i32 = arith.constant 0 : i32
    %c0_i32_0 = arith.constant 0 : i32
    %c0_i32_1 = arith.constant 0 : i32
    return %c0_i32, %c0_i32_0 : i32, i32
  }
  func.func @transform_3(%arg0: i32) -> (i32, i32) {
    %c0_i32 = arith.constant 0 : i32
    %c0_i32_0 = arith.constant 0 : i32
    %c0_i32_1 = arith.constant 0 : i32
    return %c0_i32, %c0_i32_0 : i32, i32
  }
  func.func @transform_4(%arg0: i32) -> (i32, i32) {
    %c0_i32 = arith.constant 0 : i32
    %c0_i32_0 = arith.constant 0 : i32
    %c0_i32_1 = arith.constant 0 : i32
    return %c0_i32, %c0_i32_0 : i32, i32
  }
  func.func @transform_5(%arg0: i32) -> (i32, i32) {
    %c0_i32 = arith.constant 0 : i32
    %c0_i32_0 = arith.constant 0 : i32
    %c0_i32_1 = arith.constant 0 : i32
    return %c0_i32, %c0_i32_0 : i32, i32
  }
  func.func @transform_6(%arg0: i32) -> (i32, i32) {
    %c0_i32 = arith.constant 0 : i32
    %c0_i32_0 = arith.constant 0 : i32
    %c0_i32_1 = arith.constant 0 : i32
    return %c0_i32, %c0_i32_0 : i32, i32
  }
  func.func @transform_7(%arg0: i32) -> (i32, i32) {
    %c0_i32 = arith.constant 0 : i32
    %c0_i32_0 = arith.constant 0 : i32
    %c0_i32_1 = arith.constant 0 : i32
    return %c0_i32, %c0_i32_0 : i32, i32
  }
  func.func @transform_8(%arg0: i32) -> (i32, i32) {
    %c0_i32 = arith.constant 0 : i32
    %c0_i32_0 = arith.constant 0 : i32
    %c0_i32_1 = arith.constant 0 : i32
    return %c0_i32, %c0_i32_0 : i32, i32
  }
  func.func @transform_9(%arg0: i32) -> (i32, i32) {
    %c0_i32 = arith.constant 0 : i32
    %c0_i32_0 = arith.constant 0 : i32
    %c0_i32_1 = arith.constant 0 : i32
    return %c0_i32, %c0_i32_0 : i32, i32
  }
  func.func @transform_10(%arg0: i32) -> (i32, i32) {
    %c0_i32 = arith.constant 0 : i32
    %c0_i32_0 = arith.constant 0 : i32
    %c0_i32_1 = arith.constant 0 : i32
    return %c0_i32, %c0_i32_0 : i32, i32
  }
  func.func @transform_11(%arg0: i32) -> (i32, i32) {
    %c0_i32 = arith.constant 0 : i32
    %c0_i32_0 = arith.constant 0 : i32
    %c0_i32_1 = arith.constant 0 : i32
    return %c0_i32, %c0_i32_0 : i32, i32
  }
  func.func @transform_12(%arg0: i32) -> (i32, i32) {
    %c0_i32 = arith.constant 0 : i32
    %c0_i32_0 = arith.constant 0 : i32
    %c0_i32_1 = arith.constant 0 : i32
    return %c0_i32, %c0_i32_0 : i32, i32
  }
  func.func @transform_13(%arg0: i32) -> (i32, i32) {
    %c0_i32 = arith.constant 0 : i32
    %c0_i32_0 = arith.constant 0 : i32
    %c0_i32_1 = arith.constant 0 : i32
    return %c0_i32, %c0_i32_0 : i32, i32
  }
  func.func @transform_14(%arg0: i32) -> (i32, i32) {
    %c0_i32 = arith.constant 0 : i32
    %c0_i32_0 = arith.constant 0 : i32
    %c0_i32_1 = arith.constant 0 : i32
    return %c0_i32, %c0_i32_0 : i32, i32
  }
  func.func @transform_15(%arg0: i32) -> (i32, i32, i32) {
    %c0_i32 = arith.constant 0 : i32
    %c0_i32_0 = arith.constant 0 : i32
    %c0_i32_1 = arith.constant 0 : i32
    return %arg0, %c0_i32, %c0_i32_0 : i32, i32, i32
  }
}

</mosaic_0001>

<llo_original>
// kernel: pd_forward.1
$region0: #{pd_forward.1}
  #allocation0 [shape = 'u32[]', space=smem, size = 0x4, offset = 0x4, fixed_abs, tag = 'smem constant byte address 0x4 - core index']
  #allocation1 [shape = 'u32[144,128]{1,0:T(1,128)}', space=vmem, size = 0x12000, scoped, tag = 'internal scratch']
  %s0 = inlined_call_operand.vmem [shape: bf16[16,512], index: 0, kind: input, shape index: {}]
  %s1 = inlined_call_operand.hbm [shape: bf16[512,384], index: 1, kind: input, shape index: {}]
  %s2 = inlined_call_operand.hbm [shape: bf16[384,256], index: 2, kind: input, shape index: {}]
  %s3 = inlined_call_operand.hbm [shape: bf16[256,128], index: 3, kind: input, shape index: {}]
  %s4 = inlined_call_operand.hbm [shape: bf16[128,128], index: 4, kind: input, shape index: {}]
  %s5 = inlined_call_operand.hbm [shape: bf16[128,128], index: 5, kind: input, shape index: {}]
  %s6 = inlined_call_operand.hbm [shape: bf16[128,128], index: 6, kind: input, shape index: {}]
  %s7 = inlined_call_operand.hbm [shape: bf16[128,128], index: 7, kind: input, shape index: {}]
  %s8 = inlined_call_operand.vmem [shape: f32[1,384], index: 8, kind: input, shape index: {}]
  %s9 = inlined_call_operand.vmem [shape: f32[1,256], index: 9, kind: input, shape index: {}]
  %s10 = inlined_call_operand.vmem [shape: f32[1,128], index: 10, kind: input, shape index: {}]
  %s11 = inlined_call_operand.vmem [shape: f32[1,128], index: 11, kind: input, shape index: {}]
  %s12 = inlined_call_operand.vmem [shape: f32[1,128], index: 12, kind: input, shape index: {}]
  %s13 = inlined_call_operand.vmem [shape: f32[1,128], index: 13, kind: input, shape index: {}]
  %s14 = inlined_call_operand.vmem [shape: f32[1,128], index: 14, kind: input, shape index: {}]
  %s15 = inlined_call_operand.vmem [shape: f32[1,1,16], index: 15, kind: output, shape index: {}]
  %s16 = sld [smem:[#allocation0]]
  $region98: #{pd_forward.1} parent=0
    _
  %s18 = ssub.s32 1, %s16
  %s19 = scalar_select 0, %s18, %s16
  $region1: #{pd_forward.1} parent=0
    #allocation2 [shape = 'u8[393216]{0}', space=vmem, size = 0x60000, scoped, tag = 'input window, operand 1, single buffered']
    #allocation3 [shape = 's32[1]{0}', space=sflag, size = 0x4, scoped, tag = 'scoped memory for pd_forward.1']
    #allocation4 [shape = 'u8[196608]{0}', space=vmem, size = 0x30000, scoped, tag = 'input window, operand 2, single buffered']
    #allocation5 [shape = 's32[1]{0}', space=sflag, size = 0x4, scoped, tag = 'scoped memory for pd_forward.1']
    #allocation6 [shape = 'u8[65536]{0}', space=vmem, size = 0x10000, scoped, tag = 'input window, operand 3, single buffered']
    #allocation7 [shape = 'u8[32768]{0}', space=vmem, size = 0x8000, scoped, tag = 'input window, operand 4, single buffered']
    #allocation8 [shape = 's32[1]{0}', space=sflag, size = 0x4, scoped, tag = 'scoped memory for pd_forward.1']
    #allocation9 [shape = 'u8[32768]{0}', space=vmem, size = 0x8000, scoped, tag = 'input window, operand 5, single buffered']
    #allocation10 [shape = 'u8[32768]{0}', space=vmem, size = 0x8000, scoped, tag = 'input window, operand 6, single buffered']
    #allocation11 [shape = 's32[1]{0}', space=sflag, size = 0x4, scoped, tag = 'scoped memory for pd_forward.1']
    #allocation12 [shape = 'u8[32768]{0}', space=vmem, size = 0x8000, scoped, tag = 'input window, operand 7, single buffered']
    %20 = vsyncpa [#allocation3], 0
    %21 = vsyncpa [#allocation5], 0
    %22 = vsyncpa [#allocation8], 0
    %23 = vsyncpa [#allocation11], 0
    // Predicated region
    $region2: #{pd_forward.1} parent=1 // pred_check
      _
    $region3: #{pd_forward.1} parent=1 // pred_check_branch
      %25 = sbr.rel (0) target = $region5
    $region4: #{pd_forward.1} parent=1 // pred_region
      _
    $region5: #{pd_forward.1} parent=1 // pred_fallthru
      _
    // Predicated region
    $region6: #{pd_forward.1} parent=1 // pred_check
      _
    $region7: #{pd_forward.1} parent=1 // pred_check_branch
      %27 = sbr.rel (0) target = $region9
    $region8: #{pd_forward.1} parent=1 // pred_region
      %s29 = ssub.s32 12288, 12288
      %30 = vsyncadd [#allocation3], %s29
      %s31 = sshll.u32 [#allocation2], 4
      %s32 = int_to_ptr.vmem [resolvable:$true] %s31
      %37 = dma.hbm_to_vmem [thread:$0]  %s1, 12288, %s32, [#allocation3], 192, 192, 12
    $region9: #{pd_forward.1} parent=1 // pred_fallthru
      _
    // Predicated region
    $region10: #{pd_forward.1} parent=1 // pred_check
      _
    $region11: #{pd_forward.1} parent=1 // pred_check_branch
      %39 = sbr.rel (0) target = $region13
    $region12: #{pd_forward.1} parent=1 // pred_region
      %s41 = ssub.s32 6144, 6144
      %42 = vsyncadd [#allocation5], %s41
      %s43 = sshll.u32 [#allocation4], 4
      %s44 = int_to_ptr.vmem [resolvable:$true] %s43
      %49 = dma.hbm_to_vmem [thread:$0]  %s2, 6144, %s44, [#allocation5], 128, 128, 8
    $region13: #{pd_forward.1} parent=1 // pred_fallthru
      _
    // Predicated region
    $region14: #{pd_forward.1} parent=1 // pred_check
      _
    $region15: #{pd_forward.1} parent=1 // pred_check_branch
      %51 = sbr.rel (0) target = $region17
    $region16: #{pd_forward.1} parent=1 // pred_region
      %s53 = ssub.s32 2048, 2048
      %54 = vsyncadd [#allocation5], %s53
      %s55 = sshll.u32 [#allocation6], 4
      %s56 = int_to_ptr.vmem [resolvable:$true] %s55
      %61 = dma.hbm_to_vmem [thread:$0]  %s3, 2048, %s56, [#allocation5], 64, 64, 4
    $region17: #{pd_forward.1} parent=1 // pred_fallthru
      _
    // Predicated region
    $region18: #{pd_forward.1} parent=1 // pred_check
      _
    $region19: #{pd_forward.1} parent=1 // pred_check_branch
      %63 = sbr.rel (0) target = $region21
    $region20: #{pd_forward.1} parent=1 // pred_region
      %s65 = ssub.s32 1024, 1024
      %66 = vsyncadd [#allocation8], %s65
      %s67 = sshll.u32 [#allocation7], 4
      %s68 = int_to_ptr.vmem [resolvable:$true] %s67
      %73 = dma.hbm_to_vmem [thread:$0]  %s4, 1024, %s68, [#allocation8], 64, 64, 4
    $region21: #{pd_forward.1} parent=1 // pred_fallthru
      _
    // Predicated region
    $region22: #{pd_forward.1} parent=1 // pred_check
      _
    $region23: #{pd_forward.1} parent=1 // pred_check_branch
      %75 = sbr.rel (0) target = $region25
    $region24: #{pd_forward.1} parent=1 // pred_region
      %s77 = ssub.s32 1024, 1024
      %78 = vsyncadd [#allocation8], %s77
      %s79 = sshll.u32 [#allocation9], 4
      %s80 = int_to_ptr.vmem [resolvable:$true] %s79
      %85 = dma.hbm_to_vmem [thread:$0]  %s5, 1024, %s80, [#allocation8], 64, 64, 4
    $region25: #{pd_forward.1} parent=1 // pred_fallthru
      _
    // Predicated region
    $region26: #{pd_forward.1} parent=1 // pred_check
      _
    $region27: #{pd_forward.1} parent=1 // pred_check_branch
      %87 = sbr.rel (0) target = $region29
    $region28: #{pd_forward.1} parent=1 // pred_region
      %s89 = ssub.s32 1024, 1024
      %90 = vsyncadd [#allocation11], %s89
      %s91 = sshll.u32 [#allocation10], 4
      %s92 = int_to_ptr.vmem [resolvable:$true] %s91
      %97 = dma.hbm_to_vmem [thread:$0]  %s6, 1024, %s92, [#allocation11], 64, 64, 4
    $region29: #{pd_forward.1} parent=1 // pred_fallthru
      _
    // Predicated region
    $region30: #{pd_forward.1} parent=1 // pred_check
      _
    $region31: #{pd_forward.1} parent=1 // pred_check_branch
      %99 = sbr.rel (0) target = $region33
    $region32: #{pd_forward.1} parent=1 // pred_region
      %s101 = ssub.s32 1024, 1024
      %102 = vsyncadd [#allocation11], %s101
      %s103 = sshll.u32 [#allocation12], 4
      %s104 = int_to_ptr.vmem [resolvable:$true] %s103
      %109 = dma.hbm_to_vmem [thread:$0]  %s7, 1024, %s104, [#allocation11], 64, 64, 4
    $region33: #{pd_forward.1} parent=1 // pred_fallthru
      _
    // Predicated region
    $region34: #{pd_forward.1} parent=1 // pred_check
      _
    $region35: #{pd_forward.1} parent=1 // pred_check_branch
      %111 = sbr.rel (0) target = $region37
    $region36: #{pd_forward.1} parent=1 // pred_region
      _
    $region37: #{pd_forward.1} parent=1 // pred_fallthru
      _
    // Predicated region
    $region38: #{pd_forward.1} parent=1 // pred_check
      _
    $region39: #{pd_forward.1} parent=1 // pred_check_branch
      %113 = sbr.rel (0) target = $region41
    $region40: #{pd_forward.1} parent=1 // pred_region
      _
    $region41: #{pd_forward.1} parent=1 // pred_fallthru
      _
    // Predicated region
    $region42: #{pd_forward.1} parent=1 // pred_check
      _
    $region43: #{pd_forward.1} parent=1 // pred_check_branch
      %115 = sbr.rel (0) target = $region45
    $region44: #{pd_forward.1} parent=1 // pred_region
      _
    $region45: #{pd_forward.1} parent=1 // pred_fallthru
      _
    // Predicated region
    $region46: #{pd_forward.1} parent=1 // pred_check
      _
    $region47: #{pd_forward.1} parent=1 // pred_check_branch
      %117 = sbr.rel (0) target = $region49
    $region48: #{pd_forward.1} parent=1 // pred_region
      _
    $region49: #{pd_forward.1} parent=1 // pred_fallthru
      _
    // Predicated region
    $region50: #{pd_forward.1} parent=1 // pred_check
      _
    $region51: #{pd_forward.1} parent=1 // pred_check_branch
      %119 = sbr.rel (0) target = $region53
    $region52: #{pd_forward.1} parent=1 // pred_region
      _
    $region53: #{pd_forward.1} parent=1 // pred_fallthru
      _
    // Predicated region
    $region54: #{pd_forward.1} parent=1 // pred_check
      _
    $region55: #{pd_forward.1} parent=1 // pred_check_branch
      %121 = sbr.rel (0) target = $region57
    $region56: #{pd_forward.1} parent=1 // pred_region
      _
    $region57: #{pd_forward.1} parent=1 // pred_fallthru
      _
    // Predicated region
    $region58: #{pd_forward.1} parent=1 // pred_check
      _
    $region59: #{pd_forward.1} parent=1 // pred_check_branch
      %123 = sbr.rel (0) target = $region61
    $region60: #{pd_forward.1} parent=1 // pred_region
      _
    $region61: #{pd_forward.1} parent=1 // pred_fallthru
      _
    // Predicated region
    $region62: #{pd_forward.1} parent=1 // pred_check
      _
    $region63: #{pd_forward.1} parent=1 // pred_check_branch
      %125 = sbr.rel (0) target = $region65
    $region64: #{pd_forward.1} parent=1 // pred_region
      %126 = dma.done [#allocation3], 12288
    $region65: #{pd_forward.1} parent=1 // pred_fallthru
      _
    // Predicated region
    $region66: #{pd_forward.1} parent=1 // pred_check
      _
    $region67: #{pd_forward.1} parent=1 // pred_check_branch
      %128 = sbr.rel (0) target = $region69
    $region68: #{pd_forward.1} parent=1 // pred_region
      %129 = dma.done [#allocation5], 6144
    $region69: #{pd_forward.1} parent=1 // pred_fallthru
      _
    // Predicated region
    $region70: #{pd_forward.1} parent=1 // pred_check
      _
    $region71: #{pd_forward.1} parent=1 // pred_check_branch
      %131 = sbr.rel (0) target = $region73
    $region72: #{pd_forward.1} parent=1 // pred_region
      %132 = dma.done [#allocation5], 2048
    $region73: #{pd_forward.1} parent=1 // pred_fallthru
      _
    // Predicated region
    $region74: #{pd_forward.1} parent=1 // pred_check
      _
    $region75: #{pd_forward.1} parent=1 // pred_check_branch
      %134 = sbr.rel (0) target = $region77
    $region76: #{pd_forward.1} parent=1 // pred_region
      %135 = dma.done [#allocation8], 1024
    $region77: #{pd_forward.1} parent=1 // pred_fallthru
      _
    // Predicated region
    $region78: #{pd_forward.1} parent=1 // pred_check
      _
    $region79: #{pd_forward.1} parent=1 // pred_check_branch
      %137 = sbr.rel (0) target = $region81
    $region80: #{pd_forward.1} parent=1 // pred_region
      %138 = dma.done [#allocation8], 1024
    $region81: #{pd_forward.1} parent=1 // pred_fallthru
      _
    // Predicated region
    $region82: #{pd_forward.1} parent=1 // pred_check
      _
    $region83: #{pd_forward.1} parent=1 // pred_check_branch
      %140 = sbr.rel (0) target = $region85
    $region84: #{pd_forward.1} parent=1 // pred_region
      %141 = dma.done [#allocation11], 1024
    $region85: #{pd_forward.1} parent=1 // pred_fallthru
      _
    // Predicated region
    $region86: #{pd_forward.1} parent=1 // pred_check
      _
    $region87: #{pd_forward.1} parent=1 // pred_check_branch
      %143 = sbr.rel (0) target = $region89
    $region88: #{pd_forward.1} parent=1 // pred_region
      %144 = dma.done [#allocation11], 1024
    $region89: #{pd_forward.1} parent=1 // pred_fallthru
      _
    %v146 = vld [vmem:[%s0] sm:$0xff]
    %v147 = vld [vmem:[%s0 + $0x8] sm:$0xff]
    %v148 = vld [vmem:[%s0 + $0x10] sm:$0xff]
    %v149 = vld [vmem:[%s0 + $0x18] sm:$0xff]
    %v150 = vld [vmem:[#allocation2] sm:$0xff]
    %v151 = vld [vmem:[#allocation2 + $0x8] sm:$0xf]
    %v152 = vld [vmem:[#allocation2 + $0xc] sm:$0xff]
    %v153 = vld [vmem:[#allocation2 + $0x14] sm:$0xf]
    %v154 = vld [vmem:[#allocation2 + $0x18] sm:$0xff]
    %v155 = vld [vmem:[#allocation2 + $0x20] sm:$0xf]
    %v156 = vld [vmem:[#allocation2 + $0x24] sm:$0xff]
    %v157 = vld [vmem:[#allocation2 + $0x2c] sm:$0xf]
    %v158 = vld [vmem:[#allocation2 + $0x30] sm:$0xff]
    %v159 = vld [vmem:[#allocation2 + $0x38] sm:$0xf]
    %v160 = vld [vmem:[#allocation2 + $0x3c] sm:$0xff]
    %v161 = vld [vmem:[#allocation2 + $0x44] sm:$0xf]
    %v162 = vld [vmem:[#allocation2 + $0x48] sm:$0xff]
    %v163 = vld [vmem:[#allocation2 + $0x50] sm:$0xf]
    %v164 = vld [vmem:[#allocation2 + $0x54] sm:$0xff]
    %v165 = vld [vmem:[#allocation2 + $0x5c] sm:$0xf]
    %v166 = vld [vmem:[#allocation2 + $0x60] sm:$0xff]
    %v167 = vld [vmem:[#allocation2 + $0x68] sm:$0xf]
    %v168 = vld [vmem:[#allocation2 + $0x6c] sm:$0xff]
    %v169 = vld [vmem:[#allocation2 + $0x74] sm:$0xf]
    %v170 = vld [vmem:[#allocation2 + $0x78] sm:$0xff]
    %v171 = vld [vmem:[#allocation2 + $0x80] sm:$0xf]
    %v172 = vld [vmem:[#allocation2 + $0x84] sm:$0xff]
    %v173 = vld [vmem:[#allocation2 + $0x8c] sm:$0xf]
    %v174 = vld [vmem:[#allocation2 + $0x90] sm:$0xff]
    %v175 = vld [vmem:[#allocation2 + $0x98] sm:$0xf]
    %v176 = vld [vmem:[#allocation2 + $0x9c] sm:$0xff]
    %v177 = vld [vmem:[#allocation2 + $0xa4] sm:$0xf]
    %v178 = vld [vmem:[#allocation2 + $0xa8] sm:$0xff]
    %v179 = vld [vmem:[#allocation2 + $0xb0] sm:$0xf]
    %v180 = vld [vmem:[#allocation2 + $0xb4] sm:$0xff]
    %v181 = vld [vmem:[#allocation2 + $0xbc] sm:$0xf]
    %v182 = vld [vmem:[#allocation2 + $0xc0] sm:$0xff]
    %v183 = vld [vmem:[#allocation2 + $0xc8] sm:$0xf]
    %v184 = vld [vmem:[#allocation2 + $0xcc] sm:$0xff]
    %v185 = vld [vmem:[#allocation2 + $0xd4] sm:$0xf]
    %v186 = vld [vmem:[#allocation2 + $0xd8] sm:$0xff]
    %v187 = vld [vmem:[#allocation2 + $0xe0] sm:$0xf]
    %v188 = vld [vmem:[#allocation2 + $0xe4] sm:$0xff]
    %v189 = vld [vmem:[#allocation2 + $0xec] sm:$0xf]
    %v190 = vld [vmem:[#allocation2 + $0xf0] sm:$0xff]
    %v191 = vld [vmem:[#allocation2 + $0xf8] sm:$0xf]
    %v192 = vld [vmem:[#allocation2 + $0xfc] sm:$0xff]
    %v193 = vld [vmem:[#allocation2 + $0x104] sm:$0xf]
    %v194 = vld [vmem:[#allocation2 + $0x108] sm:$0xff]
    %v195 = vld [vmem:[#allocation2 + $0x110] sm:$0xf]
    %v196 = vld [vmem:[#allocation2 + $0x114] sm:$0xff]
    %v197 = vld [vmem:[#allocation2 + $0x11c] sm:$0xf]
    %v198 = vld [vmem:[#allocation2 + $0x120] sm:$0xff]
    %v199 = vld [vmem:[#allocation2 + $0x128] sm:$0xf]
    %v200 = vld [vmem:[#allocation2 + $0x12c] sm:$0xff]
    %v201 = vld [vmem:[#allocation2 + $0x134] sm:$0xf]
    %v202 = vld [vmem:[#allocation2 + $0x138] sm:$0xff]
    %v203 = vld [vmem:[#allocation2 + $0x140] sm:$0xf]
    %v204 = vld [vmem:[#allocation2 + $0x144] sm:$0xff]
    %v205 = vld [vmem:[#allocation2 + $0x14c] sm:$0xf]
    %v206 = vld [vmem:[#allocation2 + $0x150] sm:$0xff]
    %v207 = vld [vmem:[#allocation2 + $0x158] sm:$0xf]
    %v208 = vld [vmem:[#allocation2 + $0x15c] sm:$0xff]
    %v209 = vld [vmem:[#allocation2 + $0x164] sm:$0xf]
    %v210 = vld [vmem:[#allocation2 + $0x168] sm:$0xff]
    %v211 = vld [vmem:[#allocation2 + $0x170] sm:$0xf]
    %v212 = vld [vmem:[#allocation2 + $0x174] sm:$0xff]
    %v213 = vld [vmem:[#allocation2 + $0x17c] sm:$0xf]
    %v214 = vld [vmem:[#allocation2 + $0x180] sm:$0xff]
    %v215 = vld [vmem:[#allocation2 + $0x188] sm:$0xf]
    %v216 = vld [vmem:[#allocation2 + $0x18c] sm:$0xff]
    %v217 = vld [vmem:[#allocation2 + $0x194] sm:$0xf]
    %v218 = vld [vmem:[#allocation2 + $0x198] sm:$0xff]
    %v219 = vld [vmem:[#allocation2 + $0x1a0] sm:$0xf]
    %v220 = vld [vmem:[#allocation2 + $0x1a4] sm:$0xff]
    %v221 = vld [vmem:[#allocation2 + $0x1ac] sm:$0xf]
    %v222 = vld [vmem:[#allocation2 + $0x1b0] sm:$0xff]
    %v223 = vld [vmem:[#allocation2 + $0x1b8] sm:$0xf]
    %v224 = vld [vmem:[#allocation2 + $0x1bc] sm:$0xff]
    %v225 = vld [vmem:[#allocation2 + $0x1c4] sm:$0xf]
    %v226 = vld [vmem:[#allocation2 + $0x1c8] sm:$0xff]
    %v227 = vld [vmem:[#allocation2 + $0x1d0] sm:$0xf]
    %v228 = vld [vmem:[#allocation2 + $0x1d4] sm:$0xff]
    %v229 = vld [vmem:[#allocation2 + $0x1dc] sm:$0xf]
    %v230 = vld [vmem:[#allocation2 + $0x1e0] sm:$0xff]
    %v231 = vld [vmem:[#allocation2 + $0x1e8] sm:$0xf]
    %v232 = vld [vmem:[#allocation2 + $0x1ec] sm:$0xff]
    %v233 = vld [vmem:[#allocation2 + $0x1f4] sm:$0xf]
    %v234 = vld [vmem:[#allocation2 + $0x1f8] sm:$0xff]
    %v235 = vld [vmem:[#allocation2 + $0x200] sm:$0xf]
    %v236 = vld [vmem:[#allocation2 + $0x204] sm:$0xff]
    %v237 = vld [vmem:[#allocation2 + $0x20c] sm:$0xf]
    %v238 = vld [vmem:[#allocation2 + $0x210] sm:$0xff]
    %v239 = vld [vmem:[#allocation2 + $0x218] sm:$0xf]
    %v240 = vld [vmem:[#allocation2 + $0x21c] sm:$0xff]
    %v241 = vld [vmem:[#allocation2 + $0x224] sm:$0xf]
    %v242 = vld [vmem:[#allocation2 + $0x228] sm:$0xff]
    %v243 = vld [vmem:[#allocation2 + $0x230] sm:$0xf]
    %v244 = vld [vmem:[#allocation2 + $0x234] sm:$0xff]
    %v245 = vld [vmem:[#allocation2 + $0x23c] sm:$0xf]
    %v246 = vld [vmem:[#allocation2 + $0x240] sm:$0xff]
    %v247 = vld [vmem:[#allocation2 + $0x248] sm:$0xf]
    %v248 = vld [vmem:[#allocation2 + $0x24c] sm:$0xff]
    %v249 = vld [vmem:[#allocation2 + $0x254] sm:$0xf]
    %v250 = vld [vmem:[#allocation2 + $0x258] sm:$0xff]
    %v251 = vld [vmem:[#allocation2 + $0x260] sm:$0xf]
    %v252 = vld [vmem:[#allocation2 + $0x264] sm:$0xff]
    %v253 = vld [vmem:[#allocation2 + $0x26c] sm:$0xf]
    %v254 = vld [vmem:[#allocation2 + $0x270] sm:$0xff]
    %v255 = vld [vmem:[#allocation2 + $0x278] sm:$0xf]
    %v256 = vld [vmem:[#allocation2 + $0x27c] sm:$0xff]
    %v257 = vld [vmem:[#allocation2 + $0x284] sm:$0xf]
    %v258 = vld [vmem:[#allocation2 + $0x288] sm:$0xff]
    %v259 = vld [vmem:[#allocation2 + $0x290] sm:$0xf]
    %v260 = vld [vmem:[#allocation2 + $0x294] sm:$0xff]
    %v261 = vld [vmem:[#allocation2 + $0x29c] sm:$0xf]
    %v262 = vld [vmem:[#allocation2 + $0x2a0] sm:$0xff]
    %v263 = vld [vmem:[#allocation2 + $0x2a8] sm:$0xf]
    %v264 = vld [vmem:[#allocation2 + $0x2ac] sm:$0xff]
    %v265 = vld [vmem:[#allocation2 + $0x2b4] sm:$0xf]
    %v266 = vld [vmem:[#allocation2 + $0x2b8] sm:$0xff]
    %v267 = vld [vmem:[#allocation2 + $0x2c0] sm:$0xf]
    %v268 = vld [vmem:[#allocation2 + $0x2c4] sm:$0xff]
    %v269 = vld [vmem:[#allocation2 + $0x2cc] sm:$0xf]
    %v270 = vld [vmem:[#allocation2 + $0x2d0] sm:$0xff]
    %v271 = vld [vmem:[#allocation2 + $0x2d8] sm:$0xf]
    %v272 = vld [vmem:[#allocation2 + $0x2dc] sm:$0xff]
    %v273 = vld [vmem:[#allocation2 + $0x2e4] sm:$0xf]
    %v274 = vld [vmem:[#allocation2 + $0x2e8] sm:$0xff]
    %v275 = vld [vmem:[#allocation2 + $0x2f0] sm:$0xf]
    %v276 = vld [vmem:[#allocation2 + $0x2f4] sm:$0xff]
    %v277 = vld [vmem:[#allocation2 + $0x2fc] sm:$0xf]
    %v278 = vld [vmem:[%s8] sm:$0x7]
    %v280 = vlaneseq
    %v281 = vshrl.u32 %v280, 7
    %v282 = vsub.s32 0, %v281
    %v283 = vrot.slane %v278, %v282
    %v284 = vlaneseq
    %v285 = vshrl.u32 %v284, 7
    %v286 = vsub.s32 1, %v285
    %v287 = vrot.slane %v278, %v286
    %v288 = vlaneseq
    %v289 = vshrl.u32 %v288, 7
    %v290 = vsub.s32 2, %v289
    %v291 = vrot.slane %v278, %v290
    %v299 = vunpack.c.l.b16 %v146
    %v300 = vunpack.c.h.b16 %v146
    %v301 = vunpack.c.l.b16 %v147
    %v302 = vunpack.c.h.b16 %v147
    %v303 = vunpack.c.l.b16 %v148
    %v304 = vunpack.c.h.b16 %v148
    %v305 = vunpack.c.l.b16 %v149
    %v306 = vunpack.c.h.b16 %v149
    %v307 = vpack.c.b16 %v303, %v299
    %v308 = vpack.c.b16 %v304, %v300
    %v309 = vpack.c.b16 %v305, %v301
    %v310 = vpack.c.b16 %v306, %v302
    %v443 = vunpack.c.l.b16 %v150
    %v444 = vunpack.c.h.b16 %v150
    %v445 = vunpack.c.l.b16 %v151
    %v446 = vunpack.c.l.b16 %v152
    %v447 = vunpack.c.h.b16 %v152
    %v448 = vunpack.c.l.b16 %v153
    %v449 = vunpack.c.l.b16 %v154
    %v450 = vunpack.c.h.b16 %v154
    %v451 = vunpack.c.l.b16 %v155
    %v452 = vunpack.c.l.b16 %v156
    %v453 = vunpack.c.h.b16 %v156
    %v454 = vunpack.c.l.b16 %v157
    %v455 = vunpack.c.l.b16 %v158
    %v456 = vunpack.c.h.b16 %v158
    %v457 = vunpack.c.l.b16 %v159
    %v458 = vunpack.c.l.b16 %v160
    %v459 = vunpack.c.h.b16 %v160
    %v460 = vunpack.c.l.b16 %v161
    %v461 = vunpack.c.l.b16 %v162
    %v462 = vunpack.c.h.b16 %v162
    %v463 = vunpack.c.l.b16 %v163
    %v464 = vunpack.c.l.b16 %v164
    %v465 = vunpack.c.h.b16 %v164
    %v466 = vunpack.c.l.b16 %v165
    %v467 = vunpack.c.l.b16 %v166
    %v468 = vunpack.c.h.b16 %v166
    %v469 = vunpack.c.l.b16 %v167
    %v470 = vunpack.c.l.b16 %v168
    %v471 = vunpack.c.h.b16 %v168
    %v472 = vunpack.c.l.b16 %v169
    %v473 = vunpack.c.l.b16 %v170
    %v474 = vunpack.c.h.b16 %v170
    %v475 = vunpack.c.l.b16 %v171
    %v476 = vunpack.c.l.b16 %v172
    %v477 = vunpack.c.h.b16 %v172
    %v478 = vunpack.c.l.b16 %v173
    %v479 = vunpack.c.l.b16 %v174
    %v480 = vunpack.c.h.b16 %v174
    %v481 = vunpack.c.l.b16 %v175
    %v482 = vunpack.c.l.b16 %v176
    %v483 = vunpack.c.h.b16 %v176
    %v484 = vunpack.c.l.b16 %v177
    %v485 = vunpack.c.l.b16 %v178
    %v486 = vunpack.c.h.b16 %v178
    %v487 = vunpack.c.l.b16 %v179
    %v488 = vunpack.c.l.b16 %v180
    %v489 = vunpack.c.h.b16 %v180
    %v490 = vunpack.c.l.b16 %v181
    %v491 = vunpack.c.l.b16 %v182
    %v492 = vunpack.c.h.b16 %v182
    %v493 = vunpack.c.l.b16 %v183
    %v494 = vunpack.c.l.b16 %v184
    %v495 = vunpack.c.h.b16 %v184
    %v496 = vunpack.c.l.b16 %v185
    %v497 = vunpack.c.l.b16 %v186
    %v498 = vunpack.c.h.b16 %v186
    %v499 = vunpack.c.l.b16 %v187
    %v500 = vunpack.c.l.b16 %v188
    %v501 = vunpack.c.h.b16 %v188
    %v502 = vunpack.c.l.b16 %v189
    %v503 = vunpack.c.l.b16 %v190
    %v504 = vunpack.c.h.b16 %v190
    %v505 = vunpack.c.l.b16 %v191
    %v506 = vunpack.c.l.b16 %v192
    %v507 = vunpack.c.h.b16 %v192
    %v508 = vunpack.c.l.b16 %v193
    %v509 = vunpack.c.l.b16 %v194
    %v510 = vunpack.c.h.b16 %v194
    %v511 = vunpack.c.l.b16 %v195
    %v512 = vunpack.c.l.b16 %v196
    %v513 = vunpack.c.h.b16 %v196
    %v514 = vunpack.c.l.b16 %v197
    %v515 = vunpack.c.l.b16 %v198
    %v516 = vunpack.c.h.b16 %v198
    %v517 = vunpack.c.l.b16 %v199
    %v518 = vunpack.c.l.b16 %v200
    %v519 = vunpack.c.h.b16 %v200
    %v520 = vunpack.c.l.b16 %v201
    %v521 = vunpack.c.l.b16 %v202
    %v522 = vunpack.c.h.b16 %v202
    %v523 = vunpack.c.l.b16 %v203
    %v524 = vunpack.c.l.b16 %v204
    %v525 = vunpack.c.h.b16 %v204
    %v526 = vunpack.c.l.b16 %v205
    %v527 = vunpack.c.l.b16 %v206
    %v528 = vunpack.c.h.b16 %v206
    %v529 = vunpack.c.l.b16 %v207
    %v530 = vunpack.c.l.b16 %v208
    %v531 = vunpack.c.h.b16 %v208
    %v532 = vunpack.c.l.b16 %v209
    %v533 = vunpack.c.l.b16 %v210
    %v534 = vunpack.c.h.b16 %v210
    %v535 = vunpack.c.l.b16 %v211
    %v536 = vunpack.c.l.b16 %v212
    %v537 = vunpack.c.h.b16 %v212
    %v538 = vunpack.c.l.b16 %v213
    %v539 = vunpack.c.l.b16 %v214
    %v540 = vunpack.c.h.b16 %v214
    %v541 = vunpack.c.l.b16 %v215
    %v542 = vunpack.c.l.b16 %v216
    %v543 = vunpack.c.h.b16 %v216
    %v544 = vunpack.c.l.b16 %v217
    %v545 = vunpack.c.l.b16 %v218
    %v546 = vunpack.c.h.b16 %v218
    %v547 = vunpack.c.l.b16 %v219
    %v548 = vunpack.c.l.b16 %v220
    %v549 = vunpack.c.h.b16 %v220
    %v550 = vunpack.c.l.b16 %v221
    %v551 = vunpack.c.l.b16 %v222
    %v552 = vunpack.c.h.b16 %v222
    %v553 = vunpack.c.l.b16 %v223
    %v554 = vunpack.c.l.b16 %v224
    %v555 = vunpack.c.h.b16 %v224
    %v556 = vunpack.c.l.b16 %v225
    %v557 = vunpack.c.l.b16 %v226
    %v558 = vunpack.c.h.b16 %v226
    %v559 = vunpack.c.l.b16 %v227
    %v560 = vunpack.c.l.b16 %v228
    %v561 = vunpack.c.h.b16 %v228
    %v562 = vunpack.c.l.b16 %v229
    %v563 = vunpack.c.l.b16 %v230
    %v564 = vunpack.c.h.b16 %v230
    %v565 = vunpack.c.l.b16 %v231
    %v566 = vunpack.c.l.b16 %v232
    %v567 = vunpack.c.h.b16 %v232
    %v568 = vunpack.c.l.b16 %v233
    %v569 = vunpack.c.l.b16 %v234
    %v570 = vunpack.c.h.b16 %v234
    %v571 = vunpack.c.l.b16 %v235
    %v572 = vunpack.c.l.b16 %v236
    %v573 = vunpack.c.h.b16 %v236
    %v574 = vunpack.c.l.b16 %v237
    %v575 = vunpack.c.l.b16 %v238
    %v576 = vunpack.c.h.b16 %v238
    %v577 = vunpack.c.l.b16 %v239
    %v578 = vunpack.c.l.b16 %v240
    %v579 = vunpack.c.h.b16 %v240
    %v580 = vunpack.c.l.b16 %v241
    %v581 = vunpack.c.l.b16 %v242
    %v582 = vunpack.c.h.b16 %v242
    %v583 = vunpack.c.l.b16 %v243
    %v584 = vunpack.c.l.b16 %v244
    %v585 = vunpack.c.h.b16 %v244
    %v586 = vunpack.c.l.b16 %v245
    %v587 = vunpack.c.l.b16 %v246
    %v588 = vunpack.c.h.b16 %v246
    %v589 = vunpack.c.l.b16 %v247
    %v590 = vunpack.c.l.b16 %v248
    %v591 = vunpack.c.h.b16 %v248
    %v592 = vunpack.c.l.b16 %v249
    %v593 = vunpack.c.l.b16 %v250
    %v594 = vunpack.c.h.b16 %v250
    %v595 = vunpack.c.l.b16 %v251
    %v596 = vunpack.c.l.b16 %v252
    %v597 = vunpack.c.h.b16 %v252
    %v598 = vunpack.c.l.b16 %v253
    %v599 = vunpack.c.l.b16 %v254
    %v600 = vunpack.c.h.b16 %v254
    %v601 = vunpack.c.l.b16 %v255
    %v602 = vunpack.c.l.b16 %v256
    %v603 = vunpack.c.h.b16 %v256
    %v604 = vunpack.c.l.b16 %v257
    %v605 = vunpack.c.l.b16 %v258
    %v606 = vunpack.c.h.b16 %v258
    %v607 = vunpack.c.l.b16 %v259
    %v608 = vunpack.c.l.b16 %v260
    %v609 = vunpack.c.h.b16 %v260
    %v610 = vunpack.c.l.b16 %v261
    %v611 = vunpack.c.l.b16 %v262
    %v612 = vunpack.c.h.b16 %v262
    %v613 = vunpack.c.l.b16 %v263
    %v614 = vunpack.c.l.b16 %v264
    %v615 = vunpack.c.h.b16 %v264
    %v616 = vunpack.c.l.b16 %v265
    %v617 = vunpack.c.l.b16 %v266
    %v618 = vunpack.c.h.b16 %v266
    %v619 = vunpack.c.l.b16 %v267
    %v620 = vunpack.c.l.b16 %v268
    %v621 = vunpack.c.h.b16 %v268
    %v622 = vunpack.c.l.b16 %v269
    %v623 = vunpack.c.l.b16 %v270
    %v624 = vunpack.c.h.b16 %v270
    %v625 = vunpack.c.l.b16 %v271
    %v626 = vunpack.c.l.b16 %v272
    %v627 = vunpack.c.h.b16 %v272
    %v628 = vunpack.c.l.b16 %v273
    %v629 = vunpack.c.l.b16 %v274
    %v630 = vunpack.c.h.b16 %v274
    %v631 = vunpack.c.l.b16 %v275
    %v632 = vunpack.c.l.b16 %v276
    %v633 = vunpack.c.h.b16 %v276
    %v634 = vunpack.c.l.b16 %v277
    %v635 = vpack.c.b16 %v446, %v443
    %v636 = vpack.c.b16 %v447, %v444
    %v637 = vpack.c.b16 %v448, %v445
    %v638 = vpack.c.b16 %v452, %v449
    %v639 = vpack.c.b16 %v453, %v450
    %v640 = vpack.c.b16 %v454, %v451
    %v641 = vpack.c.b16 %v458, %v455
    %v642 = vpack.c.b16 %v459, %v456
    %v643 = vpack.c.b16 %v460, %v457
    %v644 = vpack.c.b16 %v464, %v461
    %v645 = vpack.c.b16 %v465, %v462
    %v646 = vpack.c.b16 %v466, %v463
    %v647 = vpack.c.b16 %v470, %v467
    %v648 = vpack.c.b16 %v471, %v468
    %v649 = vpack.c.b16 %v472, %v469
    %v650 = vpack.c.b16 %v476, %v473
    %v651 = vpack.c.b16 %v477, %v474
    %v652 = vpack.c.b16 %v478, %v475
    %v653 = vpack.c.b16 %v482, %v479
    %v654 = vpack.c.b16 %v483, %v480
    %v655 = vpack.c.b16 %v484, %v481
    %v656 = vpack.c.b16 %v488, %v485
    %v657 = vpack.c.b16 %v489, %v486
    %v658 = vpack.c.b16 %v490, %v487
    %v659 = vpack.c.b16 %v494, %v491
    %v660 = vpack.c.b16 %v495, %v492
    %v661 = vpack.c.b16 %v496, %v493
    %v662 = vpack.c.b16 %v500, %v497
    %v663 = vpack.c.b16 %v501, %v498
    %v664 = vpack.c.b16 %v502, %v499
    %v665 = vpack.c.b16 %v506, %v503
    %v666 = vpack.c.b16 %v507, %v504
    %v667 = vpack.c.b16 %v508, %v505
    %v668 = vpack.c.b16 %v512, %v509
    %v669 = vpack.c.b16 %v513, %v510
    %v670 = vpack.c.b16 %v514, %v511
    %v671 = vpack.c.b16 %v518, %v515
    %v672 = vpack.c.b16 %v519, %v516
    %v673 = vpack.c.b16 %v520, %v517
    %v674 = vpack.c.b16 %v524, %v521
    %v675 = vpack.c.b16 %v525, %v522
    %v676 = vpack.c.b16 %v526, %v523
    %v677 = vpack.c.b16 %v530, %v527
    %v678 = vpack.c.b16 %v531, %v528
    %v679 = vpack.c.b16 %v532, %v529
    %v680 = vpack.c.b16 %v536, %v533
    %v681 = vpack.c.b16 %v537, %v534
    %v682 = vpack.c.b16 %v538, %v535
    %v683 = vpack.c.b16 %v542, %v539
    %v684 = vpack.c.b16 %v543, %v540
    %v685 = vpack.c.b16 %v544, %v541
    %v686 = vpack.c.b16 %v548, %v545
    %v687 = vpack.c.b16 %v549, %v546
    %v688 = vpack.c.b16 %v550, %v547
    %v689 = vpack.c.b16 %v554, %v551
    %v690 = vpack.c.b16 %v555, %v552
    %v691 = vpack.c.b16 %v556, %v553
    %v692 = vpack.c.b16 %v560, %v557
    %v693 = vpack.c.b16 %v561, %v558
    %v694 = vpack.c.b16 %v562, %v559
    %v695 = vpack.c.b16 %v566, %v563
    %v696 = vpack.c.b16 %v567, %v564
    %v697 = vpack.c.b16 %v568, %v565
    %v698 = vpack.c.b16 %v572, %v569
    %v699 = vpack.c.b16 %v573, %v570
    %v700 = vpack.c.b16 %v574, %v571
    %v701 = vpack.c.b16 %v578, %v575
    %v702 = vpack.c.b16 %v579, %v576
    %v703 = vpack.c.b16 %v580, %v577
    %v704 = vpack.c.b16 %v584, %v581
    %v705 = vpack.c.b16 %v585, %v582
    %v706 = vpack.c.b16 %v586, %v583
    %v707 = vpack.c.b16 %v590, %v587
    %v708 = vpack.c.b16 %v591, %v588
    %v709 = vpack.c.b16 %v592, %v589
    %v710 = vpack.c.b16 %v596, %v593
    %v711 = vpack.c.b16 %v597, %v594
    %v712 = vpack.c.b16 %v598, %v595
    %v713 = vpack.c.b16 %v602, %v599
    %v714 = vpack.c.b16 %v603, %v600
    %v715 = vpack.c.b16 %v604, %v601
    %v716 = vpack.c.b16 %v608, %v605
    %v717 = vpack.c.b16 %v609, %v606
    %v718 = vpack.c.b16 %v610, %v607
    %v719 = vpack.c.b16 %v614, %v611
    %v720 = vpack.c.b16 %v615, %v612
    %v721 = vpack.c.b16 %v616, %v613
    %v722 = vpack.c.b16 %v620, %v617
    %v723 = vpack.c.b16 %v621, %v618
    %v724 = vpack.c.b16 %v622, %v619
    %v725 = vpack.c.b16 %v626, %v623
    %v726 = vpack.c.b16 %v627, %v624
    %v727 = vpack.c.b16 %v628, %v625
    %v728 = vpack.c.b16 %v632, %v629
    %v729 = vpack.c.b16 %v633, %v630
    %v730 = vpack.c.b16 %v634, %v631
    %827 = vmatprep.subr.bf16.mxu0 %v657
    %828 = vmatpush1.bf16.msra.mxu0 %v656
    %829 = vmatprep.subr.bf16.mxu0 %v654
    %830 = vmatpush1.bf16.msra.mxu0 %v653
    %831 = vmatprep.subr.bf16.mxu0 %v651
    %832 = vmatpush1.bf16.msra.mxu0 %v650
    %833 = vmatprep.subr.bf16.mxu0 %v648
    %834 = vmatpush1.bf16.msra.mxu0 %v647
    %835 = vmatprep.subr.bf16.mxu0 %v645
    %836 = vmatpush1.bf16.msra.mxu0 %v644
    %837 = vmatprep.subr.bf16.mxu0 %v642
    %838 = vmatpush1.bf16.msra.mxu0 %v641
    %839 = vmatprep.subr.bf16.mxu0 %v639
    %840 = vmatpush1.bf16.msra.mxu0 %v638
    %841 = vmatprep.subr.bf16.mxu0 %v636
    %842 = vmatpush1.bf16.msra.mxu0 %v635
    %843 = vmatprep.subr.bf16.mxu0 %v681
    %844 = vmatpush2.bf16.msra.mxu0 %v680
    %845 = vmatprep.subr.bf16.mxu0 %v678
    %846 = vmatpush2.bf16.msra.mxu0 %v677
    %847 = vmatprep.subr.bf16.mxu0 %v675
    %848 = vmatpush2.bf16.msra.mxu0 %v674
    %849 = vmatprep.subr.bf16.mxu0 %v672
    %850 = vmatpush2.bf16.msra.mxu0 %v671
    %851 = vmatprep.subr.bf16.mxu0 %v669
    %852 = vmatpush2.bf16.msra.mxu0 %v668
    %853 = vmatprep.subr.bf16.mxu0 %v666
    %854 = vmatpush2.bf16.msra.mxu0 %v665
    %855 = vmatprep.subr.bf16.mxu0 %v663
    %856 = vmatpush2.bf16.msra.mxu0 %v662
    %857 = vmatprep.subr.bf16.mxu0 %v660
    %858 = vmatpush2.bf16.msra.mxu0 %v659
    %859 = vmatprep.mubr.bf16.mxu0 %v308
    %860 = vmatmul.mubr.bf16.gmra.mxu0 %v307
    %v861 = vpop.f32.mrf.mxu0
    %v862 = vadd.f32 %v283, %v861
    %v863 = vpop.f32.mrf.mxu0
    %v864 = vadd.f32 %v287, %v863
    %v865 = vpop.f32.mrf.mxu0
    %v866 = vadd.f32 %v283, %v865
    %v867 = vpop.f32.mrf.mxu0
    %v868 = vadd.f32 %v287, %v867
    %869 = vdwg.mxu0
    %870 = vmatprep.subr.bf16.mxu0 %v705
    %871 = vmatpush1.bf16.msra.mxu0 %v704
    %872 = vmatprep.subr.bf16.mxu0 %v702
    %873 = vmatpush1.bf16.msra.mxu0 %v701
    %874 = vmatprep.subr.bf16.mxu0 %v699
    %875 = vmatpush1.bf16.msra.mxu0 %v698
    %876 = vmatprep.subr.bf16.mxu0 %v696
    %877 = vmatpush1.bf16.msra.mxu0 %v695
    %878 = vmatprep.subr.bf16.mxu0 %v693
    %879 = vmatpush1.bf16.msra.mxu0 %v692
    %880 = vmatprep.subr.bf16.mxu0 %v690
    %881 = vmatpush1.bf16.msra.mxu0 %v689
    %882 = vmatprep.subr.bf16.mxu0 %v687
    %883 = vmatpush1.bf16.msra.mxu0 %v686
    %884 = vmatprep.subr.bf16.mxu0 %v684
    %885 = vmatpush1.bf16.msra.mxu0 %v683
    %886 = vmatprep.subr.bf16.mxu0 %v729
    %887 = vmatpush2.bf16.msra.mxu0 %v728
    %888 = vmatprep.subr.bf16.mxu0 %v726
    %889 = vmatpush2.bf16.msra.mxu0 %v725
    %890 = vmatprep.subr.bf16.mxu0 %v723
    %891 = vmatpush2.bf16.msra.mxu0 %v722
    %892 = vmatprep.subr.bf16.mxu0 %v720
    %893 = vmatpush2.bf16.msra.mxu0 %v719
    %894 = vmatprep.subr.bf16.mxu0 %v717
    %895 = vmatpush2.bf16.msra.mxu0 %v716
    %896 = vmatprep.subr.bf16.mxu0 %v714
    %897 = vmatpush2.bf16.msra.mxu0 %v713
    %898 = vmatprep.subr.bf16.mxu0 %v711
    %899 = vmatpush2.bf16.msra.mxu0 %v710
    %900 = vmatprep.subr.bf16.mxu0 %v708
    %901 = vmatpush2.bf16.msra.mxu0 %v707
    %902 = vmatprep.mubr.bf16.mxu0 %v310
    %903 = vmatmul.mubr.bf16.gmra.mxu0 %v309
    %v904 = vpop.f32.mrf.mxu0
    %v905 = vadd.f32 %v862, %v904
    %v906 = vpop.f32.mrf.mxu0
    %v907 = vadd.f32 %v864, %v906
    %v908 = vpop.f32.mrf.mxu0
    %v909 = vadd.f32 %v866, %v908
    %v910 = vpop.f32.mrf.mxu0
    %v911 = vadd.f32 %v868, %v910
    %912 = vdwg.mxu0
    %913 = vmatprep.subr.bf16.mxu0 0
    %914 = vmatpush1.bf16.msra.mxu0 %v658
    %915 = vmatprep.subr.bf16.mxu0 0
    %916 = vmatpush1.bf16.msra.mxu0 %v655
    %917 = vmatprep.subr.bf16.mxu0 0
    %918 = vmatpush1.bf16.msra.mxu0 %v652
    %919 = vmatprep.subr.bf16.mxu0 0
    %920 = vmatpush1.bf16.msra.mxu0 %v649
    %921 = vmatprep.subr.bf16.mxu0 0
    %922 = vmatpush1.bf16.msra.mxu0 %v646
    %923 = vmatprep.subr.bf16.mxu0 0
    %924 = vmatpush1.bf16.msra.mxu0 %v643
    %925 = vmatprep.subr.bf16.mxu0 0
    %926 = vmatpush1.bf16.msra.mxu0 %v640
    %927 = vmatprep.subr.bf16.mxu0 0
    %928 = vmatpush1.bf16.msra.mxu0 %v637
    %929 = vmatprep.subr.bf16.mxu0 0
    %930 = vmatpush2.bf16.msra.mxu0 %v682
    %931 = vmatprep.subr.bf16.mxu0 0
    %932 = vmatpush2.bf16.msra.mxu0 %v679
    %933 = vmatprep.subr.bf16.mxu0 0
    %934 = vmatpush2.bf16.msra.mxu0 %v676
    %935 = vmatprep.subr.bf16.mxu0 0
    %936 = vmatpush2.bf16.msra.mxu0 %v673
    %937 = vmatprep.subr.bf16.mxu0 0
    %938 = vmatpush2.bf16.msra.mxu0 %v670
    %939 = vmatprep.subr.bf16.mxu0 0
    %940 = vmatpush2.bf16.msra.mxu0 %v667
    %941 = vmatprep.subr.bf16.mxu0 0
    %942 = vmatpush2.bf16.msra.mxu0 %v664
    %943 = vmatprep.subr.bf16.mxu0 0
    %944 = vmatpush2.bf16.msra.mxu0 %v661
    %945 = vmatprep.mubr.bf16.mxu0 %v308
    %946 = vmatmul.mubr.bf16.gmra.mxu0 %v307
    %v947 = vpop.f32.mrf.mxu0
    %v948 = vadd.f32 %v291, %v947
    %v949 = vpop.f32.mrf.mxu0
    %v950 = vpop.f32.mrf.mxu0
    %v951 = vadd.f32 %v291, %v950
    %v952 = vpop.f32.mrf.mxu0
    %953 = vdwg.mxu0
    %954 = vmatprep.subr.bf16.mxu0 0
    %955 = vmatpush1.bf16.msra.mxu0 %v706
    %956 = vmatprep.subr.bf16.mxu0 0
    %957 = vmatpush1.bf16.msra.mxu0 %v703
    %958 = vmatprep.subr.bf16.mxu0 0
    %959 = vmatpush1.bf16.msra.mxu0 %v700
    %960 = vmatprep.subr.bf16.mxu0 0
    %961 = vmatpush1.bf16.msra.mxu0 %v697
    %962 = vmatprep.subr.bf16.mxu0 0
    %963 = vmatpush1.bf16.msra.mxu0 %v694
    %964 = vmatprep.subr.bf16.mxu0 0
    %965 = vmatpush1.bf16.msra.mxu0 %v691
    %966 = vmatprep.subr.bf16.mxu0 0
    %967 = vmatpush1.bf16.msra.mxu0 %v688
    %968 = vmatprep.subr.bf16.mxu0 0
    %969 = vmatpush1.bf16.msra.mxu0 %v685
    %970 = vmatprep.subr.bf16.mxu0 0
    %971 = vmatpush2.bf16.msra.mxu0 %v730
    %972 = vmatprep.subr.bf16.mxu0 0
    %973 = vmatpush2.bf16.msra.mxu0 %v727
    %974 = vmatprep.subr.bf16.mxu0 0
    %975 = vmatpush2.bf16.msra.mxu0 %v724
    %976 = vmatprep.subr.bf16.mxu0 0
    %977 = vmatpush2.bf16.msra.mxu0 %v721
    %978 = vmatprep.subr.bf16.mxu0 0
    %979 = vmatpush2.bf16.msra.mxu0 %v718
    %980 = vmatprep.subr.bf16.mxu0 0
    %981 = vmatpush2.bf16.msra.mxu0 %v715
    %982 = vmatprep.subr.bf16.mxu0 0
    %983 = vmatpush2.bf16.msra.mxu0 %v712
    %984 = vmatprep.subr.bf16.mxu0 0
    %985 = vmatpush2.bf16.msra.mxu0 %v709
    %986 = vmatprep.mubr.bf16.mxu0 %v310
    %987 = vmatmul.mubr.bf16.gmra.mxu0 %v309
    %v988 = vpop.f32.mrf.mxu0
    %v989 = vadd.f32 %v948, %v988
    %v990 = vpop.f32.mrf.mxu0
    %v991 = vpop.f32.mrf.mxu0
    %v992 = vadd.f32 %v951, %v991
    %v993 = vpop.f32.mrf.mxu0
    %994 = vdwg.mxu0
    %v995 = vmax.f32 %v905, 0.0
    %v996 = vmax.f32 %v907, 0.0
    %v997 = vmax.f32 %v989, 0.0
    %v998 = vmax.f32 %v909, 0.0
    %v999 = vmax.f32 %v911, 0.0
    %v1000 = vmax.f32 %v992, 0.0
    %v1001 = vpack.c.bf16 %v998, %v995
    %v1002 = vpack.c.bf16 %v999, %v996
    %v1003 = vpack.c.bf16 %v1000, %v997
    %v1004 = vld [vmem:[#allocation4] sm:$0xff]
    %v1005 = vld [vmem:[#allocation4 + $0x8] sm:$0xff]
    %v1006 = vld [vmem:[#allocation4 + $0x10] sm:$0xff]
    %v1007 = vld [vmem:[#allocation4 + $0x18] sm:$0xff]
    %v1008 = vld [vmem:[#allocation4 + $0x20] sm:$0xff]
    %v1009 = vld [vmem:[#allocation4 + $0x28] sm:$0xff]
    %v1010 = vld [vmem:[#allocation4 + $0x30] sm:$0xff]
    %v1011 = vld [vmem:[#allocation4 + $0x38] sm:$0xff]
    %v1012 = vld [vmem:[#allocation4 + $0x40] sm:$0xff]
    %v1013 = vld [vmem:[#allocation4 + $0x48] sm:$0xff]
    %v1014 = vld [vmem:[#allocation4 + $0x50] sm:$0xff]
    %v1015 = vld [vmem:[#allocation4 + $0x58] sm:$0xff]
    %v1016 = vld [vmem:[#allocation4 + $0x60] sm:$0xff]
    %v1017 = vld [vmem:[#allocation4 + $0x68] sm:$0xff]
    %v1018 = vld [vmem:[#allocation4 + $0x70] sm:$0xff]
    %v1019 = vld [vmem:[#allocation4 + $0x78] sm:$0xff]
    %v1020 = vld [vmem:[#allocation4 + $0x80] sm:$0xff]
    %v1021 = vld [vmem:[#allocation4 + $0x88] sm:$0xff]
    %v1022 = vld [vmem:[#allocation4 + $0x90] sm:$0xff]
    %v1023 = vld [vmem:[#allocation4 + $0x98] sm:$0xff]
    %v1024 = vld [vmem:[#allocation4 + $0xa0] sm:$0xff]
    %v1025 = vld [vmem:[#allocation4 + $0xa8] sm:$0xff]
    %v1026 = vld [vmem:[#allocation4 + $0xb0] sm:$0xff]
    %v1027 = vld [vmem:[#allocation4 + $0xb8] sm:$0xff]
    %v1028 = vld [vmem:[#allocation4 + $0xc0] sm:$0xff]
    %v1029 = vld [vmem:[#allocation4 + $0xc8] sm:$0xff]
    %v1030 = vld [vmem:[#allocation4 + $0xd0] sm:$0xff]
    %v1031 = vld [vmem:[#allocation4 + $0xd8] sm:$0xff]
    %v1032 = vld [vmem:[#allocation4 + $0xe0] sm:$0xff]
    %v1033 = vld [vmem:[#allocation4 + $0xe8] sm:$0xff]
    %v1034 = vld [vmem:[#allocation4 + $0xf0] sm:$0xff]
    %v1035 = vld [vmem:[#allocation4 + $0xf8] sm:$0xff]
    %v1036 = vld [vmem:[#allocation4 + $0x100] sm:$0xff]
    %v1037 = vld [vmem:[#allocation4 + $0x108] sm:$0xff]
    %v1038 = vld [vmem:[#allocation4 + $0x110] sm:$0xff]
    %v1039 = vld [vmem:[#allocation4 + $0x118] sm:$0xff]
    %v1040 = vld [vmem:[#allocation4 + $0x120] sm:$0xff]
    %v1041 = vld [vmem:[#allocation4 + $0x128] sm:$0xff]
    %v1042 = vld [vmem:[#allocation4 + $0x130] sm:$0xff]
    %v1043 = vld [vmem:[#allocation4 + $0x138] sm:$0xff]
    %v1044 = vld [vmem:[#allocation4 + $0x140] sm:$0xff]
    %v1045 = vld [vmem:[#allocation4 + $0x148] sm:$0xff]
    %v1046 = vld [vmem:[#allocation4 + $0x150] sm:$0xff]
    %v1047 = vld [vmem:[#allocation4 + $0x158] sm:$0xff]
    %v1048 = vld [vmem:[#allocation4 + $0x160] sm:$0xff]
    %v1049 = vld [vmem:[#allocation4 + $0x168] sm:$0xff]
    %v1050 = vld [vmem:[#allocation4 + $0x170] sm:$0xff]
    %v1051 = vld [vmem:[#allocation4 + $0x178] sm:$0xff]
    %v1052 = vld [vmem:[%s9] sm:$0x3]
    %v1054 = vlaneseq
    %v1055 = vshrl.u32 %v1054, 7
    %v1056 = vsub.s32 0, %v1055
    %v1057 = vrot.slane %v1052, %v1056
    %v1058 = vlaneseq
    %v1059 = vshrl.u32 %v1058, 7
    %v1060 = vsub.s32 1, %v1059
    %v1061 = vrot.slane %v1052, %v1060
    %v1112 = vunpack.c.l.b16 %v1004
    %v1113 = vunpack.c.h.b16 %v1004
    %v1114 = vunpack.c.l.b16 %v1005
    %v1115 = vunpack.c.h.b16 %v1005
    %v1116 = vunpack.c.l.b16 %v1006
    %v1117 = vunpack.c.h.b16 %v1006
    %v1118 = vunpack.c.l.b16 %v1007
    %v1119 = vunpack.c.h.b16 %v1007
    %v1120 = vunpack.c.l.b16 %v1008
    %v1121 = vunpack.c.h.b16 %v1008
    %v1122 = vunpack.c.l.b16 %v1009
    %v1123 = vunpack.c.h.b16 %v1009
    %v1124 = vunpack.c.l.b16 %v1010
    %v1125 = vunpack.c.h.b16 %v1010
    %v1126 = vunpack.c.l.b16 %v1011
    %v1127 = vunpack.c.h.b16 %v1011
    %v1128 = vunpack.c.l.b16 %v1012
    %v1129 = vunpack.c.h.b16 %v1012
    %v1130 = vunpack.c.l.b16 %v1013
    %v1131 = vunpack.c.h.b16 %v1013
    %v1132 = vunpack.c.l.b16 %v1014
    %v1133 = vunpack.c.h.b16 %v1014
    %v1134 = vunpack.c.l.b16 %v1015
    %v1135 = vunpack.c.h.b16 %v1015
    %v1136 = vunpack.c.l.b16 %v1016
    %v1137 = vunpack.c.h.b16 %v1016
    %v1138 = vunpack.c.l.b16 %v1017
    %v1139 = vunpack.c.h.b16 %v1017
    %v1140 = vunpack.c.l.b16 %v1018
    %v1141 = vunpack.c.h.b16 %v1018
    %v1142 = vunpack.c.l.b16 %v1019
    %v1143 = vunpack.c.h.b16 %v1019
    %v1144 = vunpack.c.l.b16 %v1020
    %v1145 = vunpack.c.h.b16 %v1020
    %v1146 = vunpack.c.l.b16 %v1021
    %v1147 = vunpack.c.h.b16 %v1021
    %v1148 = vunpack.c.l.b16 %v1022
    %v1149 = vunpack.c.h.b16 %v1022
    %v1150 = vunpack.c.l.b16 %v1023
    %v1151 = vunpack.c.h.b16 %v1023
    %v1152 = vunpack.c.l.b16 %v1024
    %v1153 = vunpack.c.h.b16 %v1024
    %v1154 = vunpack.c.l.b16 %v1025
    %v1155 = vunpack.c.h.b16 %v1025
    %v1156 = vunpack.c.l.b16 %v1026
    %v1157 = vunpack.c.h.b16 %v1026
    %v1158 = vunpack.c.l.b16 %v1027
    %v1159 = vunpack.c.h.b16 %v1027
    %v1160 = vunpack.c.l.b16 %v1028
    %v1161 = vunpack.c.h.b16 %v1028
    %v1162 = vunpack.c.l.b16 %v1029
    %v1163 = vunpack.c.h.b16 %v1029
    %v1164 = vunpack.c.l.b16 %v1030
    %v1165 = vunpack.c.h.b16 %v1030
    %v1166 = vunpack.c.l.b16 %v1031
    %v1167 = vunpack.c.h.b16 %v1031
    %v1168 = vunpack.c.l.b16 %v1032
    %v1169 = vunpack.c.h.b16 %v1032
    %v1170 = vunpack.c.l.b16 %v1033
    %v1171 = vunpack.c.h.b16 %v1033
    %v1172 = vunpack.c.l.b16 %v1034
    %v1173 = vunpack.c.h.b16 %v1034
    %v1174 = vunpack.c.l.b16 %v1035
    %v1175 = vunpack.c.h.b16 %v1035
    %v1176 = vunpack.c.l.b16 %v1036
    %v1177 = vunpack.c.h.b16 %v1036
    %v1178 = vunpack.c.l.b16 %v1037
    %v1179 = vunpack.c.h.b16 %v1037
    %v1180 = vunpack.c.l.b16 %v1038
    %v1181 = vunpack.c.h.b16 %v1038
    %v1182 = vunpack.c.l.b16 %v1039
    %v1183 = vunpack.c.h.b16 %v1039
    %v1184 = vunpack.c.l.b16 %v1040
    %v1185 = vunpack.c.h.b16 %v1040
    %v1186 = vunpack.c.l.b16 %v1041
    %v1187 = vunpack.c.h.b16 %v1041
    %v1188 = vunpack.c.l.b16 %v1042
    %v1189 = vunpack.c.h.b16 %v1042
    %v1190 = vunpack.c.l.b16 %v1043
    %v1191 = vunpack.c.h.b16 %v1043
    %v1192 = vunpack.c.l.b16 %v1044
    %v1193 = vunpack.c.h.b16 %v1044
    %v1194 = vunpack.c.l.b16 %v1045
    %v1195 = vunpack.c.h.b16 %v1045
    %v1196 = vunpack.c.l.b16 %v1046
    %v1197 = vunpack.c.h.b16 %v1046
    %v1198 = vunpack.c.l.b16 %v1047
    %v1199 = vunpack.c.h.b16 %v1047
    %v1200 = vunpack.c.l.b16 %v1048
    %v1201 = vunpack.c.h.b16 %v1048
    %v1202 = vunpack.c.l.b16 %v1049
    %v1203 = vunpack.c.h.b16 %v1049
    %v1204 = vunpack.c.l.b16 %v1050
    %v1205 = vunpack.c.h.b16 %v1050
    %v1206 = vunpack.c.l.b16 %v1051
    %v1207 = vunpack.c.h.b16 %v1051
    %v1208 = vpack.c.b16 %v1114, %v1112
    %v1209 = vpack.c.b16 %v1115, %v1113
    %v1210 = vpack.c.b16 %v1118, %v1116
    %v1211 = vpack.c.b16 %v1119, %v1117
    %v1212 = vpack.c.b16 %v1122, %v1120
    %v1213 = vpack.c.b16 %v1123, %v1121
    %v1214 = vpack.c.b16 %v1126, %v1124
    %v1215 = vpack.c.b16 %v1127, %v1125
    %v1216 = vpack.c.b16 %v1130, %v1128
    %v1217 = vpack.c.b16 %v1131, %v1129
    %v1218 = vpack.c.b16 %v1134, %v1132
    %v1219 = vpack.c.b16 %v1135, %v1133
    %v1220 = vpack.c.b16 %v1138, %v1136
    %v1221 = vpack.c.b16 %v1139, %v1137
    %v1222 = vpack.c.b16 %v1142, %v1140
    %v1223 = vpack.c.b16 %v1143, %v1141
    %v1224 = vpack.c.b16 %v1146, %v1144
    %v1225 = vpack.c.b16 %v1147, %v1145
    %v1226 = vpack.c.b16 %v1150, %v1148
    %v1227 = vpack.c.b16 %v1151, %v1149
    %v1228 = vpack.c.b16 %v1154, %v1152
    %v1229 = vpack.c.b16 %v1155, %v1153
    %v1230 = vpack.c.b16 %v1158, %v1156
    %v1231 = vpack.c.b16 %v1159, %v1157
    %v1232 = vpack.c.b16 %v1162, %v1160
    %v1233 = vpack.c.b16 %v1163, %v1161
    %v1234 = vpack.c.b16 %v1166, %v1164
    %v1235 = vpack.c.b16 %v1167, %v1165
    %v1236 = vpack.c.b16 %v1170, %v1168
    %v1237 = vpack.c.b16 %v1171, %v1169
    %v1238 = vpack.c.b16 %v1174, %v1172
    %v1239 = vpack.c.b16 %v1175, %v1173
    %v1240 = vpack.c.b16 %v1178, %v1176
    %v1241 = vpack.c.b16 %v1179, %v1177
    %v1242 = vpack.c.b16 %v1182, %v1180
    %v1243 = vpack.c.b16 %v1183, %v1181
    %v1244 = vpack.c.b16 %v1186, %v1184
    %v1245 = vpack.c.b16 %v1187, %v1185
    %v1246 = vpack.c.b16 %v1190, %v1188
    %v1247 = vpack.c.b16 %v1191, %v1189
    %v1248 = vpack.c.b16 %v1194, %v1192
    %v1249 = vpack.c.b16 %v1195, %v1193
    %v1250 = vpack.c.b16 %v1198, %v1196
    %v1251 = vpack.c.b16 %v1199, %v1197
    %v1252 = vpack.c.b16 %v1202, %v1200
    %v1253 = vpack.c.b16 %v1203, %v1201
    %v1254 = vpack.c.b16 %v1206, %v1204
    %v1255 = vpack.c.b16 %v1207, %v1205
    %1304 = vmatprep.subr.bf16.mxu0 %v1223
    %1305 = vmatpush1.bf16.msra.mxu0 %v1222
    %1306 = vmatprep.subr.bf16.mxu0 %v1221
    %1307 = vmatpush1.bf16.msra.mxu0 %v1220
    %1308 = vmatprep.subr.bf16.mxu0 %v1219
    %1309 = vmatpush1.bf16.msra.mxu0 %v1218
    %1310 = vmatprep.subr.bf16.mxu0 %v1217
    %1311 = vmatpush1.bf16.msra.mxu0 %v1216
    %1312 = vmatprep.subr.bf16.mxu0 %v1215
    %1313 = vmatpush1.bf16.msra.mxu0 %v1214
    %1314 = vmatprep.subr.bf16.mxu0 %v1213
    %1315 = vmatpush1.bf16.msra.mxu0 %v1212
    %1316 = vmatprep.subr.bf16.mxu0 %v1211
    %1317 = vmatpush1.bf16.msra.mxu0 %v1210
    %1318 = vmatprep.subr.bf16.mxu0 %v1209
    %1319 = vmatpush1.bf16.msra.mxu0 %v1208
    %1320 = vmatprep.subr.bf16.mxu0 %v1239
    %1321 = vmatpush2.bf16.msra.mxu0 %v1238
    %1322 = vmatprep.subr.bf16.mxu0 %v1237
    %1323 = vmatpush2.bf16.msra.mxu0 %v1236
    %1324 = vmatprep.subr.bf16.mxu0 %v1235
    %1325 = vmatpush2.bf16.msra.mxu0 %v1234
    %1326 = vmatprep.subr.bf16.mxu0 %v1233
    %1327 = vmatpush2.bf16.msra.mxu0 %v1232
    %1328 = vmatprep.subr.bf16.mxu0 %v1231
    %1329 = vmatpush2.bf16.msra.mxu0 %v1230
    %1330 = vmatprep.subr.bf16.mxu0 %v1229
    %1331 = vmatpush2.bf16.msra.mxu0 %v1228
    %1332 = vmatprep.subr.bf16.mxu0 %v1227
    %1333 = vmatpush2.bf16.msra.mxu0 %v1226
    %1334 = vmatprep.subr.bf16.mxu0 %v1225
    %1335 = vmatpush2.bf16.msra.mxu0 %v1224
    %1336 = vmatprep.mubr.bf16.mxu0 %v1002
    %1337 = vmatmul.mubr.bf16.gmra.mxu0 %v1001
    %v1338 = vpop.f32.mrf.mxu0
    %v1339 = vadd.f32 %v1057, %v1338
    %v1340 = vpop.f32.mrf.mxu0
    %v1341 = vadd.f32 %v1061, %v1340
    %v1342 = vpop.f32.mrf.mxu0
    %v1343 = vadd.f32 %v1057, %v1342
    %v1344 = vpop.f32.mrf.mxu0
    %v1345 = vadd.f32 %v1061, %v1344
    %1346 = vdwg.mxu0
    %1347 = vmatprep.subr.bf16.mxu0 %v1255
    %1348 = vmatpush1.bf16.msra.mxu0 %v1254
    %1349 = vmatprep.subr.bf16.mxu0 %v1253
    %1350 = vmatpush1.bf16.msra.mxu0 %v1252
    %1351 = vmatprep.subr.bf16.mxu0 %v1251
    %1352 = vmatpush1.bf16.msra.mxu0 %v1250
    %1353 = vmatprep.subr.bf16.mxu0 %v1249
    %1354 = vmatpush1.bf16.msra.mxu0 %v1248
    %1355 = vmatprep.subr.bf16.mxu0 %v1247
    %1356 = vmatpush1.bf16.msra.mxu0 %v1246
    %1357 = vmatprep.subr.bf16.mxu0 %v1245
    %1358 = vmatpush1.bf16.msra.mxu0 %v1244
    %1359 = vmatprep.subr.bf16.mxu0 %v1243
    %1360 = vmatpush1.bf16.msra.mxu0 %v1242
    %1361 = vmatprep.subr.bf16.mxu0 %v1241
    %1362 = vmatpush1.bf16.msra.mxu0 %v1240
    %1363 = vmatprep.subr.bf16.mxu0 0
    %1364 = vmatpush2.bf16.msra.mxu0 0
    %1365 = vmatprep.subr.bf16.mxu0 0
    %1366 = vmatpush2.bf16.msra.mxu0 0
    %1367 = vmatprep.subr.bf16.mxu0 0
    %1368 = vmatpush2.bf16.msra.mxu0 0
    %1369 = vmatprep.subr.bf16.mxu0 0
    %1370 = vmatpush2.bf16.msra.mxu0 0
    %1371 = vmatprep.subr.bf16.mxu0 0
    %1372 = vmatpush2.bf16.msra.mxu0 0
    %1373 = vmatprep.subr.bf16.mxu0 0
    %1374 = vmatpush2.bf16.msra.mxu0 0
    %1375 = vmatprep.subr.bf16.mxu0 0
    %1376 = vmatpush2.bf16.msra.mxu0 0
    %1377 = vmatprep.subr.bf16.mxu0 0
    %1378 = vmatpush2.bf16.msra.mxu0 0
    %1379 = vmatprep.mubr.bf16.mxu0 0
    %1380 = vmatmul.mubr.bf16.gmra.mxu0 %v1003
    %v1381 = vpop.f32.mrf.mxu0
    %v1382 = vadd.f32 %v1339, %v1381
    %v1383 = vpop.f32.mrf.mxu0
    %v1384 = vadd.f32 %v1341, %v1383
    %v1385 = vpop.f32.mrf.mxu0
    %v1386 = vadd.f32 %v1343, %v1385
    %v1387 = vpop.f32.mrf.mxu0
    %v1388 = vadd.f32 %v1345, %v1387
    %1389 = vdwg.mxu0
    %v1390 = vmax.f32 %v1382, 0.0
    %v1391 = vmax.f32 %v1384, 0.0
    %v1392 = vmax.f32 %v1386, 0.0
    %v1393 = vmax.f32 %v1388, 0.0
    %v1394 = vpack.c.bf16 %v1392, %v1390
    %v1395 = vpack.c.bf16 %v1393, %v1391
    %v1396 = vld [vmem:[#allocation6] sm:$0xf]
    %v1397 = vld [vmem:[#allocation6 + $0x4] sm:$0xf]
    %v1398 = vld [vmem:[#allocation6 + $0x8] sm:$0xf]
    %v1399 = vld [vmem:[#allocation6 + $0xc] sm:$0xf]
    %v1400 = vld [vmem:[#allocation6 + $0x10] sm:$0xf]
    %v1401 = vld [vmem:[#allocation6 + $0x14] sm:$0xf]
    %v1402 = vld [vmem:[#allocation6 + $0x18] sm:$0xf]
    %v1403 = vld [vmem:[#allocation6 + $0x1c] sm:$0xf]
    %v1404 = vld [vmem:[#allocation6 + $0x20] sm:$0xf]
    %v1405 = vld [vmem:[#allocation6 + $0x24] sm:$0xf]
    %v1406 = vld [vmem:[#allocation6 + $0x28] sm:$0xf]
    %v1407 = vld [vmem:[#allocation6 + $0x2c] sm:$0xf]
    %v1408 = vld [vmem:[#allocation6 + $0x30] sm:$0xf]
    %v1409 = vld [vmem:[#allocation6 + $0x34] sm:$0xf]
    %v1410 = vld [vmem:[#allocation6 + $0x38] sm:$0xf]
    %v1411 = vld [vmem:[#allocation6 + $0x3c] sm:$0xf]
    %v1412 = vld [vmem:[#allocation6 + $0x40] sm:$0xf]
    %v1413 = vld [vmem:[#allocation6 + $0x44] sm:$0xf]
    %v1414 = vld [vmem:[#allocation6 + $0x48] sm:$0xf]
    %v1415 = vld [vmem:[#allocation6 + $0x4c] sm:$0xf]
    %v1416 = vld [vmem:[#allocation6 + $0x50] sm:$0xf]
    %v1417 = vld [vmem:[#allocation6 + $0x54] sm:$0xf]
    %v1418 = vld [vmem:[#allocation6 + $0x58] sm:$0xf]
    %v1419 = vld [vmem:[#allocation6 + $0x5c] sm:$0xf]
    %v1420 = vld [vmem:[#allocation6 + $0x60] sm:$0xf]
    %v1421 = vld [vmem:[#allocation6 + $0x64] sm:$0xf]
    %v1422 = vld [vmem:[#allocation6 + $0x68] sm:$0xf]
    %v1423 = vld [vmem:[#allocation6 + $0x6c] sm:$0xf]
    %v1424 = vld [vmem:[#allocation6 + $0x70] sm:$0xf]
    %v1425 = vld [vmem:[#allocation6 + $0x74] sm:$0xf]
    %v1426 = vld [vmem:[#allocation6 + $0x78] sm:$0xf]
    %v1427 = vld [vmem:[#allocation6 + $0x7c] sm:$0xf]
    %v1428 = vld [vmem:[%s10] sm:$0x1]
    %v1430 = vlaneseq
    %v1431 = vshrl.u32 %v1430, 7
    %v1432 = vsub.s32 0, %v1431
    %v1433 = vrot.slane %v1428, %v1432
    %v1467 = vunpack.c.l.b16 %v1396
    %v1468 = vunpack.c.l.b16 %v1397
    %v1469 = vunpack.c.l.b16 %v1398
    %v1470 = vunpack.c.l.b16 %v1399
    %v1471 = vunpack.c.l.b16 %v1400
    %v1472 = vunpack.c.l.b16 %v1401
    %v1473 = vunpack.c.l.b16 %v1402
    %v1474 = vunpack.c.l.b16 %v1403
    %v1475 = vunpack.c.l.b16 %v1404
    %v1476 = vunpack.c.l.b16 %v1405
    %v1477 = vunpack.c.l.b16 %v1406
    %v1478 = vunpack.c.l.b16 %v1407
    %v1479 = vunpack.c.l.b16 %v1408
    %v1480 = vunpack.c.l.b16 %v1409
    %v1481 = vunpack.c.l.b16 %v1410
    %v1482 = vunpack.c.l.b16 %v1411
    %v1483 = vunpack.c.l.b16 %v1412
    %v1484 = vunpack.c.l.b16 %v1413
    %v1485 = vunpack.c.l.b16 %v1414
    %v1486 = vunpack.c.l.b16 %v1415
    %v1487 = vunpack.c.l.b16 %v1416
    %v1488 = vunpack.c.l.b16 %v1417
    %v1489 = vunpack.c.l.b16 %v1418
    %v1490 = vunpack.c.l.b16 %v1419
    %v1491 = vunpack.c.l.b16 %v1420
    %v1492 = vunpack.c.l.b16 %v1421
    %v1493 = vunpack.c.l.b16 %v1422
    %v1494 = vunpack.c.l.b16 %v1423
    %v1495 = vunpack.c.l.b16 %v1424
    %v1496 = vunpack.c.l.b16 %v1425
    %v1497 = vunpack.c.l.b16 %v1426
    %v1498 = vunpack.c.l.b16 %v1427
    %v1499 = vpack.c.b16 %v1468, %v1467
    %v1500 = vpack.c.b16 %v1470, %v1469
    %v1501 = vpack.c.b16 %v1472, %v1471
    %v1502 = vpack.c.b16 %v1474, %v1473
    %v1503 = vpack.c.b16 %v1476, %v1475
    %v1504 = vpack.c.b16 %v1478, %v1477
    %v1505 = vpack.c.b16 %v1480, %v1479
    %v1506 = vpack.c.b16 %v1482, %v1481
    %v1507 = vpack.c.b16 %v1484, %v1483
    %v1508 = vpack.c.b16 %v1486, %v1485
    %v1509 = vpack.c.b16 %v1488, %v1487
    %v1510 = vpack.c.b16 %v1490, %v1489
    %v1511 = vpack.c.b16 %v1492, %v1491
    %v1512 = vpack.c.b16 %v1494, %v1493
    %v1513 = vpack.c.b16 %v1496, %v1495
    %v1514 = vpack.c.b16 %v1498, %v1497
    %1531 = vmatprep.subr.bf16.mxu0 0
    %1532 = vmatpush1.bf16.msra.mxu0 %v1506
    %1533 = vmatprep.subr.bf16.mxu0 0
    %1534 = vmatpush1.bf16.msra.mxu0 %v1505
    %1535 = vmatprep.subr.bf16.mxu0 0
    %1536 = vmatpush1.bf16.msra.mxu0 %v1504
    %1537 = vmatprep.subr.bf16.mxu0 0
    %1538 = vmatpush1.bf16.msra.mxu0 %v1503
    %1539 = vmatprep.subr.bf16.mxu0 0
    %1540 = vmatpush1.bf16.msra.mxu0 %v1502
    %1541 = vmatprep.subr.bf16.mxu0 0
    %1542 = vmatpush1.bf16.msra.mxu0 %v1501
    %1543 = vmatprep.subr.bf16.mxu0 0
    %1544 = vmatpush1.bf16.msra.mxu0 %v1500
    %1545 = vmatprep.subr.bf16.mxu0 0
    %1546 = vmatpush1.bf16.msra.mxu0 %v1499
    %1547 = vmatprep.subr.bf16.mxu0 0
    %1548 = vmatpush2.bf16.msra.mxu0 %v1514
    %1549 = vmatprep.subr.bf16.mxu0 0
    %1550 = vmatpush2.bf16.msra.mxu0 %v1513
    %1551 = vmatprep.subr.bf16.mxu0 0
    %1552 = vmatpush2.bf16.msra.mxu0 %v1512
    %1553 = vmatprep.subr.bf16.mxu0 0
    %1554 = vmatpush2.bf16.msra.mxu0 %v1511
    %1555 = vmatprep.subr.bf16.mxu0 0
    %1556 = vmatpush2.bf16.msra.mxu0 %v1510
    %1557 = vmatprep.subr.bf16.mxu0 0
    %1558 = vmatpush2.bf16.msra.mxu0 %v1509
    %1559 = vmatprep.subr.bf16.mxu0 0
    %1560 = vmatpush2.bf16.msra.mxu0 %v1508
    %1561 = vmatprep.subr.bf16.mxu0 0
    %1562 = vmatpush2.bf16.msra.mxu0 %v1507
    %1563 = vmatprep.mubr.bf16.mxu0 %v1395
    %1564 = vmatmul.mubr.bf16.gmra.mxu0 %v1394
    %v1565 = vpop.f32.mrf.mxu0
    %v1566 = vadd.f32 %v1433, %v1565
    %v1567 = vpop.f32.mrf.mxu0
    %v1568 = vpop.f32.mrf.mxu0
    %v1569 = vadd.f32 %v1433, %v1568
    %v1570 = vpop.f32.mrf.mxu0
    %1571 = vdwg.mxu0
    %v1572 = vmax.f32 %v1566, 0.0
    %v1573 = vmax.f32 %v1569, 0.0
    %v1574 = vpack.c.bf16 %v1573, %v1572
    %v1575 = vld [vmem:[#allocation7] sm:$0xf]
    %v1576 = vld [vmem:[#allocation7 + $0x4] sm:$0xf]
    %v1577 = vld [vmem:[#allocation7 + $0x8] sm:$0xf]
    %v1578 = vld [vmem:[#allocation7 + $0xc] sm:$0xf]
    %v1579 = vld [vmem:[#allocation7 + $0x10] sm:$0xf]
    %v1580 = vld [vmem:[#allocation7 + $0x14] sm:$0xf]
    %v1581 = vld [vmem:[#allocation7 + $0x18] sm:$0xf]
    %v1582 = vld [vmem:[#allocation7 + $0x1c] sm:$0xf]
    %v1583 = vld [vmem:[#allocation7 + $0x20] sm:$0xf]
    %v1584 = vld [vmem:[#allocation7 + $0x24] sm:$0xf]
    %v1585 = vld [vmem:[#allocation7 + $0x28] sm:$0xf]
    %v1586 = vld [vmem:[#allocation7 + $0x2c] sm:$0xf]
    %v1587 = vld [vmem:[#allocation7 + $0x30] sm:$0xf]
    %v1588 = vld [vmem:[#allocation7 + $0x34] sm:$0xf]
    %v1589 = vld [vmem:[#allocation7 + $0x38] sm:$0xf]
    %v1590 = vld [vmem:[#allocation7 + $0x3c] sm:$0xf]
    %v1591 = vld [vmem:[%s11] sm:$0x1]
    %v1593 = vlaneseq
    %v1594 = vshrl.u32 %v1593, 7
    %v1595 = vsub.s32 0, %v1594
    %v1596 = vrot.slane %v1591, %v1595
    %v1614 = vunpack.c.l.b16 %v1575
    %v1615 = vunpack.c.l.b16 %v1576
    %v1616 = vunpack.c.l.b16 %v1577
    %v1617 = vunpack.c.l.b16 %v1578
    %v1618 = vunpack.c.l.b16 %v1579
    %v1619 = vunpack.c.l.b16 %v1580
    %v1620 = vunpack.c.l.b16 %v1581
    %v1621 = vunpack.c.l.b16 %v1582
    %v1622 = vunpack.c.l.b16 %v1583
    %v1623 = vunpack.c.l.b16 %v1584
    %v1624 = vunpack.c.l.b16 %v1585
    %v1625 = vunpack.c.l.b16 %v1586
    %v1626 = vunpack.c.l.b16 %v1587
    %v1627 = vunpack.c.l.b16 %v1588
    %v1628 = vunpack.c.l.b16 %v1589
    %v1629 = vunpack.c.l.b16 %v1590
    %v1630 = vpack.c.b16 %v1615, %v1614
    %v1631 = vpack.c.b16 %v1617, %v1616
    %v1632 = vpack.c.b16 %v1619, %v1618
    %v1633 = vpack.c.b16 %v1621, %v1620
    %v1634 = vpack.c.b16 %v1623, %v1622
    %v1635 = vpack.c.b16 %v1625, %v1624
    %v1636 = vpack.c.b16 %v1627, %v1626
    %v1637 = vpack.c.b16 %v1629, %v1628
    %1646 = vmatprep.subr.bf16.mxu0 0
    %1647 = vmatpush1.bf16.msra.mxu0 %v1637
    %1648 = vmatprep.subr.bf16.mxu0 0
    %1649 = vmatpush1.bf16.msra.mxu0 %v1636
    %1650 = vmatprep.subr.bf16.mxu0 0
    %1651 = vmatpush1.bf16.msra.mxu0 %v1635
    %1652 = vmatprep.subr.bf16.mxu0 0
    %1653 = vmatpush1.bf16.msra.mxu0 %v1634
    %1654 = vmatprep.subr.bf16.mxu0 0
    %1655 = vmatpush1.bf16.msra.mxu0 %v1633
    %1656 = vmatprep.subr.bf16.mxu0 0
    %1657 = vmatpush1.bf16.msra.mxu0 %v1632
    %1658 = vmatprep.subr.bf16.mxu0 0
    %1659 = vmatpush1.bf16.msra.mxu0 %v1631
    %1660 = vmatprep.subr.bf16.mxu0 0
    %1661 = vmatpush1.bf16.msra.mxu0 %v1630
    %1662 = vmatprep.subr.bf16.mxu0 0
    %1663 = vmatpush2.bf16.msra.mxu0 0
    %1664 = vmatprep.subr.bf16.mxu0 0
    %1665 = vmatpush2.bf16.msra.mxu0 0
    %1666 = vmatprep.subr.bf16.mxu0 0
    %1667 = vmatpush2.bf16.msra.mxu0 0
    %1668 = vmatprep.subr.bf16.mxu0 0
    %1669 = vmatpush2.bf16.msra.mxu0 0
    %1670 = vmatprep.subr.bf16.mxu0 0
    %1671 = vmatpush2.bf16.msra.mxu0 0
    %1672 = vmatprep.subr.bf16.mxu0 0
    %1673 = vmatpush2.bf16.msra.mxu0 0
    %1674 = vmatprep.subr.bf16.mxu0 0
    %1675 = vmatpush2.bf16.msra.mxu0 0
    %1676 = vmatprep.subr.bf16.mxu0 0
    %1677 = vmatpush2.bf16.msra.mxu0 0
    %1678 = vmatprep.mubr.bf16.mxu0 0
    %1679 = vmatmul.mubr.bf16.gmra.mxu0 %v1574
    %v1680 = vpop.f32.mrf.mxu0
    %v1681 = vadd.f32 %v1596, %v1680
    %v1682 = vpop.f32.mrf.mxu0
    %v1683 = vpop.f32.mrf.mxu0
    %v1684 = vadd.f32 %v1596, %v1683
    %v1685 = vpop.f32.mrf.mxu0
    %1686 = vdwg.mxu0
    %v1687 = vmax.f32 %v1681, 0.0
    %v1688 = vmax.f32 %v1684, 0.0
    %v1689 = vmin.f32 %v1687, 6.0
    %v1690 = vmin.f32 %v1688, 6.0
    %v1691 = vpack.c.bf16 %v1690, %v1689
    %v1692 = vld [vmem:[#allocation9] sm:$0xf]
    %v1693 = vld [vmem:[#allocation9 + $0x4] sm:$0xf]
    %v1694 = vld [vmem:[#allocation9 + $0x8] sm:$0xf]
    %v1695 = vld [vmem:[#allocation9 + $0xc] sm:$0xf]
    %v1696 = vld [vmem:[#allocation9 + $0x10] sm:$0xf]
    %v1697 = vld [vmem:[#allocation9 + $0x14] sm:$0xf]
    %v1698 = vld [vmem:[#allocation9 + $0x18] sm:$0xf]
    %v1699 = vld [vmem:[#allocation9 + $0x1c] sm:$0xf]
    %v1700 = vld [vmem:[#allocation9 + $0x20] sm:$0xf]
    %v1701 = vld [vmem:[#allocation9 + $0x24] sm:$0xf]
    %v1702 = vld [vmem:[#allocation9 + $0x28] sm:$0xf]
    %v1703 = vld [vmem:[#allocation9 + $0x2c] sm:$0xf]
    %v1704 = vld [vmem:[#allocation9 + $0x30] sm:$0xf]
    %v1705 = vld [vmem:[#allocation9 + $0x34] sm:$0xf]
    %v1706 = vld [vmem:[#allocation9 + $0x38] sm:$0xf]
    %v1707 = vld [vmem:[#allocation9 + $0x3c] sm:$0xf]
    %v1708 = vld [vmem:[%s12] sm:$0x1]
    %v1710 = vlaneseq
    %v1711 = vshrl.u32 %v1710, 7
    %v1712 = vsub.s32 0, %v1711
    %v1713 = vrot.slane %v1708, %v1712
    %v1731 = vunpack.c.l.b16 %v1692
    %v1732 = vunpack.c.l.b16 %v1693
    %v1733 = vunpack.c.l.b16 %v1694
    %v1734 = vunpack.c.l.b16 %v1695
    %v1735 = vunpack.c.l.b16 %v1696
    %v1736 = vunpack.c.l.b16 %v1697
    %v1737 = vunpack.c.l.b16 %v1698
    %v1738 = vunpack.c.l.b16 %v1699
    %v1739 = vunpack.c.l.b16 %v1700
    %v1740 = vunpack.c.l.b16 %v1701
    %v1741 = vunpack.c.l.b16 %v1702
    %v1742 = vunpack.c.l.b16 %v1703
    %v1743 = vunpack.c.l.b16 %v1704
    %v1744 = vunpack.c.l.b16 %v1705
    %v1745 = vunpack.c.l.b16 %v1706
    %v1746 = vunpack.c.l.b16 %v1707
    %v1747 = vpack.c.b16 %v1732, %v1731
    %v1748 = vpack.c.b16 %v1734, %v1733
    %v1749 = vpack.c.b16 %v1736, %v1735
    %v1750 = vpack.c.b16 %v1738, %v1737
    %v1751 = vpack.c.b16 %v1740, %v1739
    %v1752 = vpack.c.b16 %v1742, %v1741
    %v1753 = vpack.c.b16 %v1744, %v1743
    %v1754 = vpack.c.b16 %v1746, %v1745
    %1763 = vmatprep.subr.bf16.mxu0 0
    %1764 = vmatpush1.bf16.msra.mxu0 %v1754
    %1765 = vmatprep.subr.bf16.mxu0 0
    %1766 = vmatpush1.bf16.msra.mxu0 %v1753
    %1767 = vmatprep.subr.bf16.mxu0 0
    %1768 = vmatpush1.bf16.msra.mxu0 %v1752
    %1769 = vmatprep.subr.bf16.mxu0 0
    %1770 = vmatpush1.bf16.msra.mxu0 %v1751
    %1771 = vmatprep.subr.bf16.mxu0 0
    %1772 = vmatpush1.bf16.msra.mxu0 %v1750
    %1773 = vmatprep.subr.bf16.mxu0 0
    %1774 = vmatpush1.bf16.msra.mxu0 %v1749
    %1775 = vmatprep.subr.bf16.mxu0 0
    %1776 = vmatpush1.bf16.msra.mxu0 %v1748
    %1777 = vmatprep.subr.bf16.mxu0 0
    %1778 = vmatpush1.bf16.msra.mxu0 %v1747
    %1779 = vmatprep.subr.bf16.mxu0 0
    %1780 = vmatpush2.bf16.msra.mxu0 0
    %1781 = vmatprep.subr.bf16.mxu0 0
    %1782 = vmatpush2.bf16.msra.mxu0 0
    %1783 = vmatprep.subr.bf16.mxu0 0
    %1784 = vmatpush2.bf16.msra.mxu0 0
    %1785 = vmatprep.subr.bf16.mxu0 0
    %1786 = vmatpush2.bf16.msra.mxu0 0
    %1787 = vmatprep.subr.bf16.mxu0 0
    %1788 = vmatpush2.bf16.msra.mxu0 0
    %1789 = vmatprep.subr.bf16.mxu0 0
    %1790 = vmatpush2.bf16.msra.mxu0 0
    %1791 = vmatprep.subr.bf16.mxu0 0
    %1792 = vmatpush2.bf16.msra.mxu0 0
    %1793 = vmatprep.subr.bf16.mxu0 0
    %1794 = vmatpush2.bf16.msra.mxu0 0
    %1795 = vmatprep.mubr.bf16.mxu0 0
    %1796 = vmatmul.mubr.bf16.gmra.mxu0 %v1691
    %v1797 = vpop.f32.mrf.mxu0
    %v1798 = vadd.f32 %v1713, %v1797
    %v1799 = vpop.f32.mrf.mxu0
    %v1800 = vpop.f32.mrf.mxu0
    %v1801 = vadd.f32 %v1713, %v1800
    %v1802 = vpop.f32.mrf.mxu0
    %1803 = vdwg.mxu0
    %v1804 = vmax.f32 %v1798, 0.0
    %v1805 = vmax.f32 %v1801, 0.0
    %v1806 = vmin.f32 %v1804, 6.0
    %v1807 = vmin.f32 %v1805, 6.0
    %v1808 = vpack.c.bf16 %v1807, %v1806
    %v1809 = vld [vmem:[#allocation10] sm:$0xf]
    %v1810 = vld [vmem:[#allocation10 + $0x4] sm:$0xf]
    %v1811 = vld [vmem:[#allocation10 + $0x8] sm:$0xf]
    %v1812 = vld [vmem:[#allocation10 + $0xc] sm:$0xf]
    %v1813 = vld [vmem:[#allocation10 + $0x10] sm:$0xf]
    %v1814 = vld [vmem:[#allocation10 + $0x14] sm:$0xf]
    %v1815 = vld [vmem:[#allocation10 + $0x18] sm:$0xf]
    %v1816 = vld [vmem:[#allocation10 + $0x1c] sm:$0xf]
    %v1817 = vld [vmem:[#allocation10 + $0x20] sm:$0xf]
    %v1818 = vld [vmem:[#allocation10 + $0x24] sm:$0xf]
    %v1819 = vld [vmem:[#allocation10 + $0x28] sm:$0xf]
    %v1820 = vld [vmem:[#allocation10 + $0x2c] sm:$0xf]
    %v1821 = vld [vmem:[#allocation10 + $0x30] sm:$0xf]
    %v1822 = vld [vmem:[#allocation10 + $0x34] sm:$0xf]
    %v1823 = vld [vmem:[#allocation10 + $0x38] sm:$0xf]
    %v1824 = vld [vmem:[#allocation10 + $0x3c] sm:$0xf]
    %v1825 = vld [vmem:[%s13] sm:$0x1]
    %v1827 = vlaneseq
    %v1828 = vshrl.u32 %v1827, 7
    %v1829 = vsub.s32 0, %v1828
    %v1830 = vrot.slane %v1825, %v1829
    %v1848 = vunpack.c.l.b16 %v1809
    %v1849 = vunpack.c.l.b16 %v1810
    %v1850 = vunpack.c.l.b16 %v1811
    %v1851 = vunpack.c.l.b16 %v1812
    %v1852 = vunpack.c.l.b16 %v1813
    %v1853 = vunpack.c.l.b16 %v1814
    %v1854 = vunpack.c.l.b16 %v1815
    %v1855 = vunpack.c.l.b16 %v1816
    %v1856 = vunpack.c.l.b16 %v1817
    %v1857 = vunpack.c.l.b16 %v1818
    %v1858 = vunpack.c.l.b16 %v1819
    %v1859 = vunpack.c.l.b16 %v1820
    %v1860 = vunpack.c.l.b16 %v1821
    %v1861 = vunpack.c.l.b16 %v1822
    %v1862 = vunpack.c.l.b16 %v1823
    %v1863 = vunpack.c.l.b16 %v1824
    %v1864 = vpack.c.b16 %v1849, %v1848
    %v1865 = vpack.c.b16 %v1851, %v1850
    %v1866 = vpack.c.b16 %v1853, %v1852
    %v1867 = vpack.c.b16 %v1855, %v1854
    %v1868 = vpack.c.b16 %v1857, %v1856
    %v1869 = vpack.c.b16 %v1859, %v1858
    %v1870 = vpack.c.b16 %v1861, %v1860
    %v1871 = vpack.c.b16 %v1863, %v1862
    %1880 = vmatprep.subr.bf16.mxu0 0
    %1881 = vmatpush1.bf16.msra.mxu0 %v1871
    %1882 = vmatprep.subr.bf16.mxu0 0
    %1883 = vmatpush1.bf16.msra.mxu0 %v1870
    %1884 = vmatprep.subr.bf16.mxu0 0
    %1885 = vmatpush1.bf16.msra.mxu0 %v1869
    %1886 = vmatprep.subr.bf16.mxu0 0
    %1887 = vmatpush1.bf16.msra.mxu0 %v1868
    %1888 = vmatprep.subr.bf16.mxu0 0
    %1889 = vmatpush1.bf16.msra.mxu0 %v1867
    %1890 = vmatprep.subr.bf16.mxu0 0
    %1891 = vmatpush1.bf16.msra.mxu0 %v1866
    %1892 = vmatprep.subr.bf16.mxu0 0
    %1893 = vmatpush1.bf16.msra.mxu0 %v1865
    %1894 = vmatprep.subr.bf16.mxu0 0
    %1895 = vmatpush1.bf16.msra.mxu0 %v1864
    %1896 = vmatprep.subr.bf16.mxu0 0
    %1897 = vmatpush2.bf16.msra.mxu0 0
    %1898 = vmatprep.subr.bf16.mxu0 0
    %1899 = vmatpush2.bf16.msra.mxu0 0
    %1900 = vmatprep.subr.bf16.mxu0 0
    %1901 = vmatpush2.bf16.msra.mxu0 0
    %1902 = vmatprep.subr.bf16.mxu0 0
    %1903 = vmatpush2.bf16.msra.mxu0 0
    %1904 = vmatprep.subr.bf16.mxu0 0
    %1905 = vmatpush2.bf16.msra.mxu0 0
    %1906 = vmatprep.subr.bf16.mxu0 0
    %1907 = vmatpush2.bf16.msra.mxu0 0
    %1908 = vmatprep.subr.bf16.mxu0 0
    %1909 = vmatpush2.bf16.msra.mxu0 0
    %1910 = vmatprep.subr.bf16.mxu0 0
    %1911 = vmatpush2.bf16.msra.mxu0 0
    %1912 = vmatprep.mubr.bf16.mxu0 0
    %1913 = vmatmul.mubr.bf16.gmra.mxu0 %v1808
    %v1914 = vpop.f32.mrf.mxu0
    %v1915 = vadd.f32 %v1830, %v1914
    %v1916 = vpop.f32.mrf.mxu0
    %v1917 = vpop.f32.mrf.mxu0
    %v1918 = vadd.f32 %v1830, %v1917
    %v1919 = vpop.f32.mrf.mxu0
    %1920 = vdwg.mxu0
    %v1921 = vmax.f32 %v1915, 0.0
    %v1922 = vmax.f32 %v1918, 0.0
    %v1923 = vmin.f32 %v1921, 6.0
    %v1924 = vmin.f32 %v1922, 6.0
    %v1925 = vpack.c.bf16 %v1924, %v1923
    %v1926 = vld [vmem:[#allocation12] sm:$0xf]
    %v1927 = vld [vmem:[#allocation12 + $0x4] sm:$0xf]
    %v1928 = vld [vmem:[#allocation12 + $0x8] sm:$0xf]
    %v1929 = vld [vmem:[#allocation12 + $0xc] sm:$0xf]
    %v1930 = vld [vmem:[#allocation12 + $0x10] sm:$0xf]
    %v1931 = vld [vmem:[#allocation12 + $0x14] sm:$0xf]
    %v1932 = vld [vmem:[#allocation12 + $0x18] sm:$0xf]
    %v1933 = vld [vmem:[#allocation12 + $0x1c] sm:$0xf]
    %v1934 = vld [vmem:[#allocation12 + $0x20] sm:$0xf]
    %v1935 = vld [vmem:[#allocation12 + $0x24] sm:$0xf]
    %v1936 = vld [vmem:[#allocation12 + $0x28] sm:$0xf]
    %v1937 = vld [vmem:[#allocation12 + $0x2c] sm:$0xf]
    %v1938 = vld [vmem:[#allocation12 + $0x30] sm:$0xf]
    %v1939 = vld [vmem:[#allocation12 + $0x34] sm:$0xf]
    %v1940 = vld [vmem:[#allocation12 + $0x38] sm:$0xf]
    %v1941 = vld [vmem:[#allocation12 + $0x3c] sm:$0xf]
    %v1942 = vld [vmem:[%s14] sm:$0x1]
    %v1944 = vlaneseq
    %v1945 = vshrl.u32 %v1944, 7
    %v1946 = vsub.s32 0, %v1945
    %v1947 = vrot.slane %v1942, %v1946
    %v1965 = vunpack.c.l.b16 %v1926
    %v1966 = vunpack.c.l.b16 %v1927
    %v1967 = vunpack.c.l.b16 %v1928
    %v1968 = vunpack.c.l.b16 %v1929
    %v1969 = vunpack.c.l.b16 %v1930
    %v1970 = vunpack.c.l.b16 %v1931
    %v1971 = vunpack.c.l.b16 %v1932
    %v1972 = vunpack.c.l.b16 %v1933
    %v1973 = vunpack.c.l.b16 %v1934
    %v1974 = vunpack.c.l.b16 %v1935
    %v1975 = vunpack.c.l.b16 %v1936
    %v1976 = vunpack.c.l.b16 %v1937
    %v1977 = vunpack.c.l.b16 %v1938
    %v1978 = vunpack.c.l.b16 %v1939
    %v1979 = vunpack.c.l.b16 %v1940
    %v1980 = vunpack.c.l.b16 %v1941
    %v1981 = vpack.c.b16 %v1966, %v1965
    %v1982 = vpack.c.b16 %v1968, %v1967
    %v1983 = vpack.c.b16 %v1970, %v1969
    %v1984 = vpack.c.b16 %v1972, %v1971
    %v1985 = vpack.c.b16 %v1974, %v1973
    %v1986 = vpack.c.b16 %v1976, %v1975
    %v1987 = vpack.c.b16 %v1978, %v1977
    %v1988 = vpack.c.b16 %v1980, %v1979
    %1997 = vmatprep.subr.bf16.mxu0 0
    %1998 = vmatpush1.bf16.msra.mxu0 %v1988
    %1999 = vmatprep.subr.bf16.mxu0 0
    %2000 = vmatpush1.bf16.msra.mxu0 %v1987
    %2001 = vmatprep.subr.bf16.mxu0 0
    %2002 = vmatpush1.bf16.msra.mxu0 %v1986
    %2003 = vmatprep.subr.bf16.mxu0 0
    %2004 = vmatpush1.bf16.msra.mxu0 %v1985
    %2005 = vmatprep.subr.bf16.mxu0 0
    %2006 = vmatpush1.bf16.msra.mxu0 %v1984
    %2007 = vmatprep.subr.bf16.mxu0 0
    %2008 = vmatpush1.bf16.msra.mxu0 %v1983
    %2009 = vmatprep.subr.bf16.mxu0 0
    %2010 = vmatpush1.bf16.msra.mxu0 %v1982
    %2011 = vmatprep.subr.bf16.mxu0 0
    %2012 = vmatpush1.bf16.msra.mxu0 %v1981
    %2013 = vmatprep.subr.bf16.mxu0 0
    %2014 = vmatpush2.bf16.msra.mxu0 0
    %2015 = vmatprep.subr.bf16.mxu0 0
    %2016 = vmatpush2.bf16.msra.mxu0 0
    %2017 = vmatprep.subr.bf16.mxu0 0
    %2018 = vmatpush2.bf16.msra.mxu0 0
    %2019 = vmatprep.subr.bf16.mxu0 0
    %2020 = vmatpush2.bf16.msra.mxu0 0
    %2021 = vmatprep.subr.bf16.mxu0 0
    %2022 = vmatpush2.bf16.msra.mxu0 0
    %2023 = vmatprep.subr.bf16.mxu0 0
    %2024 = vmatpush2.bf16.msra.mxu0 0
    %2025 = vmatprep.subr.bf16.mxu0 0
    %2026 = vmatpush2.bf16.msra.mxu0 0
    %2027 = vmatprep.subr.bf16.mxu0 0
    %2028 = vmatpush2.bf16.msra.mxu0 0
    %2029 = vmatprep.mubr.bf16.mxu0 0
    %2030 = vmatmul.mubr.bf16.gmra.mxu0 %v1925
    %v2031 = vpop.f32.mrf.mxu0
    %v2032 = vadd.f32 %v1947, %v2031
    %v2033 = vpop.f32.mrf.mxu0
    %v2034 = vpop.f32.mrf.mxu0
    %v2035 = vadd.f32 %v1947, %v2034
    %v2036 = vpop.f32.mrf.mxu0
    %2037 = vdwg.mxu0
    %2038 = vxpose.xlu0.b32.start [1/16] %v2032, 128
    %2039 = vxpose.xlu0.b32.cont [2/16] %v2035, 128
    %2040 = vxpose.xlu0.b32.cont [3/16] 0.0, 128
    %2041 = vxpose.xlu0.b32.cont [4/16] 0.0, 128
    %2042 = vxpose.xlu0.b32.cont [5/16] 0.0, 128
    %2043 = vxpose.xlu0.b32.cont [6/16] 0.0, 128
    %2044 = vxpose.xlu0.b32.cont [7/16] 0.0, 128
    %2045 = vxpose.xlu0.b32.cont [8/16] 0.0, 128
    %2046 = vxpose.xlu0.b32.cont [9/16] 0.0, 128
    %2047 = vxpose.xlu0.b32.cont [10/16] 0.0, 128
    %2048 = vxpose.xlu0.b32.cont [11/16] 0.0, 128
    %2049 = vxpose.xlu0.b32.cont [12/16] 0.0, 128
    %2050 = vxpose.xlu0.b32.cont [13/16] 0.0, 128
    %2051 = vxpose.xlu0.b32.cont [14/16] 0.0, 128
    %2052 = vxpose.xlu0.b32.cont [15/16] 0.0, 128
    %2053 = vxpose.xlu0.b32.end [16/16] 0.0, 128
    %v2054 = vpop.trf.xlu0
    %v2055 = vpop.trf.xlu0
    %v2056 = vpop.trf.xlu0
    %v2057 = vpop.trf.xlu0
    %v2058 = vpop.trf.xlu0
    %v2059 = vpop.trf.xlu0
    %v2060 = vpop.trf.xlu0
    %v2061 = vpop.trf.xlu0
    %v2062 = vpop.trf.xlu0
    %v2063 = vpop.trf.xlu0
    %v2064 = vpop.trf.xlu0
    %v2065 = vpop.trf.xlu0
    %v2066 = vpop.trf.xlu0
    %v2067 = vpop.trf.xlu0
    %v2068 = vpop.trf.xlu0
    %v2069 = vpop.trf.xlu0
    %v2070 = vxor.u32 %v2054, 2147483648
    %v2071 = vmul.f32 %v2070, 1.442695
    %v2072 = vpow.pop %v2071
    %v2073 = vadd.f32 %v2072, 1.0
    %v2074 = vrcp.pop %v2073
    %v2075 = vmul.f32 1.0, %v2074
    %vm2076 = vcmask 122880
    %2077 = vst.msk [vmem:[%s15] sm:$0x1] %vm2076, %v2075
    // Predicated region
    $region90: #{pd_forward.1} parent=1 // pred_check
      _
    $region91: #{pd_forward.1} parent=1 // pred_check_branch
      %2079 = sbr.rel (0) target = $region93
    $region92: #{pd_forward.1} parent=1 // pred_region
      _
    $region93: #{pd_forward.1} parent=1 // pred_fallthru
      _
    // Predicated region
    $region94: #{pd_forward.1} parent=1 // pred_check
      _
    $region95: #{pd_forward.1} parent=1 // pred_check_branch
      %2081 = sbr.rel (0) target = $region97
    $region96: #{pd_forward.1} parent=1 // pred_region
      _
    $region97: #{pd_forward.1} parent=1 // pred_fallthru
      _
    %2082 = vsyncpa [#allocation3], 1
    %2083 = vsyncpa [#allocation5], 1
    %2084 = vsyncpa [#allocation8], 1
    %2085 = vsyncpa [#allocation11], 1

// kernel: pd_forward.1
$region0: #{pd_forward.1}
  #allocation0 [shape = 'u32[]', space=smem, size = 0x4, offset = 0x4, fixed_abs, tag = 'smem constant byte address 0x4 - core index']
  #allocation1 [shape = 'u32[144,128]{1,0:T(1,128)}', space=vmem, size = 0x12000, scoped, tag = 'internal scratch']
  %s0 = inlined_call_operand.vmem [shape: bf16[16,512], index: 0, kind: input, shape index: {}]
  %s1 = inlined_call_operand.hbm [shape: bf16[512,384], index: 1, kind: input, shape index: {}]
  %s2 = inlined_call_operand.hbm [shape: bf16[384,256], index: 2, kind: input, shape index: {}]
  %s3 = inlined_call_operand.hbm [shape: bf16[256,128], index: 3, kind: input, shape index: {}]
  %s4 = inlined_call_operand.hbm [shape: bf16[128,128], index: 4, kind: input, shape index: {}]
  %s5 = inlined_call_operand.hbm [shape: bf16[128,128], index: 5, kind: input, shape index: {}]
  %s6 = inlined_call_operand.hbm [shape: bf16[128,128], index: 6, kind: input, shape index: {}]
  %s7 = inlined_call_operand.hbm [shape: bf16[128,128], index: 7, kind: input, shape index: {}]
  %s8 = inlined_call_operand.vmem [shape: f32[1,384], index: 8, kind: input, shape index: {}]
  %s9 = inlined_call_operand.vmem [shape: f32[1,256], index: 9, kind: input, shape index: {}]
  %s10 = inlined_call_operand.vmem [shape: f32[1,128], index: 10, kind: input, shape index: {}]
  %s11 = inlined_call_operand.vmem [shape: f32[1,128], index: 11, kind: input, shape index: {}]
  %s12 = inlined_call_operand.vmem [shape: f32[1,128], index: 12, kind: input, shape index: {}]
  %s13 = inlined_call_operand.vmem [shape: f32[1,128], index: 13, kind: input, shape index: {}]
  %s14 = inlined_call_operand.vmem [shape: f32[1,128], index: 14, kind: input, shape index: {}]
  %s15 = inlined_call_operand.vmem [shape: f32[1,1,16], index: 15, kind: output, shape index: {}]
  %s16 = sld [smem:[#allocation0]]
  $region98: #{pd_forward.1} parent=0
    _
  %s18 = ssub.s32 1, %s16
  %s19 = scalar_select 0, %s18, %s16
  $region1: #{pd_forward.1} parent=0
    #allocation2 [shape = 'u8[393216]{0}', space=vmem, size = 0x60000, scoped, tag = 'input window, operand 1, single buffered']
    #allocation3 [shape = 's32[1]{0}', space=sflag, size = 0x4, scoped, tag = 'scoped memory for pd_forward.1']
    #allocation4 [shape = 'u8[196608]{0}', space=vmem, size = 0x30000, scoped, tag = 'input window, operand 2, single buffered']
    #allocation5 [shape = 's32[1]{0}', space=sflag, size = 0x4, scoped, tag = 'scoped memory for pd_forward.1']
    #allocation6 [shape = 'u8[65536]{0}', space=vmem, size = 0x10000, scoped, tag = 'input window, operand 3, single buffered']
    #allocation7 [shape = 'u8[32768]{0}', space=vmem, size = 0x8000, scoped, tag = 'input window, operand 4, single buffered']
    #allocation8 [shape = 's32[1]{0}', space=sflag, size = 0x4, scoped, tag = 'scoped memory for pd_forward.1']
    #allocation9 [shape = 'u8[32768]{0}', space=vmem, size = 0x8000, scoped, tag = 'input window, operand 5, single buffered']
    #allocation10 [shape = 'u8[32768]{0}', space=vmem, size = 0x8000, scoped, tag = 'input window, operand 6, single buffered']
    #allocation11 [shape = 's32[1]{0}', space=sflag, size = 0x4, scoped, tag = 'scoped memory for pd_forward.1']
    #allocation12 [shape = 'u8[32768]{0}', space=vmem, size = 0x8000, scoped, tag = 'input window, operand 7, single buffered']
    %20 = vsyncpa [#allocation3], 0
    %21 = vsyncpa [#allocation5], 0
    %22 = vsyncpa [#allocation8], 0
    %23 = vsyncpa [#allocation11], 0
    // Predicated region
    $region2: #{pd_forward.1} parent=1 // pred_check
      _
    $region3: #{pd_forward.1} parent=1 // pred_check_branch
      %25 = sbr.rel (0) target = $region5
    $region4: #{pd_forward.1} parent=1 // pred_region
      _
    $region5: #{pd_forward.1} parent=1 // pred_fallthru
      _
    // Predicated region
    $region6: #{pd_forward.1} parent=1 // pred_check
      _
    $region7: #{pd_forward.1} parent=1 // pred_check_branch
      %27 = sbr.rel (0) target = $region9
    $region8: #{pd_forward.1} parent=1 // pred_region
      %s29 = ssub.s32 12288, 12288
      %30 = vsyncadd [#allocation3], %s29
      %s31 = sshll.u32 [#allocation2], 4
      %s32 = int_to_ptr.vmem [resolvable:$true] %s31
      %37 = dma.hbm_to_vmem [thread:$0]  %s1, 12288, %s32, [#allocation3], 192, 192, 12
    $region9: #{pd_forward.1} parent=1 // pred_fallthru
      _
    // Predicated region
    $region10: #{pd_forward.1} parent=1 // pred_check
      _
    $region11: #{pd_forward.1} parent=1 // pred_check_branch
      %39 = sbr.rel (0) target = $region13
    $region12: #{pd_forward.1} parent=1 // pred_region
      %s41 = ssub.s32 6144, 6144
      %42 = vsyncadd [#allocation5], %s41
      %s43 = sshll.u32 [#allocation4], 4
      %s44 = int_to_ptr.vmem [resolvable:$true] %s43
      %49 = dma.hbm_to_vmem [thread:$0]  %s2, 6144, %s44, [#allocation5], 128, 128, 8
    $region13: #{pd_forward.1} parent=1 // pred_fallthru
      _
    // Predicated region
    $region14: #{pd_forward.1} parent=1 // pred_check
      _
    $region15: #{pd_forward.1} parent=1 // pred_check_branch
      %51 = sbr.rel (0) target = $region17
    $region16: #{pd_forward.1} parent=1 // pred_region
      %s53 = ssub.s32 2048, 2048
      %54 = vsyncadd [#allocation5], %s53
      %s55 = sshll.u32 [#allocation6], 4
      %s56 = int_to_ptr.vmem [resolvable:$true] %s55
      %61 = dma.hbm_to_vmem [thread:$0]  %s3, 2048, %s56, [#allocation5], 64, 64, 4
    $region17: #{pd_forward.1} parent=1 // pred_fallthru
      _
    // Predicated region
    $region18: #{pd_forward.1} parent=1 // pred_check
      _
    $region19: #{pd_forward.1} parent=1 // pred_check_branch
      %63 = sbr.rel (0) target = $region21
    $region20: #{pd_forward.1} parent=1 // pred_region
      %s65 = ssub.s32 1024, 1024
      %66 = vsyncadd [#allocation8], %s65
      %s67 = sshll.u32 [#allocation7], 4
      %s68 = int_to_ptr.vmem [resolvable:$true] %s67
      %73 = dma.hbm_to_vmem [thread:$0]  %s4, 1024, %s68, [#allocation8], 64, 64, 4
    $region21: #{pd_forward.1} parent=1 // pred_fallthru
      _
    // Predicated region
    $region22: #{pd_forward.1} parent=1 // pred_check
      _
    $region23: #{pd_forward.1} parent=1 // pred_check_branch
      %75 = sbr.rel (0) target = $region25
    $region24: #{pd_forward.1} parent=1 // pred_region
      %s77 = ssub.s32 1024, 1024
      %78 = vsyncadd [#allocation8], %s77
      %s79 = sshll.u32 [#allocation9], 4
      %s80 = int_to_ptr.vmem [resolvable:$true] %s79
      %85 = dma.hbm_to_vmem [thread:$0]  %s5, 1024, %s80, [#allocation8], 64, 64, 4
    $region25: #{pd_forward.1} parent=1 // pred_fallthru
      _
    // Predicated region
    $region26: #{pd_forward.1} parent=1 // pred_check
      _
    $region27: #{pd_forward.1} parent=1 // pred_check_branch
      %87 = sbr.rel (0) target = $region29
    $region28: #{pd_forward.1} parent=1 // pred_region
      %s89 = ssub.s32 1024, 1024
      %90 = vsyncadd [#allocation11], %s89
      %s91 = sshll.u32 [#allocation10], 4
      %s92 = int_to_ptr.vmem [resolvable:$true] %s91
      %97 = dma.hbm_to_vmem [thread:$0]  %s6, 1024, %s92, [#allocation11], 64, 64, 4
    $region29: #{pd_forward.1} parent=1 // pred_fallthru
      _
    // Predicated region
    $region30: #{pd_forward.1} parent=1 // pred_check
      _
    $region31: #{pd_forward.1} parent=1 // pred_check_branch
      %99 = sbr.rel (0) target = $region33
    $region32: #{pd_forward.1} parent=1 // pred_region
      %s101 = ssub.s32 1024, 1024
      %102 = vsyncadd [#allocation11], %s101
      %s103 = sshll.u32 [#allocation12], 4
      %s104 = int_to_ptr.vmem [resolvable:$true] %s103
      %109 = dma.hbm_to_vmem [thread:$0]  %s7, 1024, %s104, [#allocation11], 64, 64, 4
    $region33: #{pd_forward.1} parent=1 // pred_fallthru
      _
    // Predicated region
    $region34: #{pd_forward.1} parent=1 // pred_check
      _
    $region35: #{pd_forward.1} parent=1 // pred_check_branch
      %111 = sbr.rel (0) target = $region37
    $region36: #{pd_forward.1} parent=1 // pred_region
      _
    $region37: #{pd_forward.1} parent=1 // pred_fallthru
      _
    // Predicated region
    $region38: #{pd_forward.1} parent=1 // pred_check
      _
    $region39: #{pd_forward.1} parent=1 // pred_check_branch
      %113 = sbr.rel (0) target = $region41
    $region40: #{pd_forward.1} parent=1 // pred_region
      _
    $region41: #{pd_forward.1} parent=1 // pred_fallthru
      _
    // Predicated region
    $region42: #{pd_forward.1} parent=1 // pred_check
      _
    $region43: #{pd_forward.1} parent=1 // pred_check_branch
      %115 = sbr.rel (0) target = $region45
    $region44: #{pd_forward.1} parent=1 // pred_region
      _
    $region45: #{pd_forward.1} parent=1 // pred_fallthru
      _
    // Predicated region
    $region46: #{pd_forward.1} parent=1 // pred_check
      _
    $region47: #{pd_forward.1} parent=1 // pred_check_branch
      %117 = sbr.rel (0) target = $region49
    $region48: #{pd_forward.1} parent=1 // pred_region
      _
    $region49: #{pd_forward.1} parent=1 // pred_fallthru
      _
    // Predicated region
    $region50: #{pd_forward.1} parent=1 // pred_check
      _
    $region51: #{pd_forward.1} parent=1 // pred_check_branch
      %119 = sbr.rel (0) target = $region53
    $region52: #{pd_forward.1} parent=1 // pred_region
      _
    $region53: #{pd_forward.1} parent=1 // pred_fallthru
      _
    // Predicated region
    $region54: #{pd_forward.1} parent=1 // pred_check
      _
    $region55: #{pd_forward.1} parent=1 // pred_check_branch
      %121 = sbr.rel (0) target = $region57
    $region56: #{pd_forward.1} parent=1 // pred_region
      _
    $region57: #{pd_forward.1} parent=1 // pred_fallthru
      _
    // Predicated region
    $region58: #{pd_forward.1} parent=1 // pred_check
      _
    $region59: #{pd_forward.1} parent=1 // pred_check_branch
      %123 = sbr.rel (0) target = $region61
    $region60: #{pd_forward.1} parent=1 // pred_region
      _
    $region61: #{pd_forward.1} parent=1 // pred_fallthru
      _
    // Predicated region
    $region62: #{pd_forward.1} parent=1 // pred_check
      _
    $region63: #{pd_forward.1} parent=1 // pred_check_branch
      %125 = sbr.rel (0) target = $region65
    $region64: #{pd_forward.1} parent=1 // pred_region
      %126 = dma.done [#allocation3], 12288
    $region65: #{pd_forward.1} parent=1 // pred_fallthru
      _
    // Predicated region
    $region66: #{pd_forward.1} parent=1 // pred_check
      _
    $region67: #{pd_forward.1} parent=1 // pred_check_branch
      %128 = sbr.rel (0) target = $region69
    $region68: #{pd_forward.1} parent=1 // pred_region
      %129 = dma.done [#allocation5], 6144
    $region69: #{pd_forward.1} parent=1 // pred_fallthru
      _
    // Predicated region
    $region70: #{pd_forward.1} parent=1 // pred_check
      _
    $region71: #{pd_forward.1} parent=1 // pred_check_branch
      %131 = sbr.rel (0) target = $region73
    $region72: #{pd_forward.1} parent=1 // pred_region
      %132 = dma.done [#allocation5], 2048
    $region73: #{pd_forward.1} parent=1 // pred_fallthru
      _
    // Predicated region
    $region74: #{pd_forward.1} parent=1 // pred_check
      _
    $region75: #{pd_forward.1} parent=1 // pred_check_branch
      %134 = sbr.rel (0) target = $region77
    $region76: #{pd_forward.1} parent=1 // pred_region
      %135 = dma.done [#allocation8], 1024
    $region77: #{pd_forward.1} parent=1 // pred_fallthru
      _
    // Predicated region
    $region78: #{pd_forward.1} parent=1 // pred_check
      _
    $region79: #{pd_forward.1} parent=1 // pred_check_branch
      %137 = sbr.rel (0) target = $region81
    $region80: #{pd_forward.1} parent=1 // pred_region
      %138 = dma.done [#allocation8], 1024
    $region81: #{pd_forward.1} parent=1 // pred_fallthru
      _
    // Predicated region
    $region82: #{pd_forward.1} parent=1 // pred_check
      _
    $region83: #{pd_forward.1} parent=1 // pred_check_branch
      %140 = sbr.rel (0) target = $region85
    $region84: #{pd_forward.1} parent=1 // pred_region
      %141 = dma.done [#allocation11], 1024
    $region85: #{pd_forward.1} parent=1 // pred_fallthru
      _
    // Predicated region
    $region86: #{pd_forward.1} parent=1 // pred_check
      _
    $region87: #{pd_forward.1} parent=1 // pred_check_branch
      %143 = sbr.rel (0) target = $region89
    $region88: #{pd_forward.1} parent=1 // pred_region
      %144 = dma.done [#allocation11], 1024
    $region89: #{pd_forward.1} parent=1 // pred_fallthru
      _
    %v146 = vld [vmem:[%s0] sm:$0xff]
    %v147 = vld [vmem:[%s0 + $0x8] sm:$0xff]
    %v148 = vld [vmem:[%s0 + $0x10] sm:$0xff]
    %v149 = vld [vmem:[%s0 + $0x18] sm:$0xff]
    %v150 = vld [vmem:[#allocation2] sm:$0xff]
    %v151 = vld [vmem:[#allocation2 + $0x8] sm:$0xf]
    %v152 = vld [vmem:[#allocation2 + $0xc] sm:$0xff]
    %v153 = vld [vmem:[#allocation2 + $0x14] sm:$0xf]
    %v154 = vld [vmem:[#allocation2 + $0x18] sm:$0xff]
    %v155 = vld [vmem:[#allocation2 + $0x20] sm:$0xf]
    %v156 = vld [vmem:[#allocation2 + $0x24] sm:$0xff]
    %v157 = vld [vmem:[#allocation2 + $0x2c] sm:$0xf]
    %v158 = vld [vmem:[#allocation2 + $0x30] sm:$0xff]
    %v159 = vld [vmem:[#allocation2 + $0x38] sm:$0xf]
    %v160 = vld [vmem:[#allocation2 + $0x3c] sm:$0xff]
    %v161 = vld [vmem:[#allocation2 + $0x44] sm:$0xf]
    %v162 = vld [vmem:[#allocation2 + $0x48] sm:$0xff]
    %v163 = vld [vmem:[#allocation2 + $0x50] sm:$0xf]
    %v164 = vld [vmem:[#allocation2 + $0x54] sm:$0xff]
    %v165 = vld [vmem:[#allocation2 + $0x5c] sm:$0xf]
    %v166 = vld [vmem:[#allocation2 + $0x60] sm:$0xff]
    %v167 = vld [vmem:[#allocation2 + $0x68] sm:$0xf]
    %v168 = vld [vmem:[#allocation2 + $0x6c] sm:$0xff]
    %v169 = vld [vmem:[#allocation2 + $0x74] sm:$0xf]
    %v170 = vld [vmem:[#allocation2 + $0x78] sm:$0xff]
    %v171 = vld [vmem:[#allocation2 + $0x80] sm:$0xf]
    %v172 = vld [vmem:[#allocation2 + $0x84] sm:$0xff]
    %v173 = vld [vmem:[#allocation2 + $0x8c] sm:$0xf]
    %v174 = vld [vmem:[#allocation2 + $0x90] sm:$0xff]
    %v175 = vld [vmem:[#allocation2 + $0x98] sm:$0xf]
    %v176 = vld [vmem:[#allocation2 + $0x9c] sm:$0xff]
    %v177 = vld [vmem:[#allocation2 + $0xa4] sm:$0xf]
    %v178 = vld [vmem:[#allocation2 + $0xa8] sm:$0xff]
    %v179 = vld [vmem:[#allocation2 + $0xb0] sm:$0xf]
    %v180 = vld [vmem:[#allocation2 + $0xb4] sm:$0xff]
    %v181 = vld [vmem:[#allocation2 + $0xbc] sm:$0xf]
    %v182 = vld [vmem:[#allocation2 + $0xc0] sm:$0xff]
    %v183 = vld [vmem:[#allocation2 + $0xc8] sm:$0xf]
    %v184 = vld [vmem:[#allocation2 + $0xcc] sm:$0xff]
    %v185 = vld [vmem:[#allocation2 + $0xd4] sm:$0xf]
    %v186 = vld [vmem:[#allocation2 + $0xd8] sm:$0xff]
    %v187 = vld [vmem:[#allocation2 + $0xe0] sm:$0xf]
    %v188 = vld [vmem:[#allocation2 + $0xe4] sm:$0xff]
    %v189 = vld [vmem:[#allocation2 + $0xec] sm:$0xf]
    %v190 = vld [vmem:[#allocation2 + $0xf0] sm:$0xff]
    %v191 = vld [vmem:[#allocation2 + $0xf8] sm:$0xf]
    %v192 = vld [vmem:[#allocation2 + $0xfc] sm:$0xff]
    %v193 = vld [vmem:[#allocation2 + $0x104] sm:$0xf]
    %v194 = vld [vmem:[#allocation2 + $0x108] sm:$0xff]
    %v195 = vld [vmem:[#allocation2 + $0x110] sm:$0xf]
    %v196 = vld [vmem:[#allocation2 + $0x114] sm:$0xff]
    %v197 = vld [vmem:[#allocation2 + $0x11c] sm:$0xf]
    %v198 = vld [vmem:[#allocation2 + $0x120] sm:$0xff]
    %v199 = vld [vmem:[#allocation2 + $0x128] sm:$0xf]
    %v200 = vld [vmem:[#allocation2 + $0x12c] sm:$0xff]
    %v201 = vld [vmem:[#allocation2 + $0x134] sm:$0xf]
    %v202 = vld [vmem:[#allocation2 + $0x138] sm:$0xff]
    %v203 = vld [vmem:[#allocation2 + $0x140] sm:$0xf]
    %v204 = vld [vmem:[#allocation2 + $0x144] sm:$0xff]
    %v205 = vld [vmem:[#allocation2 + $0x14c] sm:$0xf]
    %v206 = vld [vmem:[#allocation2 + $0x150] sm:$0xff]
    %v207 = vld [vmem:[#allocation2 + $0x158] sm:$0xf]
    %v208 = vld [vmem:[#allocation2 + $0x15c] sm:$0xff]
    %v209 = vld [vmem:[#allocation2 + $0x164] sm:$0xf]
    %v210 = vld [vmem:[#allocation2 + $0x168] sm:$0xff]
    %v211 = vld [vmem:[#allocation2 + $0x170] sm:$0xf]
    %v212 = vld [vmem:[#allocation2 + $0x174] sm:$0xff]
    %v213 = vld [vmem:[#allocation2 + $0x17c] sm:$0xf]
    %v214 = vld [vmem:[#allocation2 + $0x180] sm:$0xff]
    %v215 = vld [vmem:[#allocation2 + $0x188] sm:$0xf]
    %v216 = vld [vmem:[#allocation2 + $0x18c] sm:$0xff]
    %v217 = vld [vmem:[#allocation2 + $0x194] sm:$0xf]
    %v218 = vld [vmem:[#allocation2 + $0x198] sm:$0xff]
    %v219 = vld [vmem:[#allocation2 + $0x1a0] sm:$0xf]
    %v220 = vld [vmem:[#allocation2 + $0x1a4] sm:$0xff]
    %v221 = vld [vmem:[#allocation2 + $0x1ac] sm:$0xf]
    %v222 = vld [vmem:[#allocation2 + $0x1b0] sm:$0xff]
    %v223 = vld [vmem:[#allocation2 + $0x1b8] sm:$0xf]
    %v224 = vld [vmem:[#allocation2 + $0x1bc] sm:$0xff]
    %v225 = vld [vmem:[#allocation2 + $0x1c4] sm:$0xf]
    %v226 = vld [vmem:[#allocation2 + $0x1c8] sm:$0xff]
    %v227 = vld [vmem:[#allocation2 + $0x1d0] sm:$0xf]
    %v228 = vld [vmem:[#allocation2 + $0x1d4] sm:$0xff]
    %v229 = vld [vmem:[#allocation2 + $0x1dc] sm:$0xf]
    %v230 = vld [vmem:[#allocation2 + $0x1e0] sm:$0xff]
    %v231 = vld [vmem:[#allocation2 + $0x1e8] sm:$0xf]
    %v232 = vld [vmem:[#allocation2 + $0x1ec] sm:$0xff]
    %v233 = vld [vmem:[#allocation2 + $0x1f4] sm:$0xf]
    %v234 = vld [vmem:[#allocation2 + $0x1f8] sm:$0xff]
    %v235 = vld [vmem:[#allocation2 + $0x200] sm:$0xf]
    %v236 = vld [vmem:[#allocation2 + $0x204] sm:$0xff]
    %v237 = vld [vmem:[#allocation2 + $0x20c] sm:$0xf]
    %v238 = vld [vmem:[#allocation2 + $0x210] sm:$0xff]
    %v239 = vld [vmem:[#allocation2 + $0x218] sm:$0xf]
    %v240 = vld [vmem:[#allocation2 + $0x21c] sm:$0xff]
    %v241 = vld [vmem:[#allocation2 + $0x224] sm:$0xf]
    %v242 = vld [vmem:[#allocation2 + $0x228] sm:$0xff]
    %v243 = vld [vmem:[#allocation2 + $0x230] sm:$0xf]
    %v244 = vld [vmem:[#allocation2 + $0x234] sm:$0xff]
    %v245 = vld [vmem:[#allocation2 + $0x23c] sm:$0xf]
    %v246 = vld [vmem:[#allocation2 + $0x240] sm:$0xff]
    %v247 = vld [vmem:[#allocation2 + $0x248] sm:$0xf]
    %v248 = vld [vmem:[#allocation2 + $0x24c] sm:$0xff]
    %v249 = vld [vmem:[#allocation2 + $0x254] sm:$0xf]
    %v250 = vld [vmem:[#allocation2 + $0x258] sm:$0xff]
    %v251 = vld [vmem:[#allocation2 + $0x260] sm:$0xf]
    %v252 = vld [vmem:[#allocation2 + $0x264] sm:$0xff]
    %v253 = vld [vmem:[#allocation2 + $0x26c] sm:$0xf]
    %v254 = vld [vmem:[#allocation2 + $0x270] sm:$0xff]
    %v255 = vld [vmem:[#allocation2 + $0x278] sm:$0xf]
    %v256 = vld [vmem:[#allocation2 + $0x27c] sm:$0xff]
    %v257 = vld [vmem:[#allocation2 + $0x284] sm:$0xf]
    %v258 = vld [vmem:[#allocation2 + $0x288] sm:$0xff]
    %v259 = vld [vmem:[#allocation2 + $0x290] sm:$0xf]
    %v260 = vld [vmem:[#allocation2 + $0x294] sm:$0xff]
    %v261 = vld [vmem:[#allocation2 + $0x29c] sm:$0xf]
    %v262 = vld [vmem:[#allocation2 + $0x2a0] sm:$0xff]
    %v263 = vld [vmem:[#allocation2 + $0x2a8] sm:$0xf]
    %v264 = vld [vmem:[#allocation2 + $0x2ac] sm:$0xff]
    %v265 = vld [vmem:[#allocation2 + $0x2b4] sm:$0xf]
    %v266 = vld [vmem:[#allocation2 + $0x2b8] sm:$0xff]
    %v267 = vld [vmem:[#allocation2 + $0x2c0] sm:$0xf]
    %v268 = vld [vmem:[#allocation2 + $0x2c4] sm:$0xff]
    %v269 = vld [vmem:[#allocation2 + $0x2cc] sm:$0xf]
    %v270 = vld [vmem:[#allocation2 + $0x2d0] sm:$0xff]
    %v271 = vld [vmem:[#allocation2 + $0x2d8] sm:$0xf]
    %v272 = vld [vmem:[#allocation2 + $0x2dc] sm:$0xff]
    %v273 = vld [vmem:[#allocation2 + $0x2e4] sm:$0xf]
    %v274 = vld [vmem:[#allocation2 + $0x2e8] sm:$0xff]
    %v275 = vld [vmem:[#allocation2 + $0x2f0] sm:$0xf]
    %v276 = vld [vmem:[#allocation2 + $0x2f4] sm:$0xff]
    %v277 = vld [vmem:[#allocation2 + $0x2fc] sm:$0xf]
    %v278 = vld [vmem:[%s8] sm:$0x7]
    %v280 = vlaneseq
    %v281 = vshrl.u32 %v280, 7
    %v282 = vsub.s32 0, %v281
    %v283 = vrot.slane %v278, %v282
    %v284 = vlaneseq
    %v285 = vshrl.u32 %v284, 7
    %v286 = vsub.s32 1, %v285
    %v287 = vrot.slane %v278, %v286
    %v288 = vlaneseq
    %v289 = vshrl.u32 %v288, 7
    %v290 = vsub.s32 2, %v289
    %v291 = vrot.slane %v278, %v290
    %v299 = vunpack.c.l.b16 %v146
    %v300 = vunpack.c.h.b16 %v146
    %v301 = vunpack.c.l.b16 %v147
    %v302 = vunpack.c.h.b16 %v147
    %v303 = vunpack.c.l.b16 %v148
    %v304 = vunpack.c.h.b16 %v148
    %v305 = vunpack.c.l.b16 %v149
    %v306 = vunpack.c.h.b16 %v149
    %v307 = vpack.c.b16 %v303, %v299
    %v308 = vpack.c.b16 %v304, %v300
    %v309 = vpack.c.b16 %v305, %v301
    %v310 = vpack.c.b16 %v306, %v302
    %v443 = vunpack.c.l.b16 %v150
    %v444 = vunpack.c.h.b16 %v150
    %v445 = vunpack.c.l.b16 %v151
    %v446 = vunpack.c.l.b16 %v152
    %v447 = vunpack.c.h.b16 %v152
    %v448 = vunpack.c.l.b16 %v153
    %v449 = vunpack.c.l.b16 %v154
    %v450 = vunpack.c.h.b16 %v154
    %v451 = vunpack.c.l.b16 %v155
    %v452 = vunpack.c.l.b16 %v156
    %v453 = vunpack.c.h.b16 %v156
    %v454 = vunpack.c.l.b16 %v157
    %v455 = vunpack.c.l.b16 %v158
    %v456 = vunpack.c.h.b16 %v158
    %v457 = vunpack.c.l.b16 %v159
    %v458 = vunpack.c.l.b16 %v160
    %v459 = vunpack.c.h.b16 %v160
    %v460 = vunpack.c.l.b16 %v161
    %v461 = vunpack.c.l.b16 %v162
    %v462 = vunpack.c.h.b16 %v162
    %v463 = vunpack.c.l.b16 %v163
    %v464 = vunpack.c.l.b16 %v164
    %v465 = vunpack.c.h.b16 %v164
    %v466 = vunpack.c.l.b16 %v165
    %v467 = vunpack.c.l.b16 %v166
    %v468 = vunpack.c.h.b16 %v166
    %v469 = vunpack.c.l.b16 %v167
    %v470 = vunpack.c.l.b16 %v168
    %v471 = vunpack.c.h.b16 %v168
    %v472 = vunpack.c.l.b16 %v169
    %v473 = vunpack.c.l.b16 %v170
    %v474 = vunpack.c.h.b16 %v170
    %v475 = vunpack.c.l.b16 %v171
    %v476 = vunpack.c.l.b16 %v172
    %v477 = vunpack.c.h.b16 %v172
    %v478 = vunpack.c.l.b16 %v173
    %v479 = vunpack.c.l.b16 %v174
    %v480 = vunpack.c.h.b16 %v174
    %v481 = vunpack.c.l.b16 %v175
    %v482 = vunpack.c.l.b16 %v176
    %v483 = vunpack.c.h.b16 %v176
    %v484 = vunpack.c.l.b16 %v177
    %v485 = vunpack.c.l.b16 %v178
    %v486 = vunpack.c.h.b16 %v178
    %v487 = vunpack.c.l.b16 %v179
    %v488 = vunpack.c.l.b16 %v180
    %v489 = vunpack.c.h.b16 %v180
    %v490 = vunpack.c.l.b16 %v181
    %v491 = vunpack.c.l.b16 %v182
    %v492 = vunpack.c.h.b16 %v182
    %v493 = vunpack.c.l.b16 %v183
    %v494 = vunpack.c.l.b16 %v184
    %v495 = vunpack.c.h.b16 %v184
    %v496 = vunpack.c.l.b16 %v185
    %v497 = vunpack.c.l.b16 %v186
    %v498 = vunpack.c.h.b16 %v186
    %v499 = vunpack.c.l.b16 %v187
    %v500 = vunpack.c.l.b16 %v188
    %v501 = vunpack.c.h.b16 %v188
    %v502 = vunpack.c.l.b16 %v189
    %v503 = vunpack.c.l.b16 %v190
    %v504 = vunpack.c.h.b16 %v190
    %v505 = vunpack.c.l.b16 %v191
    %v506 = vunpack.c.l.b16 %v192
    %v507 = vunpack.c.h.b16 %v192
    %v508 = vunpack.c.l.b16 %v193
    %v509 = vunpack.c.l.b16 %v194
    %v510 = vunpack.c.h.b16 %v194
    %v511 = vunpack.c.l.b16 %v195
    %v512 = vunpack.c.l.b16 %v196
    %v513 = vunpack.c.h.b16 %v196
    %v514 = vunpack.c.l.b16 %v197
    %v515 = vunpack.c.l.b16 %v198
    %v516 = vunpack.c.h.b16 %v198
    %v517 = vunpack.c.l.b16 %v199
    %v518 = vunpack.c.l.b16 %v200
    %v519 = vunpack.c.h.b16 %v200
    %v520 = vunpack.c.l.b16 %v201
    %v521 = vunpack.c.l.b16 %v202
    %v522 = vunpack.c.h.b16 %v202
    %v523 = vunpack.c.l.b16 %v203
    %v524 = vunpack.c.l.b16 %v204
    %v525 = vunpack.c.h.b16 %v204
    %v526 = vunpack.c.l.b16 %v205
    %v527 = vunpack.c.l.b16 %v206
    %v528 = vunpack.c.h.b16 %v206
    %v529 = vunpack.c.l.b16 %v207
    %v530 = vunpack.c.l.b16 %v208
    %v531 = vunpack.c.h.b16 %v208
    %v532 = vunpack.c.l.b16 %v209
    %v533 = vunpack.c.l.b16 %v210
    %v534 = vunpack.c.h.b16 %v210
    %v535 = vunpack.c.l.b16 %v211
    %v536 = vunpack.c.l.b16 %v212
    %v537 = vunpack.c.h.b16 %v212
    %v538 = vunpack.c.l.b16 %v213
    %v539 = vunpack.c.l.b16 %v214
    %v540 = vunpack.c.h.b16 %v214
    %v541 = vunpack.c.l.b16 %v215
    %v542 = vunpack.c.l.b16 %v216
    %v543 = vunpack.c.h.b16 %v216
    %v544 = vunpack.c.l.b16 %v217
    %v545 = vunpack.c.l.b16 %v218
    %v546 = vunpack.c.h.b16 %v218
    %v547 = vunpack.c.l.b16 %v219
    %v548 = vunpack.c.l.b16 %v220
    %v549 = vunpack.c.h.b16 %v220
    %v550 = vunpack.c.l.b16 %v221
    %v551 = vunpack.c.l.b16 %v222
    %v552 = vunpack.c.h.b16 %v222
    %v553 = vunpack.c.l.b16 %v223
    %v554 = vunpack.c.l.b16 %v224
    %v555 = vunpack.c.h.b16 %v224
    %v556 = vunpack.c.l.b16 %v225
    %v557 = vunpack.c.l.b16 %v226
    %v558 = vunpack.c.h.b16 %v226
    %v559 = vunpack.c.l.b16 %v227
    %v560 = vunpack.c.l.b16 %v228
    %v561 = vunpack.c.h.b16 %v228
    %v562 = vunpack.c.l.b16 %v229
    %v563 = vunpack.c.l.b16 %v230
    %v564 = vunpack.c.h.b16 %v230
    %v565 = vunpack.c.l.b16 %v231
    %v566 = vunpack.c.l.b16 %v232
    %v567 = vunpack.c.h.b16 %v232
    %v568 = vunpack.c.l.b16 %v233
    %v569 = vunpack.c.l.b16 %v234
    %v570 = vunpack.c.h.b16 %v234
    %v571 = vunpack.c.l.b16 %v235
    %v572 = vunpack.c.l.b16 %v236
    %v573 = vunpack.c.h.b16 %v236
    %v574 = vunpack.c.l.b16 %v237
    %v575 = vunpack.c.l.b16 %v238
    %v576 = vunpack.c.h.b16 %v238
    %v577 = vunpack.c.l.b16 %v239
    %v578 = vunpack.c.l.b16 %v240
    %v579 = vunpack.c.h.b16 %v240
    %v580 = vunpack.c.l.b16 %v241
    %v581 = vunpack.c.l.b16 %v242
    %v582 = vunpack.c.h.b16 %v242
    %v583 = vunpack.c.l.b16 %v243
    %v584 = vunpack.c.l.b16 %v244
    %v585 = vunpack.c.h.b16 %v244
    %v586 = vunpack.c.l.b16 %v245
    %v587 = vunpack.c.l.b16 %v246
    %v588 = vunpack.c.h.b16 %v246
    %v589 = vunpack.c.l.b16 %v247
    %v590 = vunpack.c.l.b16 %v248
    %v591 = vunpack.c.h.b16 %v248
    %v592 = vunpack.c.l.b16 %v249
    %v593 = vunpack.c.l.b16 %v250
    %v594 = vunpack.c.h.b16 %v250
    %v595 = vunpack.c.l.b16 %v251
    %v596 = vunpack.c.l.b16 %v252
    %v597 = vunpack.c.h.b16 %v252
    %v598 = vunpack.c.l.b16 %v253
    %v599 = vunpack.c.l.b16 %v254
    %v600 = vunpack.c.h.b16 %v254
    %v601 = vunpack.c.l.b16 %v255
    %v602 = vunpack.c.l.b16 %v256
    %v603 = vunpack.c.h.b16 %v256
    %v604 = vunpack.c.l.b16 %v257
    %v605 = vunpack.c.l.b16 %v258
    %v606 = vunpack.c.h.b16 %v258
    %v607 = vunpack.c.l.b16 %v259
    %v608 = vunpack.c.l.b16 %v260
    %v609 = vunpack.c.h.b16 %v260
    %v610 = vunpack.c.l.b16 %v261
    %v611 = vunpack.c.l.b16 %v262
    %v612 = vunpack.c.h.b16 %v262
    %v613 = vunpack.c.l.b16 %v263
    %v614 = vunpack.c.l.b16 %v264
    %v615 = vunpack.c.h.b16 %v264
    %v616 = vunpack.c.l.b16 %v265
    %v617 = vunpack.c.l.b16 %v266
    %v618 = vunpack.c.h.b16 %v266
    %v619 = vunpack.c.l.b16 %v267
    %v620 = vunpack.c.l.b16 %v268
    %v621 = vunpack.c.h.b16 %v268
    %v622 = vunpack.c.l.b16 %v269
    %v623 = vunpack.c.l.b16 %v270
    %v624 = vunpack.c.h.b16 %v270
    %v625 = vunpack.c.l.b16 %v271
    %v626 = vunpack.c.l.b16 %v272
    %v627 = vunpack.c.h.b16 %v272
    %v628 = vunpack.c.l.b16 %v273
    %v629 = vunpack.c.l.b16 %v274
    %v630 = vunpack.c.h.b16 %v274
    %v631 = vunpack.c.l.b16 %v275
    %v632 = vunpack.c.l.b16 %v276
    %v633 = vunpack.c.h.b16 %v276
    %v634 = vunpack.c.l.b16 %v277
    %v635 = vpack.c.b16 %v446, %v443
    %v636 = vpack.c.b16 %v447, %v444
    %v637 = vpack.c.b16 %v448, %v445
    %v638 = vpack.c.b16 %v452, %v449
    %v639 = vpack.c.b16 %v453, %v450
    %v640 = vpack.c.b16 %v454, %v451
    %v641 = vpack.c.b16 %v458, %v455
    %v642 = vpack.c.b16 %v459, %v456
    %v643 = vpack.c.b16 %v460, %v457
    %v644 = vpack.c.b16 %v464, %v461
    %v645 = vpack.c.b16 %v465, %v462
    %v646 = vpack.c.b16 %v466, %v463
    %v647 = vpack.c.b16 %v470, %v467
    %v648 = vpack.c.b16 %v471, %v468
    %v649 = vpack.c.b16 %v472, %v469
    %v650 = vpack.c.b16 %v476, %v473
    %v651 = vpack.c.b16 %v477, %v474
    %v652 = vpack.c.b16 %v478, %v475
    %v653 = vpack.c.b16 %v482, %v479
    %v654 = vpack.c.b16 %v483, %v480
    %v655 = vpack.c.b16 %v484, %v481
    %v656 = vpack.c.b16 %v488, %v485
    %v657 = vpack.c.b16 %v489, %v486
    %v658 = vpack.c.b16 %v490, %v487
    %v659 = vpack.c.b16 %v494, %v491
    %v660 = vpack.c.b16 %v495, %v492
    %v661 = vpack.c.b16 %v496, %v493
    %v662 = vpack.c.b16 %v500, %v497
    %v663 = vpack.c.b16 %v501, %v498
    %v664 = vpack.c.b16 %v502, %v499
    %v665 = vpack.c.b16 %v506, %v503
    %v666 = vpack.c.b16 %v507, %v504
    %v667 = vpack.c.b16 %v508, %v505
    %v668 = vpack.c.b16 %v512, %v509
    %v669 = vpack.c.b16 %v513, %v510
    %v670 = vpack.c.b16 %v514, %v511
    %v671 = vpack.c.b16 %v518, %v515
    %v672 = vpack.c.b16 %v519, %v516
    %v673 = vpack.c.b16 %v520, %v517
    %v674 = vpack.c.b16 %v524, %v521
    %v675 = vpack.c.b16 %v525, %v522
    %v676 = vpack.c.b16 %v526, %v523
    %v677 = vpack.c.b16 %v530, %v527
    %v678 = vpack.c.b16 %v531, %v528
    %v679 = vpack.c.b16 %v532, %v529
    %v680 = vpack.c.b16 %v536, %v533
    %v681 = vpack.c.b16 %v537, %v534
    %v682 = vpack.c.b16 %v538, %v535
    %v683 = vpack.c.b16 %v542, %v539
    %v684 = vpack.c.b16 %v543, %v540
    %v685 = vpack.c.b16 %v544, %v541
    %v686 = vpack.c.b16 %v548, %v545
    %v687 = vpack.c.b16 %v549, %v546
    %v688 = vpack.c.b16 %v550, %v547
    %v689 = vpack.c.b16 %v554, %v551
    %v690 = vpack.c.b16 %v555, %v552
    %v691 = vpack.c.b16 %v556, %v553
    %v692 = vpack.c.b16 %v560, %v557
    %v693 = vpack.c.b16 %v561, %v558
    %v694 = vpack.c.b16 %v562, %v559
    %v695 = vpack.c.b16 %v566, %v563
    %v696 = vpack.c.b16 %v567, %v564
    %v697 = vpack.c.b16 %v568, %v565
    %v698 = vpack.c.b16 %v572, %v569
    %v699 = vpack.c.b16 %v573, %v570
    %v700 = vpack.c.b16 %v574, %v571
    %v701 = vpack.c.b16 %v578, %v575
    %v702 = vpack.c.b16 %v579, %v576
    %v703 = vpack.c.b16 %v580, %v577
    %v704 = vpack.c.b16 %v584, %v581
    %v705 = vpack.c.b16 %v585, %v582
    %v706 = vpack.c.b16 %v586, %v583
    %v707 = vpack.c.b16 %v590, %v587
    %v708 = vpack.c.b16 %v591, %v588
    %v709 = vpack.c.b16 %v592, %v589
    %v710 = vpack.c.b16 %v596, %v593
    %v711 = vpack.c.b16 %v597, %v594
    %v712 = vpack.c.b16 %v598, %v595
    %v713 = vpack.c.b16 %v602, %v599
    %v714 = vpack.c.b16 %v603, %v600
    %v715 = vpack.c.b16 %v604, %v601
    %v716 = vpack.c.b16 %v608, %v605
    %v717 = vpack.c.b16 %v609, %v606
    %v718 = vpack.c.b16 %v610, %v607
    %v719 = vpack.c.b16 %v614, %v611
    %v720 = vpack.c.b16 %v615, %v612
    %v721 = vpack.c.b16 %v616, %v613
    %v722 = vpack.c.b16 %v620, %v617
    %v723 = vpack.c.b16 %v621, %v618
    %v724 = vpack.c.b16 %v622, %v619
    %v725 = vpack.c.b16 %v626, %v623
    %v726 = vpack.c.b16 %v627, %v624
    %v727 = vpack.c.b16 %v628, %v625
    %v728 = vpack.c.b16 %v632, %v629
    %v729 = vpack.c.b16 %v633, %v630
    %v730 = vpack.c.b16 %v634, %v631
    %827 = vmatprep.subr.bf16.mxu0 %v657
    %828 = vmatpush1.bf16.msra.mxu0 %v656
    %829 = vmatprep.subr.bf16.mxu0 %v654
    %830 = vmatpush1.bf16.msra.mxu0 %v653
    %831 = vmatprep.subr.bf16.mxu0 %v651
    %832 = vmatpush1.bf16.msra.mxu0 %v650
    %833 = vmatprep.subr.bf16.mxu0 %v648
    %834 = vmatpush1.bf16.msra.mxu0 %v647
    %835 = vmatprep.subr.bf16.mxu0 %v645
    %836 = vmatpush1.bf16.msra.mxu0 %v644
    %837 = vmatprep.subr.bf16.mxu0 %v642
    %838 = vmatpush1.bf16.msra.mxu0 %v641
    %839 = vmatprep.subr.bf16.mxu0 %v639
    %840 = vmatpush1.bf16.msra.mxu0 %v638
    %841 = vmatprep.subr.bf16.mxu0 %v636
    %842 = vmatpush1.bf16.msra.mxu0 %v635
    %843 = vmatprep.subr.bf16.mxu0 %v681
    %844 = vmatpush2.bf16.msra.mxu0 %v680
    %845 = vmatprep.subr.bf16.mxu0 %v678
    %846 = vmatpush2.bf16.msra.mxu0 %v677
    %847 = vmatprep.subr.bf16.mxu0 %v675
    %848 = vmatpush2.bf16.msra.mxu0 %v674
    %849 = vmatprep.subr.bf16.mxu0 %v672
    %850 = vmatpush2.bf16.msra.mxu0 %v671
    %851 = vmatprep.subr.bf16.mxu0 %v669
    %852 = vmatpush2.bf16.msra.mxu0 %v668
    %853 = vmatprep.subr.bf16.mxu0 %v666
    %854 = vmatpush2.bf16.msra.mxu0 %v665
    %855 = vmatprep.subr.bf16.mxu0 %v663
    %856 = vmatpush2.bf16.msra.mxu0 %v662
    %857 = vmatprep.subr.bf16.mxu0 %v660
    %858 = vmatpush2.bf16.msra.mxu0 %v659
    %859 = vmatprep.mubr.bf16.mxu0 %v308
    %860 = vmatmul.mubr.bf16.gmra.mxu0 %v307
    %v861 = vpop.f32.mrf.mxu0
    %v862 = vadd.f32 %v283, %v861
    %v863 = vpop.f32.mrf.mxu0
    %v864 = vadd.f32 %v287, %v863
    %v865 = vpop.f32.mrf.mxu0
    %v866 = vadd.f32 %v283, %v865
    %v867 = vpop.f32.mrf.mxu0
    %v868 = vadd.f32 %v287, %v867
    %869 = vdwg.mxu0
    %870 = vmatprep.subr.bf16.mxu0 %v705
    %871 = vmatpush1.bf16.msra.mxu0 %v704
    %872 = vmatprep.subr.bf16.mxu0 %v702
    %873 = vmatpush1.bf16.msra.mxu0 %v701
    %874 = vmatprep.subr.bf16.mxu0 %v699
    %875 = vmatpush1.bf16.msra.mxu0 %v698
    %876 = vmatprep.subr.bf16.mxu0 %v696
    %877 = vmatpush1.bf16.msra.mxu0 %v695
    %878 = vmatprep.subr.bf16.mxu0 %v693
    %879 = vmatpush1.bf16.msra.mxu0 %v692
    %880 = vmatprep.subr.bf16.mxu0 %v690
    %881 = vmatpush1.bf16.msra.mxu0 %v689
    %882 = vmatprep.subr.bf16.mxu0 %v687
    %883 = vmatpush1.bf16.msra.mxu0 %v686
    %884 = vmatprep.subr.bf16.mxu0 %v684
    %885 = vmatpush1.bf16.msra.mxu0 %v683
    %886 = vmatprep.subr.bf16.mxu0 %v729
    %887 = vmatpush2.bf16.msra.mxu0 %v728
    %888 = vmatprep.subr.bf16.mxu0 %v726
    %889 = vmatpush2.bf16.msra.mxu0 %v725
    %890 = vmatprep.subr.bf16.mxu0 %v723
    %891 = vmatpush2.bf16.msra.mxu0 %v722
    %892 = vmatprep.subr.bf16.mxu0 %v720
    %893 = vmatpush2.bf16.msra.mxu0 %v719
    %894 = vmatprep.subr.bf16.mxu0 %v717
    %895 = vmatpush2.bf16.msra.mxu0 %v716
    %896 = vmatprep.subr.bf16.mxu0 %v714
    %897 = vmatpush2.bf16.msra.mxu0 %v713
    %898 = vmatprep.subr.bf16.mxu0 %v711
    %899 = vmatpush2.bf16.msra.mxu0 %v710
    %900 = vmatprep.subr.bf16.mxu0 %v708
    %901 = vmatpush2.bf16.msra.mxu0 %v707
    %902 = vmatprep.mubr.bf16.mxu0 %v310
    %903 = vmatmul.mubr.bf16.gmra.mxu0 %v309
    %v904 = vpop.f32.mrf.mxu0
    %v905 = vadd.f32 %v862, %v904
    %v906 = vpop.f32.mrf.mxu0
    %v907 = vadd.f32 %v864, %v906
    %v908 = vpop.f32.mrf.mxu0
    %v909 = vadd.f32 %v866, %v908
    %v910 = vpop.f32.mrf.mxu0
    %v911 = vadd.f32 %v868, %v910
    %912 = vdwg.mxu0
    %913 = vmatprep.subr.bf16.mxu0 0
    %914 = vmatpush1.bf16.msra.mxu0 %v658
    %915 = vmatprep.subr.bf16.mxu0 0
    %916 = vmatpush1.bf16.msra.mxu0 %v655
    %917 = vmatprep.subr.bf16.mxu0 0
    %918 = vmatpush1.bf16.msra.mxu0 %v652
    %919 = vmatprep.subr.bf16.mxu0 0
    %920 = vmatpush1.bf16.msra.mxu0 %v649
    %921 = vmatprep.subr.bf16.mxu0 0
    %922 = vmatpush1.bf16.msra.mxu0 %v646
    %923 = vmatprep.subr.bf16.mxu0 0
    %924 = vmatpush1.bf16.msra.mxu0 %v643
    %925 = vmatprep.subr.bf16.mxu0 0
    %926 = vmatpush1.bf16.msra.mxu0 %v640
    %927 = vmatprep.subr.bf16.mxu0 0
    %928 = vmatpush1.bf16.msra.mxu0 %v637
    %929 = vmatprep.subr.bf16.mxu0 0
    %930 = vmatpush2.bf16.msra.mxu0 %v682
    %931 = vmatprep.subr.bf16.mxu0 0
    %932 = vmatpush2.bf16.msra.mxu0 %v679
    %933 = vmatprep.subr.bf16.mxu0 0
    %934 = vmatpush2.bf16.msra.mxu0 %v676
    %935 = vmatprep.subr.bf16.mxu0 0
    %936 = vmatpush2.bf16.msra.mxu0 %v673
    %937 = vmatprep.subr.bf16.mxu0 0
    %938 = vmatpush2.bf16.msra.mxu0 %v670
    %939 = vmatprep.subr.bf16.mxu0 0
    %940 = vmatpush2.bf16.msra.mxu0 %v667
    %941 = vmatprep.subr.bf16.mxu0 0
    %942 = vmatpush2.bf16.msra.mxu0 %v664
    %943 = vmatprep.subr.bf16.mxu0 0
    %944 = vmatpush2.bf16.msra.mxu0 %v661
    %945 = vmatprep.mubr.bf16.mxu0 %v308
    %946 = vmatmul.mubr.bf16.gmra.mxu0 %v307
    %v947 = vpop.f32.mrf.mxu0
    %v948 = vadd.f32 %v291, %v947
    %v949 = vpop.f32.mrf.mxu0
    %v950 = vpop.f32.mrf.mxu0
    %v951 = vadd.f32 %v291, %v950
    %v952 = vpop.f32.mrf.mxu0
    %953 = vdwg.mxu0
    %954 = vmatprep.subr.bf16.mxu0 0
    %955 = vmatpush1.bf16.msra.mxu0 %v706
    %956 = vmatprep.subr.bf16.mxu0 0
    %957 = vmatpush1.bf16.msra.mxu0 %v703
    %958 = vmatprep.subr.bf16.mxu0 0
    %959 = vmatpush1.bf16.msra.mxu0 %v700
    %960 = vmatprep.subr.bf16.mxu0 0
    %961 = vmatpush1.bf16.msra.mxu0 %v697
    %962 = vmatprep.subr.bf16.mxu0 0
    %963 = vmatpush1.bf16.msra.mxu0 %v694
    %964 = vmatprep.subr.bf16.mxu0 0
    %965 = vmatpush1.bf16.msra.mxu0 %v691
    %966 = vmatprep.subr.bf16.mxu0 0
    %967 = vmatpush1.bf16.msra.mxu0 %v688
    %968 = vmatprep.subr.bf16.mxu0 0
    %969 = vmatpush1.bf16.msra.mxu0 %v685
    %970 = vmatprep.subr.bf16.mxu0 0
    %971 = vmatpush2.bf16.msra.mxu0 %v730
    %972 = vmatprep.subr.bf16.mxu0 0
    %973 = vmatpush2.bf16.msra.mxu0 %v727
    %974 = vmatprep.subr.bf16.mxu0 0
    %975 = vmatpush2.bf16.msra.mxu0 %v724
    %976 = vmatprep.subr.bf16.mxu0 0
    %977 = vmatpush2.bf16.msra.mxu0 %v721
    %978 = vmatprep.subr.bf16.mxu0 0
    %979 = vmatpush2.bf16.msra.mxu0 %v718
    %980 = vmatprep.subr.bf16.mxu0 0
    %981 = vmatpush2.bf16.msra.mxu0 %v715
    %982 = vmatprep.subr.bf16.mxu0 0
    %983 = vmatpush2.bf16.msra.mxu0 %v712
    %984 = vmatprep.subr.bf16.mxu0 0
    %985 = vmatpush2.bf16.msra.mxu0 %v709
    %986 = vmatprep.mubr.bf16.mxu0 %v310
    %987 = vmatmul.mubr.bf16.gmra.mxu0 %v309
    %v988 = vpop.f32.mrf.mxu0
    %v989 = vadd.f32 %v948, %v988
    %v990 = vpop.f32.mrf.mxu0
    %v991 = vpop.f32.mrf.mxu0
    %v992 = vadd.f32 %v951, %v991
    %v993 = vpop.f32.mrf.mxu0
    %994 = vdwg.mxu0
    %v995 = vmax.f32 %v905, 0.0
    %v996 = vmax.f32 %v907, 0.0
    %v997 = vmax.f32 %v989, 0.0
    %v998 = vmax.f32 %v909, 0.0
    %v999 = vmax.f32 %v911, 0.0
    %v1000 = vmax.f32 %v992, 0.0
    %v1001 = vpack.c.bf16 %v998, %v995
    %v1002 = vpack.c.bf16 %v999, %v996
    %v1003 = vpack.c.bf16 %v1000, %v997
    %v1004 = vld [vmem:[#allocation4] sm:$0xff]
    %v1005 = vld [vmem:[#allocation4 + $0x8] sm:$0xff]
    %v1006 = vld [vmem:[#allocation4 + $0x10] sm:$0xff]
    %v1007 = vld [vmem:[#allocation4 + $0x18] sm:$0xff]
    %v1008 = vld [vmem:[#allocation4 + $0x20] sm:$0xff]
    %v1009 = vld [vmem:[#allocation4 + $0x28] sm:$0xff]
    %v1010 = vld [vmem:[#allocation4 + $0x30] sm:$0xff]
    %v1011 = vld [vmem:[#allocation4 + $0x38] sm:$0xff]
    %v1012 = vld [vmem:[#allocation4 + $0x40] sm:$0xff]
    %v1013 = vld [vmem:[#allocation4 + $0x48] sm:$0xff]
    %v1014 = vld [vmem:[#allocation4 + $0x50] sm:$0xff]
    %v1015 = vld [vmem:[#allocation4 + $0x58] sm:$0xff]
    %v1016 = vld [vmem:[#allocation4 + $0x60] sm:$0xff]
    %v1017 = vld [vmem:[#allocation4 + $0x68] sm:$0xff]
    %v1018 = vld [vmem:[#allocation4 + $0x70] sm:$0xff]
    %v1019 = vld [vmem:[#allocation4 + $0x78] sm:$0xff]
    %v1020 = vld [vmem:[#allocation4 + $0x80] sm:$0xff]
    %v1021 = vld [vmem:[#allocation4 + $0x88] sm:$0xff]
    %v1022 = vld [vmem:[#allocation4 + $0x90] sm:$0xff]
    %v1023 = vld [vmem:[#allocation4 + $0x98] sm:$0xff]
    %v1024 = vld [vmem:[#allocation4 + $0xa0] sm:$0xff]
    %v1025 = vld [vmem:[#allocation4 + $0xa8] sm:$0xff]
    %v1026 = vld [vmem:[#allocation4 + $0xb0] sm:$0xff]
    %v1027 = vld [vmem:[#allocation4 + $0xb8] sm:$0xff]
    %v1028 = vld [vmem:[#allocation4 + $0xc0] sm:$0xff]
    %v1029 = vld [vmem:[#allocation4 + $0xc8] sm:$0xff]
    %v1030 = vld [vmem:[#allocation4 + $0xd0] sm:$0xff]
    %v1031 = vld [vmem:[#allocation4 + $0xd8] sm:$0xff]
    %v1032 = vld [vmem:[#allocation4 + $0xe0] sm:$0xff]
    %v1033 = vld [vmem:[#allocation4 + $0xe8] sm:$0xff]
    %v1034 = vld [vmem:[#allocation4 + $0xf0] sm:$0xff]
    %v1035 = vld [vmem:[#allocation4 + $0xf8] sm:$0xff]
    %v1036 = vld [vmem:[#allocation4 + $0x100] sm:$0xff]
    %v1037 = vld [vmem:[#allocation4 + $0x108] sm:$0xff]
    %v1038 = vld [vmem:[#allocation4 + $0x110] sm:$0xff]
    %v1039 = vld [vmem:[#allocation4 + $0x118] sm:$0xff]
    %v1040 = vld [vmem:[#allocation4 + $0x120] sm:$0xff]
    %v1041 = vld [vmem:[#allocation4 + $0x128] sm:$0xff]
    %v1042 = vld [vmem:[#allocation4 + $0x130] sm:$0xff]
    %v1043 = vld [vmem:[#allocation4 + $0x138] sm:$0xff]
    %v1044 = vld [vmem:[#allocation4 + $0x140] sm:$0xff]
    %v1045 = vld [vmem:[#allocation4 + $0x148] sm:$0xff]
    %v1046 = vld [vmem:[#allocation4 + $0x150] sm:$0xff]
    %v1047 = vld [vmem:[#allocation4 + $0x158] sm:$0xff]
    %v1048 = vld [vmem:[#allocation4 + $0x160] sm:$0xff]
    %v1049 = vld [vmem:[#allocation4 + $0x168] sm:$0xff]
    %v1050 = vld [vmem:[#allocation4 + $0x170] sm:$0xff]
    %v1051 = vld [vmem:[#allocation4 + $0x178] sm:$0xff]
    %v1052 = vld [vmem:[%s9] sm:$0x3]
    %v1054 = vlaneseq
    %v1055 = vshrl.u32 %v1054, 7
    %v1056 = vsub.s32 0, %v1055
    %v1057 = vrot.slane %v1052, %v1056
    %v1058 = vlaneseq
    %v1059 = vshrl.u32 %v1058, 7
    %v1060 = vsub.s32 1, %v1059
    %v1061 = vrot.slane %v1052, %v1060
    %v1112 = vunpack.c.l.b16 %v1004
    %v1113 = vunpack.c.h.b16 %v1004
    %v1114 = vunpack.c.l.b16 %v1005
    %v1115 = vunpack.c.h.b16 %v1005
    %v1116 = vunpack.c.l.b16 %v1006
    %v1117 = vunpack.c.h.b16 %v1006
    %v1118 = vunpack.c.l.b16 %v1007
    %v1119 = vunpack.c.h.b16 %v1007
    %v1120 = vunpack.c.l.b16 %v1008
    %v1121 = vunpack.c.h.b16 %v1008
    %v1122 = vunpack.c.l.b16 %v1009
    %v1123 = vunpack.c.h.b16 %v1009
    %v1124 = vunpack.c.l.b16 %v1010
    %v1125 = vunpack.c.h.b16 %v1010
    %v1126 = vunpack.c.l.b16 %v1011
    %v1127 = vunpack.c.h.b16 %v1011
    %v1128 = vunpack.c.l.b16 %v1012
    %v1129 = vunpack.c.h.b16 %v1012
    %v1130 = vunpack.c.l.b16 %v1013
    %v1131 = vunpack.c.h.b16 %v1013
    %v1132 = vunpack.c.l.b16 %v1014
    %v1133 = vunpack.c.h.b16 %v1014
    %v1134 = vunpack.c.l.b16 %v1015
    %v1135 = vunpack.c.h.b16 %v1015
    %v1136 = vunpack.c.l.b16 %v1016
    %v1137 = vunpack.c.h.b16 %v1016
    %v1138 = vunpack.c.l.b16 %v1017
    %v1139 = vunpack.c.h.b16 %v1017
    %v1140 = vunpack.c.l.b16 %v1018
    %v1141 = vunpack.c.h.b16 %v1018
    %v1142 = vunpack.c.l.b16 %v1019
    %v1143 = vunpack.c.h.b16 %v1019
    %v1144 = vunpack.c.l.b16 %v1020
    %v1145 = vunpack.c.h.b16 %v1020
    %v1146 = vunpack.c.l.b16 %v1021
    %v1147 = vunpack.c.h.b16 %v1021
    %v1148 = vunpack.c.l.b16 %v1022
    %v1149 = vunpack.c.h.b16 %v1022
    %v1150 = vunpack.c.l.b16 %v1023
    %v1151 = vunpack.c.h.b16 %v1023
    %v1152 = vunpack.c.l.b16 %v1024
    %v1153 = vunpack.c.h.b16 %v1024
    %v1154 = vunpack.c.l.b16 %v1025
    %v1155 = vunpack.c.h.b16 %v1025
    %v1156 = vunpack.c.l.b16 %v1026
    %v1157 = vunpack.c.h.b16 %v1026
    %v1158 = vunpack.c.l.b16 %v1027
    %v1159 = vunpack.c.h.b16 %v1027
    %v1160 = vunpack.c.l.b16 %v1028
    %v1161 = vunpack.c.h.b16 %v1028
    %v1162 = vunpack.c.l.b16 %v1029
    %v1163 = vunpack.c.h.b16 %v1029
    %v1164 = vunpack.c.l.b16 %v1030
    %v1165 = vunpack.c.h.b16 %v1030
    %v1166 = vunpack.c.l.b16 %v1031
    %v1167 = vunpack.c.h.b16 %v1031
    %v1168 = vunpack.c.l.b16 %v1032
    %v1169 = vunpack.c.h.b16 %v1032
    %v1170 = vunpack.c.l.b16 %v1033
    %v1171 = vunpack.c.h.b16 %v1033
    %v1172 = vunpack.c.l.b16 %v1034
    %v1173 = vunpack.c.h.b16 %v1034
    %v1174 = vunpack.c.l.b16 %v1035
    %v1175 = vunpack.c.h.b16 %v1035
    %v1176 = vunpack.c.l.b16 %v1036
    %v1177 = vunpack.c.h.b16 %v1036
    %v1178 = vunpack.c.l.b16 %v1037
    %v1179 = vunpack.c.h.b16 %v1037
    %v1180 = vunpack.c.l.b16 %v1038
    %v1181 = vunpack.c.h.b16 %v1038
    %v1182 = vunpack.c.l.b16 %v1039
    %v1183 = vunpack.c.h.b16 %v1039
    %v1184 = vunpack.c.l.b16 %v1040
    %v1185 = vunpack.c.h.b16 %v1040
    %v1186 = vunpack.c.l.b16 %v1041
    %v1187 = vunpack.c.h.b16 %v1041
    %v1188 = vunpack.c.l.b16 %v1042
    %v1189 = vunpack.c.h.b16 %v1042
    %v1190 = vunpack.c.l.b16 %v1043
    %v1191 = vunpack.c.h.b16 %v1043
    %v1192 = vunpack.c.l.b16 %v1044
    %v1193 = vunpack.c.h.b16 %v1044
    %v1194 = vunpack.c.l.b16 %v1045
    %v1195 = vunpack.c.h.b16 %v1045
    %v1196 = vunpack.c.l.b16 %v1046
    %v1197 = vunpack.c.h.b16 %v1046
    %v1198 = vunpack.c.l.b16 %v1047
    %v1199 = vunpack.c.h.b16 %v1047
    %v1200 = vunpack.c.l.b16 %v1048
    %v1201 = vunpack.c.h.b16 %v1048
    %v1202 = vunpack.c.l.b16 %v1049
    %v1203 = vunpack.c.h.b16 %v1049
    %v1204 = vunpack.c.l.b16 %v1050
    %v1205 = vunpack.c.h.b16 %v1050
    %v1206 = vunpack.c.l.b16 %v1051
    %v1207 = vunpack.c.h.b16 %v1051
    %v1208 = vpack.c.b16 %v1114, %v1112
    %v1209 = vpack.c.b16 %v1115, %v1113
    %v1210 = vpack.c.b16 %v1118, %v1116
    %v1211 = vpack.c.b16 %v1119, %v1117
    %v1212 = vpack.c.b16 %v1122, %v1120
    %v1213 = vpack.c.b16 %v1123, %v1121
    %v1214 = vpack.c.b16 %v1126, %v1124
    %v1215 = vpack.c.b16 %v1127, %v1125
    %v1216 = vpack.c.b16 %v1130, %v1128
    %v1217 = vpack.c.b16 %v1131, %v1129
    %v1218 = vpack.c.b16 %v1134, %v1132
    %v1219 = vpack.c.b16 %v1135, %v1133
    %v1220 = vpack.c.b16 %v1138, %v1136
    %v1221 = vpack.c.b16 %v1139, %v1137
    %v1222 = vpack.c.b16 %v1142, %v1140
    %v1223 = vpack.c.b16 %v1143, %v1141
    %v1224 = vpack.c.b16 %v1146, %v1144
    %v1225 = vpack.c.b16 %v1147, %v1145
    %v1226 = vpack.c.b16 %v1150, %v1148
    %v1227 = vpack.c.b16 %v1151, %v1149
    %v1228 = vpack.c.b16 %v1154, %v1152
    %v1229 = vpack.c.b16 %v1155, %v1153
    %v1230 = vpack.c.b16 %v1158, %v1156
    %v1231 = vpack.c.b16 %v1159, %v1157
    %v1232 = vpack.c.b16 %v1162, %v1160
    %v1233 = vpack.c.b16 %v1163, %v1161
    %v1234 = vpack.c.b16 %v1166, %v1164
    %v1235 = vpack.c.b16 %v1167, %v1165
    %v1236 = vpack.c.b16 %v1170, %v1168
    %v1237 = vpack.c.b16 %v1171, %v1169
    %v1238 = vpack.c.b16 %v1174, %v1172
    %v1239 = vpack.c.b16 %v1175, %v1173
    %v1240 = vpack.c.b16 %v1178, %v1176
    %v1241 = vpack.c.b16 %v1179, %v1177
    %v1242 = vpack.c.b16 %v1182, %v1180
    %v1243 = vpack.c.b16 %v1183, %v1181
    %v1244 = vpack.c.b16 %v1186, %v1184
    %v1245 = vpack.c.b16 %v1187, %v1185
    %v1246 = vpack.c.b16 %v1190, %v1188
    %v1247 = vpack.c.b16 %v1191, %v1189
    %v1248 = vpack.c.b16 %v1194, %v1192
    %v1249 = vpack.c.b16 %v1195, %v1193
    %v1250 = vpack.c.b16 %v1198, %v1196
    %v1251 = vpack.c.b16 %v1199, %v1197
    %v1252 = vpack.c.b16 %v1202, %v1200
    %v1253 = vpack.c.b16 %v1203, %v1201
    %v1254 = vpack.c.b16 %v1206, %v1204
    %v1255 = vpack.c.b16 %v1207, %v1205
    %1304 = vmatprep.subr.bf16.mxu0 %v1223
    %1305 = vmatpush1.bf16.msra.mxu0 %v1222
    %1306 = vmatprep.subr.bf16.mxu0 %v1221
    %1307 = vmatpush1.bf16.msra.mxu0 %v1220
    %1308 = vmatprep.subr.bf16.mxu0 %v1219
    %1309 = vmatpush1.bf16.msra.mxu0 %v1218
    %1310 = vmatprep.subr.bf16.mxu0 %v1217
    %1311 = vmatpush1.bf16.msra.mxu0 %v1216
    %1312 = vmatprep.subr.bf16.mxu0 %v1215
    %1313 = vmatpush1.bf16.msra.mxu0 %v1214
    %1314 = vmatprep.subr.bf16.mxu0 %v1213
    %1315 = vmatpush1.bf16.msra.mxu0 %v1212
    %1316 = vmatprep.subr.bf16.mxu0 %v1211
    %1317 = vmatpush1.bf16.msra.mxu0 %v1210
    %1318 = vmatprep.subr.bf16.mxu0 %v1209
    %1319 = vmatpush1.bf16.msra.mxu0 %v1208
    %1320 = vmatprep.subr.bf16.mxu0 %v1239
    %1321 = vmatpush2.bf16.msra.mxu0 %v1238
    %1322 = vmatprep.subr.bf16.mxu0 %v1237
    %1323 = vmatpush2.bf16.msra.mxu0 %v1236
    %1324 = vmatprep.subr.bf16.mxu0 %v1235
    %1325 = vmatpush2.bf16.msra.mxu0 %v1234
    %1326 = vmatprep.subr.bf16.mxu0 %v1233
    %1327 = vmatpush2.bf16.msra.mxu0 %v1232
    %1328 = vmatprep.subr.bf16.mxu0 %v1231
    %1329 = vmatpush2.bf16.msra.mxu0 %v1230
    %1330 = vmatprep.subr.bf16.mxu0 %v1229
    %1331 = vmatpush2.bf16.msra.mxu0 %v1228
    %1332 = vmatprep.subr.bf16.mxu0 %v1227
    %1333 = vmatpush2.bf16.msra.mxu0 %v1226
    %1334 = vmatprep.subr.bf16.mxu0 %v1225
    %1335 = vmatpush2.bf16.msra.mxu0 %v1224
    %1336 = vmatprep.mubr.bf16.mxu0 %v1002
    %1337 = vmatmul.mubr.bf16.gmra.mxu0 %v1001
    %v1338 = vpop.f32.mrf.mxu0
    %v1339 = vadd.f32 %v1057, %v1338
    %v1340 = vpop.f32.mrf.mxu0
    %v1341 = vadd.f32 %v1061, %v1340
    %v1342 = vpop.f32.mrf.mxu0
    %v1343 = vadd.f32 %v1057, %v1342
    %v1344 = vpop.f32.mrf.mxu0
    %v1345 = vadd.f32 %v1061, %v1344
    %1346 = vdwg.mxu0
    %1347 = vmatprep.subr.bf16.mxu0 %v1255
    %1348 = vmatpush1.bf16.msra.mxu0 %v1254
    %1349 = vmatprep.subr.bf16.mxu0 %v1253
    %1350 = vmatpush1.bf16.msra.mxu0 %v1252
    %1351 = vmatprep.subr.bf16.mxu0 %v1251
    %1352 = vmatpush1.bf16.msra.mxu0 %v1250
    %1353 = vmatprep.subr.bf16.mxu0 %v1249
    %1354 = vmatpush1.bf16.msra.mxu0 %v1248
    %1355 = vmatprep.subr.bf16.mxu0 %v1247
    %1356 = vmatpush1.bf16.msra.mxu0 %v1246
    %1357 = vmatprep.subr.bf16.mxu0 %v1245
    %1358 = vmatpush1.bf16.msra.mxu0 %v1244
    %1359 = vmatprep.subr.bf16.mxu0 %v1243
    %1360 = vmatpush1.bf16.msra.mxu0 %v1242
    %1361 = vmatprep.subr.bf16.mxu0 %v1241
    %1362 = vmatpush1.bf16.msra.mxu0 %v1240
    %1363 = vmatprep.subr.bf16.mxu0 0
    %1364 = vmatpush2.bf16.msra.mxu0 0
    %1365 = vmatprep.subr.bf16.mxu0 0
    %1366 = vmatpush2.bf16.msra.mxu0 0
    %1367 = vmatprep.subr.bf16.mxu0 0
    %1368 = vmatpush2.bf16.msra.mxu0 0
    %1369 = vmatprep.subr.bf16.mxu0 0
    %1370 = vmatpush2.bf16.msra.mxu0 0
    %1371 = vmatprep.subr.bf16.mxu0 0
    %1372 = vmatpush2.bf16.msra.mxu0 0
    %1373 = vmatprep.subr.bf16.mxu0 0
    %1374 = vmatpush2.bf16.msra.mxu0 0
    %1375 = vmatprep.subr.bf16.mxu0 0
    %1376 = vmatpush2.bf16.msra.mxu0 0
    %1377 = vmatprep.subr.bf16.mxu0 0
    %1378 = vmatpush2.bf16.msra.mxu0 0
    %1379 = vmatprep.mubr.bf16.mxu0 0
    %1380 = vmatmul.mubr.bf16.gmra.mxu0 %v1003
    %v1381 = vpop.f32.mrf.mxu0
    %v1382 = vadd.f32 %v1339, %v1381
    %v1383 = vpop.f32.mrf.mxu0
    %v1384 = vadd.f32 %v1341, %v1383
    %v1385 = vpop.f32.mrf.mxu0
    %v1386 = vadd.f32 %v1343, %v1385
    %v1387 = vpop.f32.mrf.mxu0
    %v1388 = vadd.f32 %v1345, %v1387
    %1389 = vdwg.mxu0
    %v1390 = vmax.f32 %v1382, 0.0
    %v1391 = vmax.f32 %v1384, 0.0
    %v1392 = vmax.f32 %v1386, 0.0
    %v1393 = vmax.f32 %v1388, 0.0
    %v1394 = vpack.c.bf16 %v1392, %v1390
    %v1395 = vpack.c.bf16 %v1393, %v1391
    %v1396 = vld [vmem:[#allocation6] sm:$0xf]
    %v1397 = vld [vmem:[#allocation6 + $0x4] sm:$0xf]
    %v1398 = vld [vmem:[#allocation6 + $0x8] sm:$0xf]
    %v1399 = vld [vmem:[#allocation6 + $0xc] sm:$0xf]
    %v1400 = vld [vmem:[#allocation6 + $0x10] sm:$0xf]
    %v1401 = vld [vmem:[#allocation6 + $0x14] sm:$0xf]
    %v1402 = vld [vmem:[#allocation6 + $0x18] sm:$0xf]
    %v1403 = vld [vmem:[#allocation6 + $0x1c] sm:$0xf]
    %v1404 = vld [vmem:[#allocation6 + $0x20] sm:$0xf]
    %v1405 = vld [vmem:[#allocation6 + $0x24] sm:$0xf]
    %v1406 = vld [vmem:[#allocation6 + $0x28] sm:$0xf]
    %v1407 = vld [vmem:[#allocation6 + $0x2c] sm:$0xf]
    %v1408 = vld [vmem:[#allocation6 + $0x30] sm:$0xf]
    %v1409 = vld [vmem:[#allocation6 + $0x34] sm:$0xf]
    %v1410 = vld [vmem:[#allocation6 + $0x38] sm:$0xf]
    %v1411 = vld [vmem:[#allocation6 + $0x3c] sm:$0xf]
    %v1412 = vld [vmem:[#allocation6 + $0x40] sm:$0xf]
    %v1413 = vld [vmem:[#allocation6 + $0x44] sm:$0xf]
    %v1414 = vld [vmem:[#allocation6 + $0x48] sm:$0xf]
    %v1415 = vld [vmem:[#allocation6 + $0x4c] sm:$0xf]
    %v1416 = vld [vmem:[#allocation6 + $0x50] sm:$0xf]
    %v1417 = vld [vmem:[#allocation6 + $0x54] sm:$0xf]
    %v1418 = vld [vmem:[#allocation6 + $0x58] sm:$0xf]
    %v1419 = vld [vmem:[#allocation6 + $0x5c] sm:$0xf]
    %v1420 = vld [vmem:[#allocation6 + $0x60] sm:$0xf]
    %v1421 = vld [vmem:[#allocation6 + $0x64] sm:$0xf]
    %v1422 = vld [vmem:[#allocation6 + $0x68] sm:$0xf]
    %v1423 = vld [vmem:[#allocation6 + $0x6c] sm:$0xf]
    %v1424 = vld [vmem:[#allocation6 + $0x70] sm:$0xf]
    %v1425 = vld [vmem:[#allocation6 + $0x74] sm:$0xf]
    %v1426 = vld [vmem:[#allocation6 + $0x78] sm:$0xf]
    %v1427 = vld [vmem:[#allocation6 + $0x7c] sm:$0xf]
    %v1428 = vld [vmem:[%s10] sm:$0x1]
    %v1430 = vlaneseq
    %v1431 = vshrl.u32 %v1430, 7
    %v1432 = vsub.s32 0, %v1431
    %v1433 = vrot.slane %v1428, %v1432
    %v1467 = vunpack.c.l.b16 %v1396
    %v1468 = vunpack.c.l.b16 %v1397
    %v1469 = vunpack.c.l.b16 %v1398
    %v1470 = vunpack.c.l.b16 %v1399
    %v1471 = vunpack.c.l.b16 %v1400
    %v1472 = vunpack.c.l.b16 %v1401
    %v1473 = vunpack.c.l.b16 %v1402
    %v1474 = vunpack.c.l.b16 %v1403
    %v1475 = vunpack.c.l.b16 %v1404
    %v1476 = vunpack.c.l.b16 %v1405
    %v1477 = vunpack.c.l.b16 %v1406
    %v1478 = vunpack.c.l.b16 %v1407
    %v1479 = vunpack.c.l.b16 %v1408
    %v1480 = vunpack.c.l.b16 %v1409
    %v1481 = vunpack.c.l.b16 %v1410
    %v1482 = vunpack.c.l.b16 %v1411
    %v1483 = vunpack.c.l.b16 %v1412
    %v1484 = vunpack.c.l.b16 %v1413
    %v1485 = vunpack.c.l.b16 %v1414
    %v1486 = vunpack.c.l.b16 %v1415
    %v1487 = vunpack.c.l.b16 %v1416
    %v1488 = vunpack.c.l.b16 %v1417
    %v1489 = vunpack.c.l.b16 %v1418
    %v1490 = vunpack.c.l.b16 %v1419
    %v1491 = vunpack.c.l.b16 %v1420
    %v1492 = vunpack.c.l.b16 %v1421
    %v1493 = vunpack.c.l.b16 %v1422
    %v1494 = vunpack.c.l.b16 %v1423
    %v1495 = vunpack.c.l.b16 %v1424
    %v1496 = vunpack.c.l.b16 %v1425
    %v1497 = vunpack.c.l.b16 %v1426
    %v1498 = vunpack.c.l.b16 %v1427
    %v1499 = vpack.c.b16 %v1468, %v1467
    %v1500 = vpack.c.b16 %v1470, %v1469
    %v1501 = vpack.c.b16 %v1472, %v1471
    %v1502 = vpack.c.b16 %v1474, %v1473
    %v1503 = vpack.c.b16 %v1476, %v1475
    %v1504 = vpack.c.b16 %v1478, %v1477
    %v1505 = vpack.c.b16 %v1480, %v1479
    %v1506 = vpack.c.b16 %v1482, %v1481
    %v1507 = vpack.c.b16 %v1484, %v1483
    %v1508 = vpack.c.b16 %v1486, %v1485
    %v1509 = vpack.c.b16 %v1488, %v1487
    %v1510 = vpack.c.b16 %v1490, %v1489
    %v1511 = vpack.c.b16 %v1492, %v1491
    %v1512 = vpack.c.b16 %v1494, %v1493
    %v1513 = vpack.c.b16 %v1496, %v1495
    %v1514 = vpack.c.b16 %v1498, %v1497
    %1531 = vmatprep.subr.bf16.mxu0 0
    %1532 = vmatpush1.bf16.msra.mxu0 %v1506
    %1533 = vmatprep.subr.bf16.mxu0 0
    %1534 = vmatpush1.bf16.msra.mxu0 %v1505
    %1535 = vmatprep.subr.bf16.mxu0 0
    %1536 = vmatpush1.bf16.msra.mxu0 %v1504
    %1537 = vmatprep.subr.bf16.mxu0 0
    %1538 = vmatpush1.bf16.msra.mxu0 %v1503
    %1539 = vmatprep.subr.bf16.mxu0 0
    %1540 = vmatpush1.bf16.msra.mxu0 %v1502
    %1541 = vmatprep.subr.bf16.mxu0 0
    %1542 = vmatpush1.bf16.msra.mxu0 %v1501
    %1543 = vmatprep.subr.bf16.mxu0 0
    %1544 = vmatpush1.bf16.msra.mxu0 %v1500
    %1545 = vmatprep.subr.bf16.mxu0 0
    %1546 = vmatpush1.bf16.msra.mxu0 %v1499
    %1547 = vmatprep.subr.bf16.mxu0 0
    %1548 = vmatpush2.bf16.msra.mxu0 %v1514
    %1549 = vmatprep.subr.bf16.mxu0 0
    %1550 = vmatpush2.bf16.msra.mxu0 %v1513
    %1551 = vmatprep.subr.bf16.mxu0 0
    %1552 = vmatpush2.bf16.msra.mxu0 %v1512
    %1553 = vmatprep.subr.bf16.mxu0 0
    %1554 = vmatpush2.bf16.msra.mxu0 %v1511
    %1555 = vmatprep.subr.bf16.mxu0 0
    %1556 = vmatpush2.bf16.msra.mxu0 %v1510
    %1557 = vmatprep.subr.bf16.mxu0 0
    %1558 = vmatpush2.bf16.msra.mxu0 %v1509
    %1559 = vmatprep.subr.bf16.mxu0 0
    %1560 = vmatpush2.bf16.msra.mxu0 %v1508
    %1561 = vmatprep.subr.bf16.mxu0 0
    %1562 = vmatpush2.bf16.msra.mxu0 %v1507
    %1563 = vmatprep.mubr.bf16.mxu0 %v1395
    %1564 = vmatmul.mubr.bf16.gmra.mxu0 %v1394
    %v1565 = vpop.f32.mrf.mxu0
    %v1566 = vadd.f32 %v1433, %v1565
    %v1567 = vpop.f32.mrf.mxu0
    %v1568 = vpop.f32.mrf.mxu0
    %v1569 = vadd.f32 %v1433, %v1568
    %v1570 = vpop.f32.mrf.mxu0
    %1571 = vdwg.mxu0
    %v1572 = vmax.f32 %v1566, 0.0
    %v1573 = vmax.f32 %v1569, 0.0
    %v1574 = vpack.c.bf16 %v1573, %v1572
    %v1575 = vld [vmem:[#allocation7] sm:$0xf]
    %v1576 = vld [vmem:[#allocation7 + $0x4] sm:$0xf]
    %v1577 = vld [vmem:[#allocation7 + $0x8] sm:$0xf]
    %v1578 = vld [vmem:[#allocation7 + $0xc] sm:$0xf]
    %v1579 = vld [vmem:[#allocation7 + $0x10] sm:$0xf]
    %v1580 = vld [vmem:[#allocation7 + $0x14] sm:$0xf]
    %v1581 = vld [vmem:[#allocation7 + $0x18] sm:$0xf]
    %v1582 = vld [vmem:[#allocation7 + $0x1c] sm:$0xf]
    %v1583 = vld [vmem:[#allocation7 + $0x20] sm:$0xf]
    %v1584 = vld [vmem:[#allocation7 + $0x24] sm:$0xf]
    %v1585 = vld [vmem:[#allocation7 + $0x28] sm:$0xf]
    %v1586 = vld [vmem:[#allocation7 + $0x2c] sm:$0xf]
    %v1587 = vld [vmem:[#allocation7 + $0x30] sm:$0xf]
    %v1588 = vld [vmem:[#allocation7 + $0x34] sm:$0xf]
    %v1589 = vld [vmem:[#allocation7 + $0x38] sm:$0xf]
    %v1590 = vld [vmem:[#allocation7 + $0x3c] sm:$0xf]
    %v1591 = vld [vmem:[%s11] sm:$0x1]
    %v1593 = vlaneseq
    %v1594 = vshrl.u32 %v1593, 7
    %v1595 = vsub.s32 0, %v1594
    %v1596 = vrot.slane %v1591, %v1595
    %v1614 = vunpack.c.l.b16 %v1575
    %v1615 = vunpack.c.l.b16 %v1576
    %v1616 = vunpack.c.l.b16 %v1577
    %v1617 = vunpack.c.l.b16 %v1578
    %v1618 = vunpack.c.l.b16 %v1579
    %v1619 = vunpack.c.l.b16 %v1580
    %v1620 = vunpack.c.l.b16 %v1581
    %v1621 = vunpack.c.l.b16 %v1582
    %v1622 = vunpack.c.l.b16 %v1583
    %v1623 = vunpack.c.l.b16 %v1584
    %v1624 = vunpack.c.l.b16 %v1585
    %v1625 = vunpack.c.l.b16 %v1586
    %v1626 = vunpack.c.l.b16 %v1587
    %v1627 = vunpack.c.l.b16 %v1588
    %v1628 = vunpack.c.l.b16 %v1589
    %v1629 = vunpack.c.l.b16 %v1590
    %v1630 = vpack.c.b16 %v1615, %v1614
    %v1631 = vpack.c.b16 %v1617, %v1616
    %v1632 = vpack.c.b16 %v1619, %v1618
    %v1633 = vpack.c.b16 %v1621, %v1620
    %v1634 = vpack.c.b16 %v1623, %v1622
    %v1635 = vpack.c.b16 %v1625, %v1624
    %v1636 = vpack.c.b16 %v1627, %v1626
    %v1637 = vpack.c.b16 %v1629, %v1628
    %1646 = vmatprep.subr.bf16.mxu0 0
    %1647 = vmatpush1.bf16.msra.mxu0 %v1637
    %1648 = vmatprep.subr.bf16.mxu0 0
    %1649 = vmatpush1.bf16.msra.mxu0 %v1636
    %1650 = vmatprep.subr.bf16.mxu0 0
    %1651 = vmatpush1.bf16.msra.mxu0 %v1635
    %1652 = vmatprep.subr.bf16.mxu0 0
    %1653 = vmatpush1.bf16.msra.mxu0 %v1634
    %1654 = vmatprep.subr.bf16.mxu0 0
    %1655 = vmatpush1.bf16.msra.mxu0 %v1633
    %1656 = vmatprep.subr.bf16.mxu0 0
    %1657 = vmatpush1.bf16.msra.mxu0 %v1632
    %1658 = vmatprep.subr.bf16.mxu0 0
    %1659 = vmatpush1.bf16.msra.mxu0 %v1631
    %1660 = vmatprep.subr.bf16.mxu0 0
    %1661 = vmatpush1.bf16.msra.mxu0 %v1630
    %1662 = vmatprep.subr.bf16.mxu0 0
    %1663 = vmatpush2.bf16.msra.mxu0 0
    %1664 = vmatprep.subr.bf16.mxu0 0
    %1665 = vmatpush2.bf16.msra.mxu0 0
    %1666 = vmatprep.subr.bf16.mxu0 0
    %1667 = vmatpush2.bf16.msra.mxu0 0
    %1668 = vmatprep.subr.bf16.mxu0 0
    %1669 = vmatpush2.bf16.msra.mxu0 0
    %1670 = vmatprep.subr.bf16.mxu0 0
    %1671 = vmatpush2.bf16.msra.mxu0 0
    %1672 = vmatprep.subr.bf16.mxu0 0
    %1673 = vmatpush2.bf16.msra.mxu0 0
    %1674 = vmatprep.subr.bf16.mxu0 0
    %1675 = vmatpush2.bf16.msra.mxu0 0
    %1676 = vmatprep.subr.bf16.mxu0 0
    %1677 = vmatpush2.bf16.msra.mxu0 0
    %1678 = vmatprep.mubr.bf16.mxu0 0
    %1679 = vmatmul.mubr.bf16.gmra.mxu0 %v1574
    %v1680 = vpop.f32.mrf.mxu0
    %v1681 = vadd.f32 %v1596, %v1680
    %v1682 = vpop.f32.mrf.mxu0
    %v1683 = vpop.f32.mrf.mxu0
    %v1684 = vadd.f32 %v1596, %v1683
    %v1685 = vpop.f32.mrf.mxu0
    %1686 = vdwg.mxu0
    %v1687 = vmax.f32 %v1681, 0.0
    %v1688 = vmax.f32 %v1684, 0.0
    %v1689 = vmin.f32 %v1687, 6.0
    %v1690 = vmin.f32 %v1688, 6.0
    %v1691 = vpack.c.bf16 %v1690, %v1689
    %v1692 = vld [vmem:[#allocation9] sm:$0xf]
    %v1693 = vld [vmem:[#allocation9 + $0x4] sm:$0xf]
    %v1694 = vld [vmem:[#allocation9 + $0x8] sm:$0xf]
    %v1695 = vld [vmem:[#allocation9 + $0xc] sm:$0xf]
    %v1696 = vld [vmem:[#allocation9 + $0x10] sm:$0xf]
    %v1697 = vld [vmem:[#allocation9 + $0x14] sm:$0xf]
    %v1698 = vld [vmem:[#allocation9 + $0x18] sm:$0xf]
    %v1699 = vld [vmem:[#allocation9 + $0x1c] sm:$0xf]
    %v1700 = vld [vmem:[#allocation9 + $0x20] sm:$0xf]
    %v1701 = vld [vmem:[#allocation9 + $0x24] sm:$0xf]
    %v1702 = vld [vmem:[#allocation9 + $0x28] sm:$0xf]
    %v1703 = vld [vmem:[#allocation9 + $0x2c] sm:$0xf]
    %v1704 = vld [vmem:[#allocation9 + $0x30] sm:$0xf]
    %v1705 = vld [vmem:[#allocation9 + $0x34] sm:$0xf]
    %v1706 = vld [vmem:[#allocation9 + $0x38] sm:$0xf]
    %v1707 = vld [vmem:[#allocation9 + $0x3c] sm:$0xf]
    %v1708 = vld [vmem:[%s12] sm:$0x1]
    %v1710 = vlaneseq
    %v1711 = vshrl.u32 %v1710, 7
    %v1712 = vsub.s32 0, %v1711
    %v1713 = vrot.slane %v1708, %v1712
    %v1731 = vunpack.c.l.b16 %v1692
    %v1732 = vunpack.c.l.b16 %v1693
    %v1733 = vunpack.c.l.b16 %v1694
    %v1734 = vunpack.c.l.b16 %v1695
    %v1735 = vunpack.c.l.b16 %v1696
    %v1736 = vunpack.c.l.b16 %v1697
    %v1737 = vunpack.c.l.b16 %v1698
    %v1738 = vunpack.c.l.b16 %v1699
    %v1739 = vunpack.c.l.b16 %v1700
    %v1740 = vunpack.c.l.b16 %v1701
    %v1741 = vunpack.c.l.b16 %v1702
    %v1742 = vunpack.c.l.b16 %v1703
    %v1743 = vunpack.c.l.b16 %v1704
    %v1744 = vunpack.c.l.b16 %v1705
    %v1745 = vunpack.c.l.b16 %v1706
    %v1746 = vunpack.c.l.b16 %v1707
    %v1747 = vpack.c.b16 %v1732, %v1731
    %v1748 = vpack.c.b16 %v1734, %v1733
    %v1749 = vpack.c.b16 %v1736, %v1735
    %v1750 = vpack.c.b16 %v1738, %v1737
    %v1751 = vpack.c.b16 %v1740, %v1739
    %v1752 = vpack.c.b16 %v1742, %v1741
    %v1753 = vpack.c.b16 %v1744, %v1743
    %v1754 = vpack.c.b16 %v1746, %v1745
    %1763 = vmatprep.subr.bf16.mxu0 0
    %1764 = vmatpush1.bf16.msra.mxu0 %v1754
    %1765 = vmatprep.subr.bf16.mxu0 0
    %1766 = vmatpush1.bf16.msra.mxu0 %v1753
    %1767 = vmatprep.subr.bf16.mxu0 0
    %1768 = vmatpush1.bf16.msra.mxu0 %v1752
    %1769 = vmatprep.subr.bf16.mxu0 0
    %1770 = vmatpush1.bf16.msra.mxu0 %v1751
    %1771 = vmatprep.subr.bf16.mxu0 0
    %1772 = vmatpush1.bf16.msra.mxu0 %v1750
    %1773 = vmatprep.subr.bf16.mxu0 0
    %1774 = vmatpush1.bf16.msra.mxu0 %v1749
    %1775 = vmatprep.subr.bf16.mxu0 0
    %1776 = vmatpush1.bf16.msra.mxu0 %v1748
    %1777 = vmatprep.subr.bf16.mxu0 0
    %1778 = vmatpush1.bf16.msra.mxu0 %v1747
    %1779 = vmatprep.subr.bf16.mxu0 0
    %1780 = vmatpush2.bf16.msra.mxu0 0
    %1781 = vmatprep.subr.bf16.mxu0 0
    %1782 = vmatpush2.bf16.msra.mxu0 0
    %1783 = vmatprep.subr.bf16.mxu0 0
    %1784 = vmatpush2.bf16.msra.mxu0 0
    %1785 = vmatprep.subr.bf16.mxu0 0
    %1786 = vmatpush2.bf16.msra.mxu0 0
    %1787 = vmatprep.subr.bf16.mxu0 0
    %1788 = vmatpush2.bf16.msra.mxu0 0
    %1789 = vmatprep.subr.bf16.mxu0 0
    %1790 = vmatpush2.bf16.msra.mxu0 0
    %1791 = vmatprep.subr.bf16.mxu0 0
    %1792 = vmatpush2.bf16.msra.mxu0 0
    %1793 = vmatprep.subr.bf16.mxu0 0
    %1794 = vmatpush2.bf16.msra.mxu0 0
    %1795 = vmatprep.mubr.bf16.mxu0 0
    %1796 = vmatmul.mubr.bf16.gmra.mxu0 %v1691
    %v1797 = vpop.f32.mrf.mxu0
    %v1798 = vadd.f32 %v1713, %v1797
    %v1799 = vpop.f32.mrf.mxu0
    %v1800 = vpop.f32.mrf.mxu0
    %v1801 = vadd.f32 %v1713, %v1800
    %v1802 = vpop.f32.mrf.mxu0
    %1803 = vdwg.mxu0
    %v1804 = vmax.f32 %v1798, 0.0
    %v1805 = vmax.f32 %v1801, 0.0
    %v1806 = vmin.f32 %v1804, 6.0
    %v1807 = vmin.f32 %v1805, 6.0
    %v1808 = vpack.c.bf16 %v1807, %v1806
    %v1809 = vld [vmem:[#allocation10] sm:$0xf]
    %v1810 = vld [vmem:[#allocation10 + $0x4] sm:$0xf]
    %v1811 = vld [vmem:[#allocation10 + $0x8] sm:$0xf]
    %v1812 = vld [vmem:[#allocation10 + $0xc] sm:$0xf]
    %v1813 = vld [vmem:[#allocation10 + $0x10] sm:$0xf]
    %v1814 = vld [vmem:[#allocation10 + $0x14] sm:$0xf]
    %v1815 = vld [vmem:[#allocation10 + $0x18] sm:$0xf]
    %v1816 = vld [vmem:[#allocation10 + $0x1c] sm:$0xf]
    %v1817 = vld [vmem:[#allocation10 + $0x20] sm:$0xf]
    %v1818 = vld [vmem:[#allocation10 + $0x24] sm:$0xf]
    %v1819 = vld [vmem:[#allocation10 + $0x28] sm:$0xf]
    %v1820 = vld [vmem:[#allocation10 + $0x2c] sm:$0xf]
    %v1821 = vld [vmem:[#allocation10 + $0x30] sm:$0xf]
    %v1822 = vld [vmem:[#allocation10 + $0x34] sm:$0xf]
    %v1823 = vld [vmem:[#allocation10 + $0x38] sm:$0xf]
    %v1824 = vld [vmem:[#allocation10 + $0x3c] sm:$0xf]
    %v1825 = vld [vmem:[%s13] sm:$0x1]
    %v1827 = vlaneseq
    %v1828 = vshrl.u32 %v1827, 7
    %v1829 = vsub.s32 0, %v1828
    %v1830 = vrot.slane %v1825, %v1829
    %v1848 = vunpack.c.l.b16 %v1809
    %v1849 = vunpack.c.l.b16 %v1810
    %v1850 = vunpack.c.l.b16 %v1811
    %v1851 = vunpack.c.l.b16 %v1812
    %v1852 = vunpack.c.l.b16 %v1813
    %v1853 = vunpack.c.l.b16 %v1814
    %v1854 = vunpack.c.l.b16 %v1815
    %v1855 = vunpack.c.l.b16 %v1816
    %v1856 = vunpack.c.l.b16 %v1817
    %v1857 = vunpack.c.l.b16 %v1818
    %v1858 = vunpack.c.l.b16 %v1819
    %v1859 = vunpack.c.l.b16 %v1820
    %v1860 = vunpack.c.l.b16 %v1821
    %v1861 = vunpack.c.l.b16 %v1822
    %v1862 = vunpack.c.l.b16 %v1823
    %v1863 = vunpack.c.l.b16 %v1824
    %v1864 = vpack.c.b16 %v1849, %v1848
    %v1865 = vpack.c.b16 %v1851, %v1850
    %v1866 = vpack.c.b16 %v1853, %v1852
    %v1867 = vpack.c.b16 %v1855, %v1854
    %v1868 = vpack.c.b16 %v1857, %v1856
    %v1869 = vpack.c.b16 %v1859, %v1858
    %v1870 = vpack.c.b16 %v1861, %v1860
    %v1871 = vpack.c.b16 %v1863, %v1862
    %1880 = vmatprep.subr.bf16.mxu0 0
    %1881 = vmatpush1.bf16.msra.mxu0 %v1871
    %1882 = vmatprep.subr.bf16.mxu0 0
    %1883 = vmatpush1.bf16.msra.mxu0 %v1870
    %1884 = vmatprep.subr.bf16.mxu0 0
    %1885 = vmatpush1.bf16.msra.mxu0 %v1869
    %1886 = vmatprep.subr.bf16.mxu0 0
    %1887 = vmatpush1.bf16.msra.mxu0 %v1868
    %1888 = vmatprep.subr.bf16.mxu0 0
    %1889 = vmatpush1.bf16.msra.mxu0 %v1867
    %1890 = vmatprep.subr.bf16.mxu0 0
    %1891 = vmatpush1.bf16.msra.mxu0 %v1866
    %1892 = vmatprep.subr.bf16.mxu0 0
    %1893 = vmatpush1.bf16.msra.mxu0 %v1865
    %1894 = vmatprep.subr.bf16.mxu0 0
    %1895 = vmatpush1.bf16.msra.mxu0 %v1864
    %1896 = vmatprep.subr.bf16.mxu0 0
    %1897 = vmatpush2.bf16.msra.mxu0 0
    %1898 = vmatprep.subr.bf16.mxu0 0
    %1899 = vmatpush2.bf16.msra.mxu0 0
    %1900 = vmatprep.subr.bf16.mxu0 0
    %1901 = vmatpush2.bf16.msra.mxu0 0
    %1902 = vmatprep.subr.bf16.mxu0 0
    %1903 = vmatpush2.bf16.msra.mxu0 0
    %1904 = vmatprep.subr.bf16.mxu0 0
    %1905 = vmatpush2.bf16.msra.mxu0 0
    %1906 = vmatprep.subr.bf16.mxu0 0
    %1907 = vmatpush2.bf16.msra.mxu0 0
    %1908 = vmatprep.subr.bf16.mxu0 0
    %1909 = vmatpush2.bf16.msra.mxu0 0
    %1910 = vmatprep.subr.bf16.mxu0 0
    %1911 = vmatpush2.bf16.msra.mxu0 0
    %1912 = vmatprep.mubr.bf16.mxu0 0
    %1913 = vmatmul.mubr.bf16.gmra.mxu0 %v1808
    %v1914 = vpop.f32.mrf.mxu0
    %v1915 = vadd.f32 %v1830, %v1914
    %v1916 = vpop.f32.mrf.mxu0
    %v1917 = vpop.f32.mrf.mxu0
    %v1918 = vadd.f32 %v1830, %v1917
    %v1919 = vpop.f32.mrf.mxu0
    %1920 = vdwg.mxu0
    %v1921 = vmax.f32 %v1915, 0.0
    %v1922 = vmax.f32 %v1918, 0.0
    %v1923 = vmin.f32 %v1921, 6.0
    %v1924 = vmin.f32 %v1922, 6.0
    %v1925 = vpack.c.bf16 %v1924, %v1923
    %v1926 = vld [vmem:[#allocation12] sm:$0xf]
    %v1927 = vld [vmem:[#allocation12 + $0x4] sm:$0xf]
    %v1928 = vld [vmem:[#allocation12 + $0x8] sm:$0xf]
    %v1929 = vld [vmem:[#allocation12 + $0xc] sm:$0xf]
    %v1930 = vld [vmem:[#allocation12 + $0x10] sm:$0xf]
    %v1931 = vld [vmem:[#allocation12 + $0x14] sm:$0xf]
    %v1932 = vld [vmem:[#allocation12 + $0x18] sm:$0xf]
    %v1933 = vld [vmem:[#allocation12 + $0x1c] sm:$0xf]
    %v1934 = vld [vmem:[#allocation12 + $0x20] sm:$0xf]
    %v1935 = vld [vmem:[#allocation12 + $0x24] sm:$0xf]
    %v1936 = vld [vmem:[#allocation12 + $0x28] sm:$0xf]
    %v1937 = vld [vmem:[#allocation12 + $0x2c] sm:$0xf]
    %v1938 = vld [vmem:[#allocation12 + $0x30] sm:$0xf]
    %v1939 = vld [vmem:[#allocation12 + $0x34] sm:$0xf]
    %v1940 = vld [vmem:[#allocation12 + $0x38] sm:$0xf]
    %v1941 = vld [vmem:[#allocation12 + $0x3c] sm:$0xf]
    %v1942 = vld [vmem:[%s14] sm:$0x1]
    %v1944 = vlaneseq
    %v1945 = vshrl.u32 %v1944, 7
    %v1946 = vsub.s32 0, %v1945
    %v1947 = vrot.slane %v1942, %v1946
    %v1965 = vunpack.c.l.b16 %v1926
    %v1966 = vunpack.c.l.b16 %v1927
    %v1967 = vunpack.c.l.b16 %v1928
    %v1968 = vunpack.c.l.b16 %v1929
    %v1969 = vunpack.c.l.b16 %v1930
    %v1970 = vunpack.c.l.b16 %v1931
    %v1971 = vunpack.c.l.b16 %v1932
    %v1972 = vunpack.c.l.b16 %v1933
    %v1973 = vunpack.c.l.b16 %v1934
    %v1974 = vunpack.c.l.b16 %v1935
    %v1975 = vunpack.c.l.b16 %v1936
    %v1976 = vunpack.c.l.b16 %v1937
    %v1977 = vunpack.c.l.b16 %v1938
    %v1978 = vunpack.c.l.b16 %v1939
    %v1979 = vunpack.c.l.b16 %v1940
    %v1980 = vunpack.c.l.b16 %v1941
    %v1981 = vpack.c.b16 %v1966, %v1965
    %v1982 = vpack.c.b16 %v1968, %v1967
    %v1983 = vpack.c.b16 %v1970, %v1969
    %v1984 = vpack.c.b16 %v1972, %v1971
    %v1985 = vpack.c.b16 %v1974, %v1973
    %v1986 = vpack.c.b16 %v1976, %v1975
    %v1987 = vpack.c.b16 %v1978, %v1977
    %v1988 = vpack.c.b16 %v1980, %v1979
    %1997 = vmatprep.subr.bf16.mxu0 0
    %1998 = vmatpush1.bf16.msra.mxu0 %v1988
    %1999 = vmatprep.subr.bf16.mxu0 0
    %2000 = vmatpush1.bf16.msra.mxu0 %v1987
    %2001 = vmatprep.subr.bf16.mxu0 0
    %2002 = vmatpush1.bf16.msra.mxu0 %v1986
    %2003 = vmatprep.subr.bf16.mxu0 0
    %2004 = vmatpush1.bf16.msra.mxu0 %v1985
    %2005 = vmatprep.subr.bf16.mxu0 0
    %2006 = vmatpush1.bf16.msra.mxu0 %v1984
    %2007 = vmatprep.subr.bf16.mxu0 0
    %2008 = vmatpush1.bf16.msra.mxu0 %v1983
    %2009 = vmatprep.subr.bf16.mxu0 0
    %2010 = vmatpush1.bf16.msra.mxu0 %v1982
    %2011 = vmatprep.subr.bf16.mxu0 0
    %2012 = vmatpush1.bf16.msra.mxu0 %v1981
    %2013 = vmatprep.subr.bf16.mxu0 0
    %2014 = vmatpush2.bf16.msra.mxu0 0
    %2015 = vmatprep.subr.bf16.mxu0 0
    %2016 = vmatpush2.bf16.msra.mxu0 0
    %2017 = vmatprep.subr.bf16.mxu0 0
    %2018 = vmatpush2.bf16.msra.mxu0 0
    %2019 = vmatprep.subr.bf16.mxu0 0
    %2020 = vmatpush2.bf16.msra.mxu0 0
    %2021 = vmatprep.subr.bf16.mxu0 0
    %2022 = vmatpush2.bf16.msra.mxu0 0
    %2023 = vmatprep.subr.bf16.mxu0 0
    %2024 = vmatpush2.bf16.msra.mxu0 0
    %2025 = vmatprep.subr.bf16.mxu0 0
    %2026 = vmatpush2.bf16.msra.mxu0 0
    %2027 = vmatprep.subr.bf16.mxu0 0
    %2028 = vmatpush2.bf16.msra.mxu0 0
    %2029 = vmatprep.mubr.bf16.mxu0 0
    %2030 = vmatmul.mubr.bf16.gmra.mxu0 %v1925
    %v2031 = vpop.f32.mrf.mxu0
    %v2032 = vadd.f32 %v1947, %v2031
    %v2033 = vpop.f32.mrf.mxu0
    %v2034 = vpop.f32.mrf.mxu0
    %v2035 = vadd.f32 %v1947, %v2034
    %v2036 = vpop.f32.mrf.mxu0
    %2037 = vdwg.mxu0
    %2038 = vxpose.xlu0.b32.start [1/16] %v2032, 128
    %2039 = vxpose.xlu0.b32.cont [2/16] %v2035, 128
    %2040 = vxpose.xlu0.b32.cont [3/16] 0.0, 128
    %2041 = vxpose.xlu0.b32.cont [4/16] 0.0, 128
    %2042 = vxpose.xlu0.b32.cont [5/16] 0.0, 128
    %2043 = vxpose.xlu0.b32.cont [6/16] 0.0, 128
    %2044 = vxpose.xlu0.b32.cont [7/16] 0.0, 128
    %2045 = vxpose.xlu0.b32.cont [8/16] 0.0, 128
    %2046 = vxpose.xlu0.b32.cont [9/16] 0.0, 128
    %2047 = vxpose.xlu0.b32.cont [10/16] 0.0, 128
    %2048 = vxpose.xlu0.b32.cont [11/16] 0.0, 128
    %2049 = vxpose.xlu0.b32.cont [12/16] 0.0, 128
    %2050 = vxpose.xlu0.b32.cont [13/16] 0.0, 128
    %2051 = vxpose.xlu0.b32.cont [14/16] 0.0, 128
    %2052 = vxpose.xlu0.b32.cont [15/16] 0.0, 128
    %2053 = vxpose.xlu0.b32.end [16/16] 0.0, 128
    %v2054 = vpop.trf.xlu0
    %v2055 = vpop.trf.xlu0
    %v2056 = vpop.trf.xlu0
    %v2057 = vpop.trf.xlu0
    %v2058 = vpop.trf.xlu0
    %v2059 = vpop.trf.xlu0
    %v2060 = vpop.trf.xlu0
    %v2061 = vpop.trf.xlu0
    %v2062 = vpop.trf.xlu0
    %v2063 = vpop.trf.xlu0
    %v2064 = vpop.trf.xlu0
    %v2065 = vpop.trf.xlu0
    %v2066 = vpop.trf.xlu0
    %v2067 = vpop.trf.xlu0
    %v2068 = vpop.trf.xlu0
    %v2069 = vpop.trf.xlu0
    %v2070 = vxor.u32 %v2054, 2147483648
    %v2071 = vmul.f32 %v2070, 1.442695
    %v2072 = vpow.pop %v2071
    %v2073 = vadd.f32 %v2072, 1.0
    %v2074 = vrcp.pop %v2073
    %v2075 = vmul.f32 1.0, %v2074
    %vm2076 = vcmask 122880
    %2077 = vst.msk [vmem:[%s15] sm:$0x1] %vm2076, %v2075
    // Predicated region
    $region90: #{pd_forward.1} parent=1 // pred_check
      _
    $region91: #{pd_forward.1} parent=1 // pred_check_branch
      %2079 = sbr.rel (0) target = $region93
    $region92: #{pd_forward.1} parent=1 // pred_region
      _
    $region93: #{pd_forward.1} parent=1 // pred_fallthru
      _
    // Predicated region
    $region94: #{pd_forward.1} parent=1 // pred_check
      _
    $region95: #{pd_forward.1} parent=1 // pred_check_branch
      %2081 = sbr.rel (0) target = $region97
    $region96: #{pd_forward.1} parent=1 // pred_region
      _
    $region97: #{pd_forward.1} parent=1 // pred_fallthru
      _
    %2082 = vsyncpa [#allocation3], 1
    %2083 = vsyncpa [#allocation5], 1
    %2084 = vsyncpa [#allocation8], 1
    %2085 = vsyncpa [#allocation11], 1

</llo_original>
